<compile_context>
chip_gen: v5e
topology: v5e:2x2
jax: 0.10.0
libtpu: 0.0.40
codegen_flags: <defaults>
</compile_context>

<pallas_src>
import functools
import math

import jax
import jax.numpy as jnp
from jax.experimental import pallas as pl
from jax.experimental.pallas import tpu as pltpu

# Real ConfigParams dims (hidden=emb=256, intermediate=512, 4 heads).
EMB_DIM = 256
INTER = 512
HEADS = 4
HEAD_DIM = EMB_DIM // HEADS
EPS = 1e-6  # config.layer_norm_eps


def _layernorm(x, g, b, eps=EPS):
    mu = jnp.mean(x, axis=-1, keepdims=True)
    xc = x - mu
    var = jnp.mean(xc * xc, axis=-1, keepdims=True)
    return xc * jax.lax.rsqrt(var + eps) * g + b


def encoder_kernel(B, T, x_ref, ln_ref, wqkv_ref, bqkv_ref, wo_ref, bo_ref,
                   w1_ref, b1_ref, w2_ref, b2_ref, o_ref):
    C = x_ref.shape[1]
    xf = x_ref[...]                          # (B*T, C), flattened in the wrapper

    ln = ln_ref[...]                         # (4, C) packed LayerNorm params
    ln1_g, ln1_b = ln[0:1, :], ln[1:2, :]
    ln2_g, ln2_b = ln[2:3, :], ln[3:4, :]

    # ---- pre-LN -> fused QKV projection (bf16 operands, f32 accumulate) ----
    h = _layernorm(xf, ln1_g, ln1_b)
    qkv = jnp.dot(h.astype(jnp.bfloat16), wqkv_ref[...],
                  preferred_element_type=jnp.float32) + bqkv_ref[...]

    # Build (B*HEADS, T, HEAD_DIM) stacks using static slices + sublane concat
    # + leading-dim-only reshape (no in-kernel transpose).  The 1/sqrt(head_dim)
    # scale is pre-folded into the Q columns of wqkv/bqkv at init time.
    def stack_heads(off):
        blocks = [qkv[b * T:(b + 1) * T,
                      off + hh * HEAD_DIM:off + (hh + 1) * HEAD_DIM]
                  for b in range(B) for hh in range(HEADS)]
        return jnp.concatenate(blocks, axis=0).reshape(B * HEADS, T, HEAD_DIM)

    qh = stack_heads(0)
    kh = stack_heads(C)
    vh = stack_heads(2 * C)

    # Batched scores over all (batch, head) pairs; one softmax; batched P@V.
    s = jnp.einsum('bqd,bkd->bqk',
                   qh.astype(jnp.bfloat16), kh.astype(jnp.bfloat16),
                   preferred_element_type=jnp.float32)        # (B*H, T, T)
    m = jnp.max(s, axis=-1, keepdims=True)
    e = jnp.exp(s - m)                                        # EUP
    p = e * pl.reciprocal(jnp.sum(e, axis=-1, keepdims=True), approx=True)
    # TODO(synk): attention dropout (p=0.1) is training-only; eval-mode identity here.
    o = jnp.einsum('bqk,bkd->bqd',
                   p.astype(jnp.bfloat16), vh.astype(jnp.bfloat16),
                   preferred_element_type=jnp.float32)        # (B*H, T, HEAD_DIM)

    # Merge heads back to (B*T, C), then a single full-K (C=256) out-projection.
    merged = jnp.concatenate(
        [jnp.concatenate([o[b * HEADS + hh] for hh in range(HEADS)], axis=-1)
         for b in range(B)], axis=0)
    attn = jnp.dot(merged.astype(jnp.bfloat16), wo_ref[...],
                   preferred_element_type=jnp.float32) + bo_ref[...]
    x1 = xf + attn

    # ---- pre-LN -> FFN (tanh gelu, f32 elementwise) -> residual ----
    h2 = _layernorm(x1, ln2_g, ln2_b)
    f = jnp.dot(h2.astype(jnp.bfloat16), w1_ref[...],
                preferred_element_type=jnp.float32) + b1_ref[...]
    f = jax.nn.gelu(f, approximate=True)      # matches F.gelu(approximate='tanh')
    f = jnp.dot(f.astype(jnp.bfloat16), w2_ref[...],
                preferred_element_type=jnp.float32) + b2_ref[...]
    o_ref[...] = f + x1


def encoder_forward(x, params):
    B, T, C = x.shape
    xf = x.reshape(B * T, C)                  # free XLA-level reshape outside kernel

    def full(a):
        nd = a.ndim
        return pl.BlockSpec(a.shape, lambda i, _nd=nd: (0,) * _nd)

    in_specs = [full(xf)] + [full(p) for p in params]
    out = pl.pallas_call(
        functools.partial(encoder_kernel, B, T),
        out_shape=jax.ShapeDtypeStruct((B * T, C), x.dtype),
        grid=(1,),                            # whole (single) layer in one step
        in_specs=in_specs,
        out_specs=full(xf),
        compiler_params=pltpu.CompilerParams(
            dimension_semantics=("arbitrary",)),
    )(xf, *params)
    return out.reshape(B, T, C)


def init_params(key):
    keys = iter(jax.random.split(key, 12))

    def lin(in_dim, out_dim):
        # weight stored [in, out] so the kernel computes x @ W + b
        w = jax.random.normal(next(keys), (in_dim, out_dim), jnp.float32) * 0.02
        b = jax.random.normal(next(keys), (1, out_dim), jnp.float32) * 0.02
        return w, b

    wq, bq = lin(EMB_DIM, EMB_DIM)
    wk, bk = lin(EMB_DIM, EMB_DIM)
    wv, bv = lin(EMB_DIM, EMB_DIM)
    wo, bo = lin(EMB_DIM, EMB_DIM)
    w1, b1 = lin(EMB_DIM, INTER)
    w2, b2 = lin(INTER, EMB_DIM)

    # Fold the attention scale into the Q projection (zero runtime cost).
    scale = 1.0 / math.sqrt(HEAD_DIM)
    wq = wq * scale
    bq = bq * scale

    # Fused QKV weight / bias; big weights stored bf16 (DMA-bound kernel).
    wqkv = jnp.concatenate([wq, wk, wv], axis=1).astype(jnp.bfloat16)   # (C, 3C)
    bqkv = jnp.concatenate([bq, bk, bv], axis=1)                        # (1, 3C) f32

    # Packed LayerNorm params: rows = [ln1_g, ln1_b, ln2_g, ln2_b]
    ln = jnp.stack([jnp.ones((EMB_DIM,), jnp.float32),
                    jnp.zeros((EMB_DIM,), jnp.float32),
                    jnp.ones((EMB_DIM,), jnp.float32),
                    jnp.zeros((EMB_DIM,), jnp.float32)], axis=0)        # (4, C)

    return (ln, wqkv, bqkv,
            wo.astype(jnp.bfloat16), bo,
            w1.astype(jnp.bfloat16), b1,
            w2.astype(jnp.bfloat16), b2)


def encoder_reference(x, params):
    """Pure-JAX reference mirroring the PyTorch Encoder.forward.

    Uses the SAME packed bf16 weights and the same bf16-operand / f32-accumulate
    matmul convention as the kernel, so the comparison validates the kernel
    implementation (the bf16 storage itself is a deliberate perf choice).
    Note: the 1/sqrt(head_dim) scale is pre-folded into wqkv/bqkv at init.
    """
    ln, wqkv, bqkv, wo, bo, w1, b1, w2, b2 = params
    B, T, C = x.shape
    bf16 = jnp.bfloat16

    def layernorm(v, g, b):
        mu = jnp.mean(v, -1, keepdims=True)
        var = jnp.mean((v - mu) ** 2, -1, keepdims=True)
        return (v - mu) * jax.lax.rsqrt(var + EPS) * g + b

    xf = x.reshape(B * T, C)
    h = layernorm(xf, ln[0], ln[1])
    qkv = jnp.dot(h.astype(bf16), wqkv, preferred_element_type=jnp.float32) + bqkv
    q, k, v = qkv[:, :C], qkv[:, C:2 * C], qkv[:, 2 * C:]

    def split(t):
        return t.reshape(B, T, HEADS, HEAD_DIM).transpose(0, 2, 1, 3)

    qh, kh, vh = split(q), split(k), split(v)
    s = jnp.einsum('bhqd,bhkd->bhqk', qh.astype(bf16), kh.astype(bf16),
                   preferred_element_type=jnp.float32)
    p = jax.nn.softmax(s, axis=-1)
    o = jnp.einsum('bhqk,bhkd->bhqd', p.astype(bf16), vh.astype(bf16),
                   preferred_element_type=jnp.float32)
    o = o.transpose(0, 2, 1, 3).reshape(B * T, C)
    attn = jnp.dot(o.astype(bf16), wo, preferred_element_type=jnp.float32) + bo
    x1 = xf + attn
    h2 = layernorm(x1, ln[2], ln[3])
    f = jnp.dot(h2.astype(bf16), w1, preferred_element_type=jnp.float32) + b1
    f = jax.nn.gelu(f, approximate=True)
    f = jnp.dot(f.astype(bf16), w2, preferred_element_type=jnp.float32) + b2
    return (f + x1).reshape(B, T, C)


if __name__ == "__main__":
    key = jax.random.PRNGKey(0)
    kx, kp = jax.random.split(key)
    B, T = 2, 16
    x = jax.random.normal(kx, (B, T, EMB_DIM), jnp.float32)
    params = init_params(kp)

    out = encoder_forward(x, params)
    jax.block_until_ready(out)
    assert out.shape == (B, T, EMB_DIM) and out.dtype == jnp.float32

    ref = encoder_reference(x, params)
    jax.block_until_ready(ref)
    # Tolerance covers approx-reciprocal softmax + MXU accumulation-order diffs
    # only (both sides use identical bf16 weights / bf16 matmul operands).
    max_err = float(jnp.max(jnp.abs(out - ref)))
    assert jnp.allclose(out, ref, rtol=2e-2, atol=2e-2), max_err

    print("KERNEL_OK")
</pallas_src>

<mosaic_0001>
module attributes {stable_mosaic.version = 11 : i64} {
  func.func @encoder_kernel(%arg0: i32, %arg1: memref<32x256xf32, #tpu.memory_space<vmem>>, %arg2: memref<4x256xf32, #tpu.memory_space<vmem>>, %arg3: memref<256x768xbf16, #tpu.memory_space<vmem>>, %arg4: memref<1x768xf32, #tpu.memory_space<vmem>>, %arg5: memref<256x256xbf16, #tpu.memory_space<vmem>>, %arg6: memref<1x256xf32, #tpu.memory_space<vmem>>, %arg7: memref<256x512xbf16, #tpu.memory_space<vmem>>, %arg8: memref<1x512xf32, #tpu.memory_space<vmem>>, %arg9: memref<512x256xbf16, #tpu.memory_space<vmem>>, %arg10: memref<1x256xf32, #tpu.memory_space<vmem>>, %arg11: memref<32x256xf32, #tpu.memory_space<vmem>>) attributes {dimension_semantics = [#tpu.dimension_semantics<arbitrary>], iteration_bounds = array<i64: 1>, scalar_prefetch = 0 : i64, scratch_operands = 0 : i64, tpu.core_type = #tpu.core_type<tc>, window_params = [{pipeline_mode = #tpu.pipeline_mode<synchronous>, transform_indices = @transform_0, window_bounds = array<i64: 32, 256>}, {pipeline_mode = #tpu.pipeline_mode<synchronous>, transform_indices = @transform_1, window_bounds = array<i64: 4, 256>}, {pipeline_mode = #tpu.pipeline_mode<synchronous>, transform_indices = @transform_2, window_bounds = array<i64: 256, 768>}, {pipeline_mode = #tpu.pipeline_mode<synchronous>, transform_indices = @transform_3, window_bounds = array<i64: 1, 768>}, {pipeline_mode = #tpu.pipeline_mode<synchronous>, transform_indices = @transform_4, window_bounds = array<i64: 256, 256>}, {pipeline_mode = #tpu.pipeline_mode<synchronous>, transform_indices = @transform_5, window_bounds = array<i64: 1, 256>}, {pipeline_mode = #tpu.pipeline_mode<synchronous>, transform_indices = @transform_6, window_bounds = array<i64: 256, 512>}, {pipeline_mode = #tpu.pipeline_mode<synchronous>, transform_indices = @transform_7, window_bounds = array<i64: 1, 512>}, {pipeline_mode = #tpu.pipeline_mode<synchronous>, transform_indices = @transform_8, window_bounds = array<i64: 512, 256>}, {pipeline_mode = #tpu.pipeline_mode<synchronous>, transform_indices = @transform_9, window_bounds = array<i64: 1, 256>}, {pipeline_mode = #tpu.pipeline_mode<synchronous>, transform_indices = @transform_10, window_bounds = array<i64: 32, 256>}]} {
    %c0 = arith.constant 0 : index
    %c0_0 = arith.constant 0 : index
    %0 = vector.load %arg1[%c0, %c0_0] : memref<32x256xf32, #tpu.memory_space<vmem>>, vector<32x256xf32>
    %c0_1 = arith.constant 0 : index
    %c0_2 = arith.constant 0 : index
    %1 = vector.load %arg2[%c0_1, %c0_2] : memref<4x256xf32, #tpu.memory_space<vmem>>, vector<4x256xf32>
    %2 = vector.extract_strided_slice %1 {offsets = [0, 0], sizes = [1, 256], strides = [1, 1]} : vector<4x256xf32> to vector<1x256xf32>
    %3 = vector.extract_strided_slice %1 {offsets = [1, 0], sizes = [1, 256], strides = [1, 1]} : vector<4x256xf32> to vector<1x256xf32>
    %4 = vector.extract_strided_slice %1 {offsets = [2, 0], sizes = [1, 256], strides = [1, 1]} : vector<4x256xf32> to vector<1x256xf32>
    %5 = vector.extract_strided_slice %1 {offsets = [3, 0], sizes = [1, 256], strides = [1, 1]} : vector<4x256xf32> to vector<1x256xf32>
    %cst = arith.constant dense<0.000000e+00> : vector<32xf32>
    %6 = vector.multi_reduction <add>, %0, %cst [1] : vector<32x256xf32> to vector<32xf32>
    %7 = vector.shape_cast %6 : vector<32xf32> to vector<32x1xf32>
    %cst_3 = arith.constant 2.560000e+02 : f32
    %8 = vector.broadcast %cst_3 : f32 to vector<32x1xf32>
    %9 = arith.divf %7, %8 : vector<32x1xf32>
    %10 = vector.broadcast %9 : vector<32x1xf32> to vector<32x256xf32>
    %11 = arith.subf %0, %10 : vector<32x256xf32>
    %12 = arith.mulf %11, %11 : vector<32x256xf32>
    %cst_4 = arith.constant dense<0.000000e+00> : vector<32xf32>
    %13 = vector.multi_reduction <add>, %12, %cst_4 [1] : vector<32x256xf32> to vector<32xf32>
    %14 = vector.shape_cast %13 : vector<32xf32> to vector<32x1xf32>
    %cst_5 = arith.constant 2.560000e+02 : f32
    %15 = vector.broadcast %cst_5 : f32 to vector<32x1xf32>
    %16 = arith.divf %14, %15 : vector<32x1xf32>
    %cst_6 = arith.constant 9.99999997E-7 : f32
    %17 = vector.broadcast %cst_6 : f32 to vector<32x1xf32>
    %18 = arith.addf %16, %17 : vector<32x1xf32>
    %19 = math.rsqrt %18 : vector<32x1xf32>
    %20 = vector.broadcast %19 : vector<32x1xf32> to vector<32x256xf32>
    %21 = arith.mulf %11, %20 : vector<32x256xf32>
    %22 = vector.broadcast %2 : vector<1x256xf32> to vector<32x256xf32>
    %23 = arith.mulf %21, %22 : vector<32x256xf32>
    %24 = vector.broadcast %3 : vector<1x256xf32> to vector<32x256xf32>
    %25 = arith.addf %23, %24 : vector<32x256xf32>
    %26 = arith.truncf %25 : vector<32x256xf32> to vector<32x256xbf16>
    %c0_7 = arith.constant 0 : index
    %c0_8 = arith.constant 0 : index
    %27 = vector.load %arg3[%c0_7, %c0_8] : memref<256x768xbf16, #tpu.memory_space<vmem>>, vector<256x768xbf16>
    %cst_9 = arith.constant dense<0.000000e+00> : vector<32x768xf32>
    %28 = tpu.matmul %26, %27, %cst_9 {dimension_numbers = #tpu.dot_dimension_numbers<[1], [0], [0], [1], [0, 0, 1, 1], [], []>} : vector<32x256xbf16>, vector<256x768xbf16>, vector<32x768xf32> -> vector<32x768xf32>
    %c0_10 = arith.constant 0 : index
    %c0_11 = arith.constant 0 : index
    %29 = vector.load %arg4[%c0_10, %c0_11] : memref<1x768xf32, #tpu.memory_space<vmem>>, vector<1x768xf32>
    %30 = vector.broadcast %29 : vector<1x768xf32> to vector<32x768xf32>
    %31 = arith.addf %28, %30 : vector<32x768xf32>
    %32 = vector.extract_strided_slice %31 {offsets = [0, 0], sizes = [16, 64], strides = [1, 1]} : vector<32x768xf32> to vector<16x64xf32>
    %33 = vector.extract_strided_slice %31 {offsets = [0, 64], sizes = [16, 64], strides = [1, 1]} : vector<32x768xf32> to vector<16x64xf32>
    %34 = vector.extract_strided_slice %31 {offsets = [0, 128], sizes = [16, 64], strides = [1, 1]} : vector<32x768xf32> to vector<16x64xf32>
    %35 = vector.extract_strided_slice %31 {offsets = [0, 192], sizes = [16, 64], strides = [1, 1]} : vector<32x768xf32> to vector<16x64xf32>
    %36 = vector.extract_strided_slice %31 {offsets = [16, 0], sizes = [16, 64], strides = [1, 1]} : vector<32x768xf32> to vector<16x64xf32>
    %37 = vector.extract_strided_slice %31 {offsets = [16, 64], sizes = [16, 64], strides = [1, 1]} : vector<32x768xf32> to vector<16x64xf32>
    %38 = vector.extract_strided_slice %31 {offsets = [16, 128], sizes = [16, 64], strides = [1, 1]} : vector<32x768xf32> to vector<16x64xf32>
    %39 = vector.extract_strided_slice %31 {offsets = [16, 192], sizes = [16, 64], strides = [1, 1]} : vector<32x768xf32> to vector<16x64xf32>
    %40 = tpu.concatenate %32, %33, %34, %35, %36, %37, %38, %39 in 0 : vector<16x64xf32>, vector<16x64xf32>, vector<16x64xf32>, vector<16x64xf32>, vector<16x64xf32>, vector<16x64xf32>, vector<16x64xf32>, vector<16x64xf32> -> vector<128x64xf32>
    %41 = vector.shape_cast %40 : vector<128x64xf32> to vector<8x16x64xf32>
    %42 = vector.extract_strided_slice %31 {offsets = [0, 256], sizes = [16, 64], strides = [1, 1]} : vector<32x768xf32> to vector<16x64xf32>
    %43 = vector.extract_strided_slice %31 {offsets = [0, 320], sizes = [16, 64], strides = [1, 1]} : vector<32x768xf32> to vector<16x64xf32>
    %44 = vector.extract_strided_slice %31 {offsets = [0, 384], sizes = [16, 64], strides = [1, 1]} : vector<32x768xf32> to vector<16x64xf32>
    %45 = vector.extract_strided_slice %31 {offsets = [0, 448], sizes = [16, 64], strides = [1, 1]} : vector<32x768xf32> to vector<16x64xf32>
    %46 = vector.extract_strided_slice %31 {offsets = [16, 256], sizes = [16, 64], strides = [1, 1]} : vector<32x768xf32> to vector<16x64xf32>
    %47 = vector.extract_strided_slice %31 {offsets = [16, 320], sizes = [16, 64], strides = [1, 1]} : vector<32x768xf32> to vector<16x64xf32>
    %48 = vector.extract_strided_slice %31 {offsets = [16, 384], sizes = [16, 64], strides = [1, 1]} : vector<32x768xf32> to vector<16x64xf32>
    %49 = vector.extract_strided_slice %31 {offsets = [16, 448], sizes = [16, 64], strides = [1, 1]} : vector<32x768xf32> to vector<16x64xf32>
    %50 = tpu.concatenate %42, %43, %44, %45, %46, %47, %48, %49 in 0 : vector<16x64xf32>, vector<16x64xf32>, vector<16x64xf32>, vector<16x64xf32>, vector<16x64xf32>, vector<16x64xf32>, vector<16x64xf32>, vector<16x64xf32> -> vector<128x64xf32>
    %51 = vector.shape_cast %50 : vector<128x64xf32> to vector<8x16x64xf32>
    %52 = vector.extract_strided_slice %31 {offsets = [0, 512], sizes = [16, 64], strides = [1, 1]} : vector<32x768xf32> to vector<16x64xf32>
    %53 = vector.extract_strided_slice %31 {offsets = [0, 576], sizes = [16, 64], strides = [1, 1]} : vector<32x768xf32> to vector<16x64xf32>
    %54 = vector.extract_strided_slice %31 {offsets = [0, 640], sizes = [16, 64], strides = [1, 1]} : vector<32x768xf32> to vector<16x64xf32>
    %55 = vector.extract_strided_slice %31 {offsets = [0, 704], sizes = [16, 64], strides = [1, 1]} : vector<32x768xf32> to vector<16x64xf32>
    %56 = vector.extract_strided_slice %31 {offsets = [16, 512], sizes = [16, 64], strides = [1, 1]} : vector<32x768xf32> to vector<16x64xf32>
    %57 = vector.extract_strided_slice %31 {offsets = [16, 576], sizes = [16, 64], strides = [1, 1]} : vector<32x768xf32> to vector<16x64xf32>
    %58 = vector.extract_strided_slice %31 {offsets = [16, 640], sizes = [16, 64], strides = [1, 1]} : vector<32x768xf32> to vector<16x64xf32>
    %59 = vector.extract_strided_slice %31 {offsets = [16, 704], sizes = [16, 64], strides = [1, 1]} : vector<32x768xf32> to vector<16x64xf32>
    %60 = tpu.concatenate %52, %53, %54, %55, %56, %57, %58, %59 in 0 : vector<16x64xf32>, vector<16x64xf32>, vector<16x64xf32>, vector<16x64xf32>, vector<16x64xf32>, vector<16x64xf32>, vector<16x64xf32>, vector<16x64xf32> -> vector<128x64xf32>
    %61 = vector.shape_cast %60 : vector<128x64xf32> to vector<8x16x64xf32>
    %62 = arith.truncf %41 : vector<8x16x64xf32> to vector<8x16x64xbf16>
    %63 = arith.truncf %51 : vector<8x16x64xf32> to vector<8x16x64xbf16>
    "tpu.trace_start"() <{level = 10 : i32, message = "bqd,bkd->bqk"}> : () -> ()
    %cst_12 = arith.constant dense<0.000000e+00> : vector<8x16x16xf32>
    %64 = tpu.matmul %62, %63, %cst_12 {dimension_numbers = #tpu.dot_dimension_numbers<[2], [2], [1], [1], [0, 0, 0, 1, 1, 1], [0], [0]>} : vector<8x16x64xbf16>, vector<8x16x64xbf16>, vector<8x16x16xf32> -> vector<8x16x16xf32>
    "tpu.trace_stop"() : () -> ()
    %cst_13 = arith.constant dense<0xFF800000> : vector<8x16xf32>
    %65 = vector.multi_reduction <maximumf>, %64, %cst_13 [2] : vector<8x16x16xf32> to vector<8x16xf32>
    %66 = vector.shape_cast %65 : vector<8x16xf32> to vector<8x16x1xf32>
    %67 = vector.broadcast %66 : vector<8x16x1xf32> to vector<8x16x16xf32>
    %68 = arith.subf %64, %67 : vector<8x16x16xf32>
    %69 = math.exp %68 : vector<8x16x16xf32>
    %cst_14 = arith.constant dense<0.000000e+00> : vector<8x16xf32>
    %70 = vector.multi_reduction <add>, %69, %cst_14 [2] : vector<8x16x16xf32> to vector<8x16xf32>
    %71 = vector.shape_cast %70 : vector<8x16xf32> to vector<8x16x1xf32>
    %72 = tpu.reciprocal %71 {approx = true} : vector<8x16x1xf32> -> vector<8x16x1xf32>
    %73 = vector.broadcast %72 : vector<8x16x1xf32> to vector<8x16x16xf32>
    %74 = arith.mulf %69, %73 : vector<8x16x16xf32>
    %75 = arith.truncf %74 : vector<8x16x16xf32> to vector<8x16x16xbf16>
    %76 = arith.truncf %61 : vector<8x16x64xf32> to vector<8x16x64xbf16>
    "tpu.trace_start"() <{level = 10 : i32, message = "bqk,bkd->bqd"}> : () -> ()
    %cst_15 = arith.constant dense<0.000000e+00> : vector<8x16x64xf32>
    %77 = tpu.matmul %75, %76, %cst_15 {dimension_numbers = #tpu.dot_dimension_numbers<[2], [1], [1], [2], [0, 0, 0, 1, 1, 2], [0], [0]>} : vector<8x16x16xbf16>, vector<8x16x64xbf16>, vector<8x16x64xf32> -> vector<8x16x64xf32>
    "tpu.trace_stop"() : () -> ()
    %78 = vector.extract_strided_slice %77 {offsets = [0, 0, 0], sizes = [1, 16, 64], strides = [1, 1, 1]} : vector<8x16x64xf32> to vector<1x16x64xf32>
    %79 = vector.shape_cast %78 : vector<1x16x64xf32> to vector<16x64xf32>
    %80 = vector.extract_strided_slice %77 {offsets = [1, 0, 0], sizes = [1, 16, 64], strides = [1, 1, 1]} : vector<8x16x64xf32> to vector<1x16x64xf32>
    %81 = vector.shape_cast %80 : vector<1x16x64xf32> to vector<16x64xf32>
    %82 = vector.extract_strided_slice %77 {offsets = [2, 0, 0], sizes = [1, 16, 64], strides = [1, 1, 1]} : vector<8x16x64xf32> to vector<1x16x64xf32>
    %83 = vector.shape_cast %82 : vector<1x16x64xf32> to vector<16x64xf32>
    %84 = vector.extract_strided_slice %77 {offsets = [3, 0, 0], sizes = [1, 16, 64], strides = [1, 1, 1]} : vector<8x16x64xf32> to vector<1x16x64xf32>
    %85 = vector.shape_cast %84 : vector<1x16x64xf32> to vector<16x64xf32>
    %86 = tpu.concatenate %79, %81, %83, %85 in 1 : vector<16x64xf32>, vector<16x64xf32>, vector<16x64xf32>, vector<16x64xf32> -> vector<16x256xf32>
    %87 = vector.extract_strided_slice %77 {offsets = [4, 0, 0], sizes = [1, 16, 64], strides = [1, 1, 1]} : vector<8x16x64xf32> to vector<1x16x64xf32>
    %88 = vector.shape_cast %87 : vector<1x16x64xf32> to vector<16x64xf32>
    %89 = vector.extract_strided_slice %77 {offsets = [5, 0, 0], sizes = [1, 16, 64], strides = [1, 1, 1]} : vector<8x16x64xf32> to vector<1x16x64xf32>
    %90 = vector.shape_cast %89 : vector<1x16x64xf32> to vector<16x64xf32>
    %91 = vector.extract_strided_slice %77 {offsets = [6, 0, 0], sizes = [1, 16, 64], strides = [1, 1, 1]} : vector<8x16x64xf32> to vector<1x16x64xf32>
    %92 = vector.shape_cast %91 : vector<1x16x64xf32> to vector<16x64xf32>
    %93 = vector.extract_strided_slice %77 {offsets = [7, 0, 0], sizes = [1, 16, 64], strides = [1, 1, 1]} : vector<8x16x64xf32> to vector<1x16x64xf32>
    %94 = vector.shape_cast %93 : vector<1x16x64xf32> to vector<16x64xf32>
    %95 = tpu.concatenate %88, %90, %92, %94 in 1 : vector<16x64xf32>, vector<16x64xf32>, vector<16x64xf32>, vector<16x64xf32> -> vector<16x256xf32>
    %96 = tpu.concatenate %86, %95 in 0 : vector<16x256xf32>, vector<16x256xf32> -> vector<32x256xf32>
    %97 = arith.truncf %96 : vector<32x256xf32> to vector<32x256xbf16>
    %c0_16 = arith.constant 0 : index
    %c0_17 = arith.constant 0 : index
    %98 = vector.load %arg5[%c0_16, %c0_17] : memref<256x256xbf16, #tpu.memory_space<vmem>>, vector<256x256xbf16>
    %cst_18 = arith.constant dense<0.000000e+00> : vector<32x256xf32>
    %99 = tpu.matmul %97, %98, %cst_18 {dimension_numbers = #tpu.dot_dimension_numbers<[1], [0], [0], [1], [0, 0, 1, 1], [], []>} : vector<32x256xbf16>, vector<256x256xbf16>, vector<32x256xf32> -> vector<32x256xf32>
    %c0_19 = arith.constant 0 : index
    %c0_20 = arith.constant 0 : index
    %100 = vector.load %arg6[%c0_19, %c0_20] : memref<1x256xf32, #tpu.memory_space<vmem>>, vector<1x256xf32>
    %101 = vector.broadcast %100 : vector<1x256xf32> to vector<32x256xf32>
    %102 = arith.addf %99, %101 : vector<32x256xf32>
    %103 = arith.addf %0, %102 : vector<32x256xf32>
    %cst_21 = arith.constant dense<0.000000e+00> : vector<32xf32>
    %104 = vector.multi_reduction <add>, %103, %cst_21 [1] : vector<32x256xf32> to vector<32xf32>
    %105 = vector.shape_cast %104 : vector<32xf32> to vector<32x1xf32>
    %cst_22 = arith.constant 2.560000e+02 : f32
    %106 = vector.broadcast %cst_22 : f32 to vector<32x1xf32>
    %107 = arith.divf %105, %106 : vector<32x1xf32>
    %108 = vector.broadcast %107 : vector<32x1xf32> to vector<32x256xf32>
    %109 = arith.subf %103, %108 : vector<32x256xf32>
    %110 = arith.mulf %109, %109 : vector<32x256xf32>
    %cst_23 = arith.constant dense<0.000000e+00> : vector<32xf32>
    %111 = vector.multi_reduction <add>, %110, %cst_23 [1] : vector<32x256xf32> to vector<32xf32>
    %112 = vector.shape_cast %111 : vector<32xf32> to vector<32x1xf32>
    %cst_24 = arith.constant 2.560000e+02 : f32
    %113 = vector.broadcast %cst_24 : f32 to vector<32x1xf32>
    %114 = arith.divf %112, %113 : vector<32x1xf32>
    %cst_25 = arith.constant 9.99999997E-7 : f32
    %115 = vector.broadcast %cst_25 : f32 to vector<32x1xf32>
    %116 = arith.addf %114, %115 : vector<32x1xf32>
    %117 = math.rsqrt %116 : vector<32x1xf32>
    %118 = vector.broadcast %117 : vector<32x1xf32> to vector<32x256xf32>
    %119 = arith.mulf %109, %118 : vector<32x256xf32>
    %120 = vector.broadcast %4 : vector<1x256xf32> to vector<32x256xf32>
    %121 = arith.mulf %119, %120 : vector<32x256xf32>
    %122 = vector.broadcast %5 : vector<1x256xf32> to vector<32x256xf32>
    %123 = arith.addf %121, %122 : vector<32x256xf32>
    %124 = arith.truncf %123 : vector<32x256xf32> to vector<32x256xbf16>
    %c0_26 = arith.constant 0 : index
    %c0_27 = arith.constant 0 : index
    %125 = vector.load %arg7[%c0_26, %c0_27] : memref<256x512xbf16, #tpu.memory_space<vmem>>, vector<256x512xbf16>
    %cst_28 = arith.constant dense<0.000000e+00> : vector<32x512xf32>
    %126 = tpu.matmul %124, %125, %cst_28 {dimension_numbers = #tpu.dot_dimension_numbers<[1], [0], [0], [1], [0, 0, 1, 1], [], []>} : vector<32x256xbf16>, vector<256x512xbf16>, vector<32x512xf32> -> vector<32x512xf32>
    %c0_29 = arith.constant 0 : index
    %c0_30 = arith.constant 0 : index
    %127 = vector.load %arg8[%c0_29, %c0_30] : memref<1x512xf32, #tpu.memory_space<vmem>>, vector<1x512xf32>
    %128 = vector.broadcast %127 : vector<1x512xf32> to vector<32x512xf32>
    %129 = arith.addf %126, %128 : vector<32x512xf32>
    %130 = arith.mulf %129, %129 : vector<32x512xf32>
    %131 = arith.mulf %129, %130 : vector<32x512xf32>
    %cst_31 = arith.constant 4.471500e-02 : f32
    %132 = vector.broadcast %cst_31 : f32 to vector<32x512xf32>
    %133 = arith.mulf %132, %131 : vector<32x512xf32>
    %134 = arith.addf %129, %133 : vector<32x512xf32>
    %cst_32 = arith.constant 0.797884583 : f32
    %135 = vector.broadcast %cst_32 : f32 to vector<32x512xf32>
    %136 = arith.mulf %135, %134 : vector<32x512xf32>
    %137 = math.tanh %136 : vector<32x512xf32>
    %cst_33 = arith.constant 1.000000e+00 : f32
    %138 = vector.broadcast %cst_33 : f32 to vector<32x512xf32>
    %139 = arith.addf %138, %137 : vector<32x512xf32>
    %cst_34 = arith.constant 5.000000e-01 : f32
    %140 = vector.broadcast %cst_34 : f32 to vector<32x512xf32>
    %141 = arith.mulf %140, %139 : vector<32x512xf32>
    %142 = arith.mulf %129, %141 : vector<32x512xf32>
    %143 = arith.truncf %142 : vector<32x512xf32> to vector<32x512xbf16>
    %c0_35 = arith.constant 0 : index
    %c0_36 = arith.constant 0 : index
    %144 = vector.load %arg9[%c0_35, %c0_36] : memref<512x256xbf16, #tpu.memory_space<vmem>>, vector<512x256xbf16>
    %cst_37 = arith.constant dense<0.000000e+00> : vector<32x256xf32>
    %145 = tpu.matmul %143, %144, %cst_37 {dimension_numbers = #tpu.dot_dimension_numbers<[1], [0], [0], [1], [0, 0, 1, 1], [], []>} : vector<32x512xbf16>, vector<512x256xbf16>, vector<32x256xf32> -> vector<32x256xf32>
    %c0_38 = arith.constant 0 : index
    %c0_39 = arith.constant 0 : index
    %146 = vector.load %arg10[%c0_38, %c0_39] : memref<1x256xf32, #tpu.memory_space<vmem>>, vector<1x256xf32>
    %147 = vector.broadcast %146 : vector<1x256xf32> to vector<32x256xf32>
    %148 = arith.addf %145, %147 : vector<32x256xf32>
    %149 = arith.addf %148, %103 : vector<32x256xf32>
    %c0_40 = arith.constant 0 : index
    %c0_41 = arith.constant 0 : index
    %150 = vector.load %arg11[%c0_40, %c0_41] : memref<32x256xf32, #tpu.memory_space<vmem>>, vector<32x256xf32>
    tpu.vector_store %arg11[%c0_40, %c0_41], %149 {strides = array<i32>} : memref<32x256xf32, #tpu.memory_space<vmem>>, vector<32x256xf32>,
    return
  }
  func.func @transform_0(%arg0: i32) -> (i32, i32) {
    %c0_i32 = arith.constant 0 : i32
    %c0_i32_0 = arith.constant 0 : i32
    %c0_i32_1 = arith.constant 0 : i32
    return %c0_i32, %c0_i32_0 : i32, i32
  }
  func.func @transform_1(%arg0: i32) -> (i32, i32) {
    %c0_i32 = arith.constant 0 : i32
    %c0_i32_0 = arith.constant 0 : i32
    %c0_i32_1 = arith.constant 0 : i32
    return %c0_i32, %c0_i32_0 : i32, i32
  }
  func.func @transform_2(%arg0: i32) -> (i32, i32) {
    %c0_i32 = arith.constant 0 : i32
    %c0_i32_0 = arith.constant 0 : i32
    %c0_i32_1 = arith.constant 0 : i32
    return %c0_i32, %c0_i32_0 : i32, i32
  }
  func.func @transform_3(%arg0: i32) -> (i32, i32) {
    %c0_i32 = arith.constant 0 : i32
    %c0_i32_0 = arith.constant 0 : i32
    %c0_i32_1 = arith.constant 0 : i32
    return %c0_i32, %c0_i32_0 : i32, i32
  }
  func.func @transform_4(%arg0: i32) -> (i32, i32) {
    %c0_i32 = arith.constant 0 : i32
    %c0_i32_0 = arith.constant 0 : i32
    %c0_i32_1 = arith.constant 0 : i32
    return %c0_i32, %c0_i32_0 : i32, i32
  }
  func.func @transform_5(%arg0: i32) -> (i32, i32) {
    %c0_i32 = arith.constant 0 : i32
    %c0_i32_0 = arith.constant 0 : i32
    %c0_i32_1 = arith.constant 0 : i32
    return %c0_i32, %c0_i32_0 : i32, i32
  }
  func.func @transform_6(%arg0: i32) -> (i32, i32) {
    %c0_i32 = arith.constant 0 : i32
    %c0_i32_0 = arith.constant 0 : i32
    %c0_i32_1 = arith.constant 0 : i32
    return %c0_i32, %c0_i32_0 : i32, i32
  }
  func.func @transform_7(%arg0: i32) -> (i32, i32) {
    %c0_i32 = arith.constant 0 : i32
    %c0_i32_0 = arith.constant 0 : i32
    %c0_i32_1 = arith.constant 0 : i32
    return %c0_i32, %c0_i32_0 : i32, i32
  }
  func.func @transform_8(%arg0: i32) -> (i32, i32) {
    %c0_i32 = arith.constant 0 : i32
    %c0_i32_0 = arith.constant 0 : i32
    %c0_i32_1 = arith.constant 0 : i32
    return %c0_i32, %c0_i32_0 : i32, i32
  }
  func.func @transform_9(%arg0: i32) -> (i32, i32) {
    %c0_i32 = arith.constant 0 : i32
    %c0_i32_0 = arith.constant 0 : i32
    %c0_i32_1 = arith.constant 0 : i32
    return %c0_i32, %c0_i32_0 : i32, i32
  }
  func.func @transform_10(%arg0: i32) -> (i32, i32) {
    %c0_i32 = arith.constant 0 : i32
    %c0_i32_0 = arith.constant 0 : i32
    %c0_i32_1 = arith.constant 0 : i32
    return %c0_i32, %c0_i32_0 : i32, i32
  }
}

</mosaic_0001>

<llo_original>
// kernel: tpu_custom_call.1
$region0: #{tpu_custom_call.1}
  #allocation0 [shape = 'u32[]', space=smem, size = 0x4, offset = 0x4, fixed_abs, tag = 'smem constant byte address 0x4 - core index']
  #allocation1 [shape = 'u32[72,128]{1,0:T(1,128)}', space=vmem, size = 0x9000, scoped, tag = 'internal scratch']
  %s0 = inlined_call_operand.hbm [shape: f32[32,256], index: 0, kind: input, shape index: {}]
  %s1 = inlined_call_operand.hbm [shape: f32[4,256], index: 1, kind: input, shape index: {}]
  %s2 = inlined_call_operand.hbm [shape: bf16[256,768], index: 2, kind: input, shape index: {}]
  %s3 = inlined_call_operand.hbm [shape: f32[1,768], index: 3, kind: input, shape index: {}]
  %s4 = inlined_call_operand.hbm [shape: bf16[256,256], index: 4, kind: input, shape index: {}]
  %s5 = inlined_call_operand.vmem [shape: f32[1,256], index: 5, kind: input, shape index: {}]
  %s6 = inlined_call_operand.hbm [shape: bf16[256,512], index: 6, kind: input, shape index: {}]
  %s7 = inlined_call_operand.vmem [shape: f32[1,512], index: 7, kind: input, shape index: {}]
  %s8 = inlined_call_operand.hbm [shape: bf16[512,256], index: 8, kind: input, shape index: {}]
  %s9 = inlined_call_operand.vmem [shape: f32[1,256], index: 9, kind: input, shape index: {}]
  %s10 = inlined_call_operand.hbm [shape: f32[32,256], index: 10, kind: output, shape index: {}]
  %s11 = sld [smem:[#allocation0]]
  $region78: #{tpu_custom_call.1} parent=0
    _
  %s13 = ssub.s32 1, %s11
  %s14 = scalar_select 0, %s13, %s11
  $region1: #{tpu_custom_call.1} parent=0
    #allocation2 [shape = 'u8[32768]{0}', space=vmem, size = 0x8000, scoped, tag = 'input window, operand 0, single buffered']
    #allocation3 [shape = 's32[1]{0}', space=sflag, size = 0x4, scoped, tag = 'scoped memory for tpu_custom_call.1']
    #allocation4 [shape = 's32[1]{0}', space=sflag, size = 0x4, scoped, tag = 'scoped memory for tpu_custom_call.1']
    #allocation5 [shape = 'u8[4096]{0}', space=vmem, size = 0x1000, scoped, tag = 'input window, operand 1, single buffered']
    #allocation6 [shape = 's32[1]{0}', space=sflag, size = 0x4, scoped, tag = 'scoped memory for tpu_custom_call.1']
    #allocation7 [shape = 'u8[393216]{0}', space=vmem, size = 0x60000, scoped, tag = 'input window, operand 2, single buffered']
    #allocation8 [shape = 'u8[3072]{0}', space=vmem, size = 0xc00, scoped, tag = 'input window, operand 3, single buffered']
    #allocation9 [shape = 's32[1]{0}', space=sflag, size = 0x4, scoped, tag = 'scoped memory for tpu_custom_call.1']
    #allocation10 [shape = 'u8[131072]{0}', space=vmem, size = 0x20000, scoped, tag = 'input window, operand 4, single buffered']
    #allocation11 [shape = 'u8[262144]{0}', space=vmem, size = 0x40000, scoped, tag = 'input window, operand 6, single buffered']
    #allocation12 [shape = 's32[1]{0}', space=sflag, size = 0x4, scoped, tag = 'scoped memory for tpu_custom_call.1']
    #allocation13 [shape = 'u8[262144]{0}', space=vmem, size = 0x40000, scoped, tag = 'input window, operand 8, single buffered']
    #allocation14 [shape = 'u8[32768]{0}', space=vmem, size = 0x8000, scoped, tag = 'output window, operand 0, single buffered']
    %15 = vsyncpa [#allocation3], 0
    %16 = vsyncpa [#allocation6], 0
    %17 = vsyncpa [#allocation9], 0
    %18 = vsyncpa [#allocation12], 0
    %19 = vsyncpa [#allocation4], 0
    // Predicated region
    $region2: #{tpu_custom_call.1} parent=1 // pred_check
      _
    $region3: #{tpu_custom_call.1} parent=1 // pred_check_branch
      %21 = sbr.rel (0) target = $region5
    $region4: #{tpu_custom_call.1} parent=1 // pred_region
      %23 = vsyncadd [#allocation3], 0
      %s24 = sshll.u32 %s0, 4
      %s25 = int_to_ptr.hbm [resolvable:$true] %s24
      %s26 = sshll.u32 [#allocation2], 4
      %s27 = int_to_ptr.vmem [resolvable:$true] %s26
      %32 = dma.hbm_to_vmem [thread:$0]  %s25, 1024, %s27, [#allocation3], 256, 256, 16
    $region5: #{tpu_custom_call.1} parent=1 // pred_fallthru
      _
    // Predicated region
    $region6: #{tpu_custom_call.1} parent=1 // pred_check
      _
    $region7: #{tpu_custom_call.1} parent=1 // pred_check_branch
      %34 = sbr.rel (0) target = $region9
    $region8: #{tpu_custom_call.1} parent=1 // pred_region
      %36 = vsyncadd [#allocation6], 0
      %s38 = sshll.u32 %s1, 4
      %s39 = int_to_ptr.hbm [resolvable:$true] %s38
      %s40 = sshll.u32 [#allocation5], 4
      %s41 = int_to_ptr.vmem [resolvable:$true] %s40
      %43 = dma.hbm_to_vmem [thread:$0]  %s39, 128, %s41, [#allocation6]
    $region9: #{tpu_custom_call.1} parent=1 // pred_fallthru
      _
    // Predicated region
    $region10: #{tpu_custom_call.1} parent=1 // pred_check
      _
    $region11: #{tpu_custom_call.1} parent=1 // pred_check_branch
      %45 = sbr.rel (0) target = $region13
    $region12: #{tpu_custom_call.1} parent=1 // pred_region
      %47 = vsyncadd [#allocation6], 0
      %s48 = sshll.u32 %s2, 4
      %s49 = int_to_ptr.hbm [resolvable:$true] %s48
      %s50 = sshll.u32 [#allocation7], 4
      %s51 = int_to_ptr.vmem [resolvable:$true] %s50
      %56 = dma.hbm_to_vmem [thread:$0]  %s49, 12288, %s51, [#allocation6], 384, 384, 24
    $region13: #{tpu_custom_call.1} parent=1 // pred_fallthru
      _
    // Predicated region
    $region14: #{tpu_custom_call.1} parent=1 // pred_check
      _
    $region15: #{tpu_custom_call.1} parent=1 // pred_check_branch
      %58 = sbr.rel (0) target = $region17
    $region16: #{tpu_custom_call.1} parent=1 // pred_region
      %60 = vsyncadd [#allocation9], 0
      %s62 = sshll.u32 %s3, 4
      %s63 = int_to_ptr.hbm [resolvable:$true] %s62
      %s64 = sshll.u32 [#allocation8], 4
      %s65 = int_to_ptr.vmem [resolvable:$true] %s64
      %67 = dma.hbm_to_vmem [thread:$0]  %s63, 96, %s65, [#allocation9]
    $region17: #{tpu_custom_call.1} parent=1 // pred_fallthru
      _
    // Predicated region
    $region18: #{tpu_custom_call.1} parent=1 // pred_check
      _
    $region19: #{tpu_custom_call.1} parent=1 // pred_check_branch
      %69 = sbr.rel (0) target = $region21
    $region20: #{tpu_custom_call.1} parent=1 // pred_region
      %71 = vsyncadd [#allocation9], 0
      %s72 = sshll.u32 %s4, 4
      %s73 = int_to_ptr.hbm [resolvable:$true] %s72
      %s74 = sshll.u32 [#allocation10], 4
      %s75 = int_to_ptr.vmem [resolvable:$true] %s74
      %80 = dma.hbm_to_vmem [thread:$0]  %s73, 4096, %s75, [#allocation9], 128, 128, 8
    $region21: #{tpu_custom_call.1} parent=1 // pred_fallthru
      _
    // Predicated region
    $region22: #{tpu_custom_call.1} parent=1 // pred_check
      _
    $region23: #{tpu_custom_call.1} parent=1 // pred_check_branch
      %82 = sbr.rel (0) target = $region25
    $region24: #{tpu_custom_call.1} parent=1 // pred_region
      _
    $region25: #{tpu_custom_call.1} parent=1 // pred_fallthru
      _
    // Predicated region
    $region26: #{tpu_custom_call.1} parent=1 // pred_check
      _
    $region27: #{tpu_custom_call.1} parent=1 // pred_check_branch
      %84 = sbr.rel (0) target = $region29
    $region28: #{tpu_custom_call.1} parent=1 // pred_region
      %86 = vsyncadd [#allocation12], 0
      %s87 = sshll.u32 %s6, 4
      %s88 = int_to_ptr.hbm [resolvable:$true] %s87
      %s89 = sshll.u32 [#allocation11], 4
      %s90 = int_to_ptr.vmem [resolvable:$true] %s89
      %95 = dma.hbm_to_vmem [thread:$0]  %s88, 8192, %s90, [#allocation12], 256, 256, 16
    $region29: #{tpu_custom_call.1} parent=1 // pred_fallthru
      _
    // Predicated region
    $region30: #{tpu_custom_call.1} parent=1 // pred_check
      _
    $region31: #{tpu_custom_call.1} parent=1 // pred_check_branch
      %97 = sbr.rel (0) target = $region33
    $region32: #{tpu_custom_call.1} parent=1 // pred_region
      _
    $region33: #{tpu_custom_call.1} parent=1 // pred_fallthru
      _
    // Predicated region
    $region34: #{tpu_custom_call.1} parent=1 // pred_check
      _
    $region35: #{tpu_custom_call.1} parent=1 // pred_check_branch
      %99 = sbr.rel (0) target = $region37
    $region36: #{tpu_custom_call.1} parent=1 // pred_region
      %101 = vsyncadd [#allocation12], 0
      %s102 = sshll.u32 %s8, 4
      %s103 = int_to_ptr.hbm [resolvable:$true] %s102
      %s104 = sshll.u32 [#allocation13], 4
      %s105 = int_to_ptr.vmem [resolvable:$true] %s104
      %110 = dma.hbm_to_vmem [thread:$0]  %s103, 8192, %s105, [#allocation12], 128, 128, 8
    $region37: #{tpu_custom_call.1} parent=1 // pred_fallthru
      _
    // Predicated region
    $region38: #{tpu_custom_call.1} parent=1 // pred_check
      _
    $region39: #{tpu_custom_call.1} parent=1 // pred_check_branch
      %112 = sbr.rel (0) target = $region41
    $region40: #{tpu_custom_call.1} parent=1 // pred_region
      _
    $region41: #{tpu_custom_call.1} parent=1 // pred_fallthru
      _
    // Predicated region
    $region42: #{tpu_custom_call.1} parent=1 // pred_check
      _
    $region43: #{tpu_custom_call.1} parent=1 // pred_check_branch
      %114 = sbr.rel (0) target = $region45
    $region44: #{tpu_custom_call.1} parent=1 // pred_region
      %116 = dma.done [#allocation3], 1024
    $region45: #{tpu_custom_call.1} parent=1 // pred_fallthru
      _
    // Predicated region
    $region46: #{tpu_custom_call.1} parent=1 // pred_check
      _
    $region47: #{tpu_custom_call.1} parent=1 // pred_check_branch
      %118 = sbr.rel (0) target = $region49
    $region48: #{tpu_custom_call.1} parent=1 // pred_region
      %120 = dma.done [#allocation6], 128
    $region49: #{tpu_custom_call.1} parent=1 // pred_fallthru
      _
    // Predicated region
    $region50: #{tpu_custom_call.1} parent=1 // pred_check
      _
    $region51: #{tpu_custom_call.1} parent=1 // pred_check_branch
      %122 = sbr.rel (0) target = $region53
    $region52: #{tpu_custom_call.1} parent=1 // pred_region
      %124 = dma.done [#allocation6], 12288
    $region53: #{tpu_custom_call.1} parent=1 // pred_fallthru
      _
    // Predicated region
    $region54: #{tpu_custom_call.1} parent=1 // pred_check
      _
    $region55: #{tpu_custom_call.1} parent=1 // pred_check_branch
      %126 = sbr.rel (0) target = $region57
    $region56: #{tpu_custom_call.1} parent=1 // pred_region
      %128 = dma.done [#allocation9], 96
    $region57: #{tpu_custom_call.1} parent=1 // pred_fallthru
      _
    // Predicated region
    $region58: #{tpu_custom_call.1} parent=1 // pred_check
      _
    $region59: #{tpu_custom_call.1} parent=1 // pred_check_branch
      %130 = sbr.rel (0) target = $region61
    $region60: #{tpu_custom_call.1} parent=1 // pred_region
      %132 = dma.done [#allocation9], 4096
    $region61: #{tpu_custom_call.1} parent=1 // pred_fallthru
      _
    // Predicated region
    $region62: #{tpu_custom_call.1} parent=1 // pred_check
      _
    $region63: #{tpu_custom_call.1} parent=1 // pred_check_branch
      %134 = sbr.rel (0) target = $region65
    $region64: #{tpu_custom_call.1} parent=1 // pred_region
      %136 = dma.done [#allocation12], 8192
    $region65: #{tpu_custom_call.1} parent=1 // pred_fallthru
      _
    // Predicated region
    $region66: #{tpu_custom_call.1} parent=1 // pred_check
      _
    $region67: #{tpu_custom_call.1} parent=1 // pred_check_branch
      %138 = sbr.rel (0) target = $region69
    $region68: #{tpu_custom_call.1} parent=1 // pred_region
      %140 = dma.done [#allocation12], 8192
    $region69: #{tpu_custom_call.1} parent=1 // pred_fallthru
      _
    %v142 = vld [vmem:[#allocation2] sm:$0xff]
    %v143 = vld [vmem:[#allocation2 + $0x8] sm:$0xff]
    %v144 = vld [vmem:[#allocation2 + $0x10] sm:$0xff]
    %v145 = vld [vmem:[#allocation2 + $0x18] sm:$0xff]
    %v146 = vld [vmem:[#allocation2 + $0x20] sm:$0xff]
    %v147 = vld [vmem:[#allocation2 + $0x28] sm:$0xff]
    %v148 = vld [vmem:[#allocation2 + $0x30] sm:$0xff]
    %v149 = vld [vmem:[#allocation2 + $0x38] sm:$0xff]
    %v150 = vld [vmem:[#allocation5] sm:$0xff]
    %v151 = vadd.f32 %v142, %v143
    %152 = vadd.xlane.f32.xlu0 %v151
    %v153 = vpop.xlane.xlu0 %152
    %v154 = vadd.f32 %v144, %v145
    %155 = vadd.xlane.f32.xlu0 %v154
    %v156 = vpop.xlane.xlu0 %155
    %v157 = vadd.f32 %v146, %v147
    %158 = vadd.xlane.f32.xlu0 %v157
    %v159 = vpop.xlane.xlu0 %158
    %v160 = vadd.f32 %v148, %v149
    %161 = vadd.xlane.f32.xlu0 %v160
    %v162 = vpop.xlane.xlu0 %161
    %v163 = vrcp.pop 256.0
    %v164 = vmul.f32 256.0, %v163
    %v165 = vsub.f32 1.0, %v164
    %v166 = vmul.f32 %v163, %v165
    %v167 = vadd.f32 %v163, %v166
    %vm168 = vweird.f32 %v163
    %v169 = vsel %vm168, %v163, %v167
    %v170 = vmul.f32 %v153, %v169
    %v171 = vmul.f32 %v156, %v169
    %v172 = vmul.f32 %v159, %v169
    %v173 = vmul.f32 %v162, %v169
    %v174 = vsub.f32 %v142, %v170
    %v175 = vsub.f32 %v143, %v170
    %v176 = vsub.f32 %v144, %v171
    %v177 = vsub.f32 %v145, %v171
    %v178 = vsub.f32 %v146, %v172
    %v179 = vsub.f32 %v147, %v172
    %v180 = vsub.f32 %v148, %v173
    %v181 = vsub.f32 %v149, %v173
    %v182 = vmul.f32 %v174, %v174
    %v183 = vmul.f32 %v175, %v175
    %v184 = vmul.f32 %v176, %v176
    %v185 = vmul.f32 %v177, %v177
    %v186 = vmul.f32 %v178, %v178
    %v187 = vmul.f32 %v179, %v179
    %v188 = vmul.f32 %v180, %v180
    %v189 = vmul.f32 %v181, %v181
    %v190 = vadd.f32 %v182, %v183
    %191 = vadd.xlane.f32.xlu0 %v190
    %v192 = vpop.xlane.xlu0 %191
    %v193 = vadd.f32 %v184, %v185
    %194 = vadd.xlane.f32.xlu0 %v193
    %v195 = vpop.xlane.xlu0 %194
    %v196 = vadd.f32 %v186, %v187
    %197 = vadd.xlane.f32.xlu0 %v196
    %v198 = vpop.xlane.xlu0 %197
    %v199 = vadd.f32 %v188, %v189
    %200 = vadd.xlane.f32.xlu0 %v199
    %v201 = vpop.xlane.xlu0 %200
    %v202 = vmul.f32 %v192, %v169
    %v203 = vmul.f32 %v195, %v169
    %v204 = vmul.f32 %v198, %v169
    %v205 = vmul.f32 %v201, %v169
    %v206 = vadd.f32 %v202, 1e-06
    %v207 = vadd.f32 %v203, 1e-06
    %v208 = vadd.f32 %v204, 1e-06
    %v209 = vadd.f32 %v205, 1e-06
    %v210 = vrsqrt.pop %v206
    %v211 = vmul.f32 %v210, %v206
    %v212 = vmul.f32 %v211, %v210
    %v213 = vmul.f32 0.5, %v212
    %v214 = vsub.f32 1.5, %v213
    %v215 = vmul.f32 %v210, %v214
    %vm216 = vweird.f32 %v206
    %vm217 = vweird.f32 %v210
    %vm218 = vmor %vm216, %vm217
    %v219 = vsel %vm218, %v210, %v215
    %v220 = vrsqrt.pop %v207
    %v221 = vmul.f32 %v220, %v207
    %v222 = vmul.f32 %v221, %v220
    %v223 = vmul.f32 0.5, %v222
    %v224 = vsub.f32 1.5, %v223
    %v225 = vmul.f32 %v220, %v224
    %vm226 = vweird.f32 %v207
    %vm227 = vweird.f32 %v220
    %vm228 = vmor %vm226, %vm227
    %v229 = vsel %vm228, %v220, %v225
    %v230 = vrsqrt.pop %v208
    %v231 = vmul.f32 %v230, %v208
    %v232 = vmul.f32 %v231, %v230
    %v233 = vmul.f32 0.5, %v232
    %v234 = vsub.f32 1.5, %v233
    %v235 = vmul.f32 %v230, %v234
    %vm236 = vweird.f32 %v208
    %vm237 = vweird.f32 %v230
    %vm238 = vmor %vm236, %vm237
    %v239 = vsel %vm238, %v230, %v235
    %v240 = vrsqrt.pop %v209
    %v241 = vmul.f32 %v240, %v209
    %v242 = vmul.f32 %v241, %v240
    %v243 = vmul.f32 0.5, %v242
    %v244 = vsub.f32 1.5, %v243
    %v245 = vmul.f32 %v240, %v244
    %vm246 = vweird.f32 %v209
    %vm247 = vweird.f32 %v240
    %vm248 = vmor %vm246, %vm247
    %v249 = vsel %vm248, %v240, %v245
    %v250 = vmul.f32 %v174, %v219
    %v251 = vmul.f32 %v175, %v219
    %v252 = vmul.f32 %v176, %v229
    %v253 = vmul.f32 %v177, %v229
    %v254 = vmul.f32 %v178, %v239
    %v255 = vmul.f32 %v179, %v239
    %v256 = vmul.f32 %v180, %v249
    %v257 = vmul.f32 %v181, %v249
    %v259 = vperm.slane %v150, 0
    %v260 = vperm.slane %v150, 4
    %v263 = vperm.slane %v259, 0
    %v264 = vperm.slane %v260, 0
    %v265 = vmul.f32 %v250, %v263
    %v266 = vmul.f32 %v251, %v264
    %v267 = vmul.f32 %v252, %v263
    %v268 = vmul.f32 %v253, %v264
    %v269 = vmul.f32 %v254, %v263
    %v270 = vmul.f32 %v255, %v264
    %v271 = vmul.f32 %v256, %v263
    %v272 = vmul.f32 %v257, %v264
    %v273 = vperm.slane %v150, 1
    %v274 = vperm.slane %v150, 5
    %v277 = vperm.slane %v273, 1
    %v278 = vperm.slane %v274, 1
    %v279 = vadd.f32 %v265, %v277
    %v280 = vadd.f32 %v266, %v278
    %v281 = vadd.f32 %v267, %v277
    %v282 = vadd.f32 %v268, %v278
    %v283 = vadd.f32 %v269, %v277
    %v284 = vadd.f32 %v270, %v278
    %v285 = vadd.f32 %v271, %v277
    %v286 = vadd.f32 %v272, %v278
    %v287 = vpack.c.bf16 %v281, %v279
    %v288 = vpack.c.bf16 %v282, %v280
    %v289 = vpack.c.bf16 %v285, %v283
    %v290 = vpack.c.bf16 %v286, %v284
    %v291 = vld [vmem:[#allocation7] sm:$0xff]
    %v292 = vld [vmem:[#allocation7 + $0x8] sm:$0xff]
    %v293 = vld [vmem:[#allocation7 + $0x10] sm:$0xff]
    %v294 = vld [vmem:[#allocation7 + $0x18] sm:$0xff]
    %v295 = vld [vmem:[#allocation7 + $0x20] sm:$0xff]
    %v296 = vld [vmem:[#allocation7 + $0x28] sm:$0xff]
    %v297 = vld [vmem:[#allocation7 + $0x30] sm:$0xff]
    %v298 = vld [vmem:[#allocation7 + $0x38] sm:$0xff]
    %v299 = vld [vmem:[#allocation7 + $0x40] sm:$0xff]
    %v300 = vld [vmem:[#allocation7 + $0x48] sm:$0xff]
    %v301 = vld [vmem:[#allocation7 + $0x50] sm:$0xff]
    %v302 = vld [vmem:[#allocation7 + $0x58] sm:$0xff]
    %v303 = vld [vmem:[#allocation7 + $0x60] sm:$0xff]
    %v304 = vld [vmem:[#allocation7 + $0x68] sm:$0xff]
    %v305 = vld [vmem:[#allocation7 + $0x70] sm:$0xff]
    %v306 = vld [vmem:[#allocation7 + $0x78] sm:$0xff]
    %v307 = vld [vmem:[#allocation7 + $0x80] sm:$0xff]
    %v308 = vld [vmem:[#allocation7 + $0x88] sm:$0xff]
    %v309 = vld [vmem:[#allocation7 + $0x90] sm:$0xff]
    %v310 = vld [vmem:[#allocation7 + $0x98] sm:$0xff]
    %v311 = vld [vmem:[#allocation7 + $0xa0] sm:$0xff]
    %v312 = vld [vmem:[#allocation7 + $0xa8] sm:$0xff]
    %v313 = vld [vmem:[#allocation7 + $0xb0] sm:$0xff]
    %v314 = vld [vmem:[#allocation7 + $0xb8] sm:$0xff]
    %v315 = vld [vmem:[#allocation7 + $0xc0] sm:$0xff]
    %v316 = vld [vmem:[#allocation7 + $0xc8] sm:$0xff]
    %v317 = vld [vmem:[#allocation7 + $0xd0] sm:$0xff]
    %v318 = vld [vmem:[#allocation7 + $0xd8] sm:$0xff]
    %v319 = vld [vmem:[#allocation7 + $0xe0] sm:$0xff]
    %v320 = vld [vmem:[#allocation7 + $0xe8] sm:$0xff]
    %v321 = vld [vmem:[#allocation7 + $0xf0] sm:$0xff]
    %v322 = vld [vmem:[#allocation7 + $0xf8] sm:$0xff]
    %v323 = vld [vmem:[#allocation7 + $0x100] sm:$0xff]
    %v324 = vld [vmem:[#allocation7 + $0x108] sm:$0xff]
    %v325 = vld [vmem:[#allocation7 + $0x110] sm:$0xff]
    %v326 = vld [vmem:[#allocation7 + $0x118] sm:$0xff]
    %v327 = vld [vmem:[#allocation7 + $0x120] sm:$0xff]
    %v328 = vld [vmem:[#allocation7 + $0x128] sm:$0xff]
    %v329 = vld [vmem:[#allocation7 + $0x130] sm:$0xff]
    %v330 = vld [vmem:[#allocation7 + $0x138] sm:$0xff]
    %v331 = vld [vmem:[#allocation7 + $0x140] sm:$0xff]
    %v332 = vld [vmem:[#allocation7 + $0x148] sm:$0xff]
    %v333 = vld [vmem:[#allocation7 + $0x150] sm:$0xff]
    %v334 = vld [vmem:[#allocation7 + $0x158] sm:$0xff]
    %v335 = vld [vmem:[#allocation7 + $0x160] sm:$0xff]
    %v336 = vld [vmem:[#allocation7 + $0x168] sm:$0xff]
    %v337 = vld [vmem:[#allocation7 + $0x170] sm:$0xff]
    %v338 = vld [vmem:[#allocation7 + $0x178] sm:$0xff]
    %v339 = vld [vmem:[#allocation7 + $0x180] sm:$0xff]
    %v340 = vld [vmem:[#allocation7 + $0x188] sm:$0xff]
    %v341 = vld [vmem:[#allocation7 + $0x190] sm:$0xff]
    %v342 = vld [vmem:[#allocation7 + $0x198] sm:$0xff]
    %v343 = vld [vmem:[#allocation7 + $0x1a0] sm:$0xff]
    %v344 = vld [vmem:[#allocation7 + $0x1a8] sm:$0xff]
    %v345 = vld [vmem:[#allocation7 + $0x1b0] sm:$0xff]
    %v346 = vld [vmem:[#allocation7 + $0x1b8] sm:$0xff]
    %v347 = vld [vmem:[#allocation7 + $0x1c0] sm:$0xff]
    %v348 = vld [vmem:[#allocation7 + $0x1c8] sm:$0xff]
    %v349 = vld [vmem:[#allocation7 + $0x1d0] sm:$0xff]
    %v350 = vld [vmem:[#allocation7 + $0x1d8] sm:$0xff]
    %v351 = vld [vmem:[#allocation7 + $0x1e0] sm:$0xff]
    %v352 = vld [vmem:[#allocation7 + $0x1e8] sm:$0xff]
    %v353 = vld [vmem:[#allocation7 + $0x1f0] sm:$0xff]
    %v354 = vld [vmem:[#allocation7 + $0x1f8] sm:$0xff]
    %v355 = vld [vmem:[#allocation7 + $0x200] sm:$0xff]
    %v356 = vld [vmem:[#allocation7 + $0x208] sm:$0xff]
    %v357 = vld [vmem:[#allocation7 + $0x210] sm:$0xff]
    %v358 = vld [vmem:[#allocation7 + $0x218] sm:$0xff]
    %v359 = vld [vmem:[#allocation7 + $0x220] sm:$0xff]
    %v360 = vld [vmem:[#allocation7 + $0x228] sm:$0xff]
    %v361 = vld [vmem:[#allocation7 + $0x230] sm:$0xff]
    %v362 = vld [vmem:[#allocation7 + $0x238] sm:$0xff]
    %v363 = vld [vmem:[#allocation7 + $0x240] sm:$0xff]
    %v364 = vld [vmem:[#allocation7 + $0x248] sm:$0xff]
    %v365 = vld [vmem:[#allocation7 + $0x250] sm:$0xff]
    %v366 = vld [vmem:[#allocation7 + $0x258] sm:$0xff]
    %v367 = vld [vmem:[#allocation7 + $0x260] sm:$0xff]
    %v368 = vld [vmem:[#allocation7 + $0x268] sm:$0xff]
    %v369 = vld [vmem:[#allocation7 + $0x270] sm:$0xff]
    %v370 = vld [vmem:[#allocation7 + $0x278] sm:$0xff]
    %v371 = vld [vmem:[#allocation7 + $0x280] sm:$0xff]
    %v372 = vld [vmem:[#allocation7 + $0x288] sm:$0xff]
    %v373 = vld [vmem:[#allocation7 + $0x290] sm:$0xff]
    %v374 = vld [vmem:[#allocation7 + $0x298] sm:$0xff]
    %v375 = vld [vmem:[#allocation7 + $0x2a0] sm:$0xff]
    %v376 = vld [vmem:[#allocation7 + $0x2a8] sm:$0xff]
    %v377 = vld [vmem:[#allocation7 + $0x2b0] sm:$0xff]
    %v378 = vld [vmem:[#allocation7 + $0x2b8] sm:$0xff]
    %v379 = vld [vmem:[#allocation7 + $0x2c0] sm:$0xff]
    %v380 = vld [vmem:[#allocation7 + $0x2c8] sm:$0xff]
    %v381 = vld [vmem:[#allocation7 + $0x2d0] sm:$0xff]
    %v382 = vld [vmem:[#allocation7 + $0x2d8] sm:$0xff]
    %v383 = vld [vmem:[#allocation7 + $0x2e0] sm:$0xff]
    %v384 = vld [vmem:[#allocation7 + $0x2e8] sm:$0xff]
    %v385 = vld [vmem:[#allocation7 + $0x2f0] sm:$0xff]
    %v386 = vld [vmem:[#allocation7 + $0x2f8] sm:$0xff]
    %v387 = vld [vmem:[#allocation8] sm:$0x3f]
    %v389 = vperm.slane %v387, 0
    %v390 = vperm.slane %v387, 1
    %v391 = vperm.slane %v387, 2
    %v392 = vperm.slane %v387, 3
    %v393 = vperm.slane %v387, 4
    %v394 = vperm.slane %v387, 5
    %v497 = vunpack.c.l.b16 %v291
    %v498 = vunpack.c.h.b16 %v291
    %v499 = vunpack.c.l.b16 %v292
    %v500 = vunpack.c.h.b16 %v292
    %v501 = vunpack.c.l.b16 %v293
    %v502 = vunpack.c.h.b16 %v293
    %v503 = vunpack.c.l.b16 %v294
    %v504 = vunpack.c.h.b16 %v294
    %v505 = vunpack.c.l.b16 %v295
    %v506 = vunpack.c.h.b16 %v295
    %v507 = vunpack.c.l.b16 %v296
    %v508 = vunpack.c.h.b16 %v296
    %v509 = vunpack.c.l.b16 %v297
    %v510 = vunpack.c.h.b16 %v297
    %v511 = vunpack.c.l.b16 %v298
    %v512 = vunpack.c.h.b16 %v298
    %v513 = vunpack.c.l.b16 %v299
    %v514 = vunpack.c.h.b16 %v299
    %v515 = vunpack.c.l.b16 %v300
    %v516 = vunpack.c.h.b16 %v300
    %v517 = vunpack.c.l.b16 %v301
    %v518 = vunpack.c.h.b16 %v301
    %v519 = vunpack.c.l.b16 %v302
    %v520 = vunpack.c.h.b16 %v302
    %v521 = vunpack.c.l.b16 %v303
    %v522 = vunpack.c.h.b16 %v303
    %v523 = vunpack.c.l.b16 %v304
    %v524 = vunpack.c.h.b16 %v304
    %v525 = vunpack.c.l.b16 %v305
    %v526 = vunpack.c.h.b16 %v305
    %v527 = vunpack.c.l.b16 %v306
    %v528 = vunpack.c.h.b16 %v306
    %v529 = vunpack.c.l.b16 %v307
    %v530 = vunpack.c.h.b16 %v307
    %v531 = vunpack.c.l.b16 %v308
    %v532 = vunpack.c.h.b16 %v308
    %v533 = vunpack.c.l.b16 %v309
    %v534 = vunpack.c.h.b16 %v309
    %v535 = vunpack.c.l.b16 %v310
    %v536 = vunpack.c.h.b16 %v310
    %v537 = vunpack.c.l.b16 %v311
    %v538 = vunpack.c.h.b16 %v311
    %v539 = vunpack.c.l.b16 %v312
    %v540 = vunpack.c.h.b16 %v312
    %v541 = vunpack.c.l.b16 %v313
    %v542 = vunpack.c.h.b16 %v313
    %v543 = vunpack.c.l.b16 %v314
    %v544 = vunpack.c.h.b16 %v314
    %v545 = vunpack.c.l.b16 %v315
    %v546 = vunpack.c.h.b16 %v315
    %v547 = vunpack.c.l.b16 %v316
    %v548 = vunpack.c.h.b16 %v316
    %v549 = vunpack.c.l.b16 %v317
    %v550 = vunpack.c.h.b16 %v317
    %v551 = vunpack.c.l.b16 %v318
    %v552 = vunpack.c.h.b16 %v318
    %v553 = vunpack.c.l.b16 %v319
    %v554 = vunpack.c.h.b16 %v319
    %v555 = vunpack.c.l.b16 %v320
    %v556 = vunpack.c.h.b16 %v320
    %v557 = vunpack.c.l.b16 %v321
    %v558 = vunpack.c.h.b16 %v321
    %v559 = vunpack.c.l.b16 %v322
    %v560 = vunpack.c.h.b16 %v322
    %v561 = vunpack.c.l.b16 %v323
    %v562 = vunpack.c.h.b16 %v323
    %v563 = vunpack.c.l.b16 %v324
    %v564 = vunpack.c.h.b16 %v324
    %v565 = vunpack.c.l.b16 %v325
    %v566 = vunpack.c.h.b16 %v325
    %v567 = vunpack.c.l.b16 %v326
    %v568 = vunpack.c.h.b16 %v326
    %v569 = vunpack.c.l.b16 %v327
    %v570 = vunpack.c.h.b16 %v327
    %v571 = vunpack.c.l.b16 %v328
    %v572 = vunpack.c.h.b16 %v328
    %v573 = vunpack.c.l.b16 %v329
    %v574 = vunpack.c.h.b16 %v329
    %v575 = vunpack.c.l.b16 %v330
    %v576 = vunpack.c.h.b16 %v330
    %v577 = vunpack.c.l.b16 %v331
    %v578 = vunpack.c.h.b16 %v331
    %v579 = vunpack.c.l.b16 %v332
    %v580 = vunpack.c.h.b16 %v332
    %v581 = vunpack.c.l.b16 %v333
    %v582 = vunpack.c.h.b16 %v333
    %v583 = vunpack.c.l.b16 %v334
    %v584 = vunpack.c.h.b16 %v334
    %v585 = vunpack.c.l.b16 %v335
    %v586 = vunpack.c.h.b16 %v335
    %v587 = vunpack.c.l.b16 %v336
    %v588 = vunpack.c.h.b16 %v336
    %v589 = vunpack.c.l.b16 %v337
    %v590 = vunpack.c.h.b16 %v337
    %v591 = vunpack.c.l.b16 %v338
    %v592 = vunpack.c.h.b16 %v338
    %v593 = vunpack.c.l.b16 %v339
    %v594 = vunpack.c.h.b16 %v339
    %v595 = vunpack.c.l.b16 %v340
    %v596 = vunpack.c.h.b16 %v340
    %v597 = vunpack.c.l.b16 %v341
    %v598 = vunpack.c.h.b16 %v341
    %v599 = vunpack.c.l.b16 %v342
    %v600 = vunpack.c.h.b16 %v342
    %v601 = vunpack.c.l.b16 %v343
    %v602 = vunpack.c.h.b16 %v343
    %v603 = vunpack.c.l.b16 %v344
    %v604 = vunpack.c.h.b16 %v344
    %v605 = vunpack.c.l.b16 %v345
    %v606 = vunpack.c.h.b16 %v345
    %v607 = vunpack.c.l.b16 %v346
    %v608 = vunpack.c.h.b16 %v346
    %v609 = vunpack.c.l.b16 %v347
    %v610 = vunpack.c.h.b16 %v347
    %v611 = vunpack.c.l.b16 %v348
    %v612 = vunpack.c.h.b16 %v348
    %v613 = vunpack.c.l.b16 %v349
    %v614 = vunpack.c.h.b16 %v349
    %v615 = vunpack.c.l.b16 %v350
    %v616 = vunpack.c.h.b16 %v350
    %v617 = vunpack.c.l.b16 %v351
    %v618 = vunpack.c.h.b16 %v351
    %v619 = vunpack.c.l.b16 %v352
    %v620 = vunpack.c.h.b16 %v352
    %v621 = vunpack.c.l.b16 %v353
    %v622 = vunpack.c.h.b16 %v353
    %v623 = vunpack.c.l.b16 %v354
    %v624 = vunpack.c.h.b16 %v354
    %v625 = vunpack.c.l.b16 %v355
    %v626 = vunpack.c.h.b16 %v355
    %v627 = vunpack.c.l.b16 %v356
    %v628 = vunpack.c.h.b16 %v356
    %v629 = vunpack.c.l.b16 %v357
    %v630 = vunpack.c.h.b16 %v357
    %v631 = vunpack.c.l.b16 %v358
    %v632 = vunpack.c.h.b16 %v358
    %v633 = vunpack.c.l.b16 %v359
    %v634 = vunpack.c.h.b16 %v359
    %v635 = vunpack.c.l.b16 %v360
    %v636 = vunpack.c.h.b16 %v360
    %v637 = vunpack.c.l.b16 %v361
    %v638 = vunpack.c.h.b16 %v361
    %v639 = vunpack.c.l.b16 %v362
    %v640 = vunpack.c.h.b16 %v362
    %v641 = vunpack.c.l.b16 %v363
    %v642 = vunpack.c.h.b16 %v363
    %v643 = vunpack.c.l.b16 %v364
    %v644 = vunpack.c.h.b16 %v364
    %v645 = vunpack.c.l.b16 %v365
    %v646 = vunpack.c.h.b16 %v365
    %v647 = vunpack.c.l.b16 %v366
    %v648 = vunpack.c.h.b16 %v366
    %v649 = vunpack.c.l.b16 %v367
    %v650 = vunpack.c.h.b16 %v367
    %v651 = vunpack.c.l.b16 %v368
    %v652 = vunpack.c.h.b16 %v368
    %v653 = vunpack.c.l.b16 %v369
    %v654 = vunpack.c.h.b16 %v369
    %v655 = vunpack.c.l.b16 %v370
    %v656 = vunpack.c.h.b16 %v370
    %v657 = vunpack.c.l.b16 %v371
    %v658 = vunpack.c.h.b16 %v371
    %v659 = vunpack.c.l.b16 %v372
    %v660 = vunpack.c.h.b16 %v372
    %v661 = vunpack.c.l.b16 %v373
    %v662 = vunpack.c.h.b16 %v373
    %v663 = vunpack.c.l.b16 %v374
    %v664 = vunpack.c.h.b16 %v374
    %v665 = vunpack.c.l.b16 %v375
    %v666 = vunpack.c.h.b16 %v375
    %v667 = vunpack.c.l.b16 %v376
    %v668 = vunpack.c.h.b16 %v376
    %v669 = vunpack.c.l.b16 %v377
    %v670 = vunpack.c.h.b16 %v377
    %v671 = vunpack.c.l.b16 %v378
    %v672 = vunpack.c.h.b16 %v378
    %v673 = vunpack.c.l.b16 %v379
    %v674 = vunpack.c.h.b16 %v379
    %v675 = vunpack.c.l.b16 %v380
    %v676 = vunpack.c.h.b16 %v380
    %v677 = vunpack.c.l.b16 %v381
    %v678 = vunpack.c.h.b16 %v381
    %v679 = vunpack.c.l.b16 %v382
    %v680 = vunpack.c.h.b16 %v382
    %v681 = vunpack.c.l.b16 %v383
    %v682 = vunpack.c.h.b16 %v383
    %v683 = vunpack.c.l.b16 %v384
    %v684 = vunpack.c.h.b16 %v384
    %v685 = vunpack.c.l.b16 %v385
    %v686 = vunpack.c.h.b16 %v385
    %v687 = vunpack.c.l.b16 %v386
    %v688 = vunpack.c.h.b16 %v386
    %v689 = vpack.c.b16 %v503, %v497
    %v690 = vpack.c.b16 %v504, %v498
    %v691 = vpack.c.b16 %v505, %v499
    %v692 = vpack.c.b16 %v506, %v500
    %v693 = vpack.c.b16 %v507, %v501
    %v694 = vpack.c.b16 %v508, %v502
    %v695 = vpack.c.b16 %v515, %v509
    %v696 = vpack.c.b16 %v516, %v510
    %v697 = vpack.c.b16 %v517, %v511
    %v698 = vpack.c.b16 %v518, %v512
    %v699 = vpack.c.b16 %v519, %v513
    %v700 = vpack.c.b16 %v520, %v514
    %v701 = vpack.c.b16 %v527, %v521
    %v702 = vpack.c.b16 %v528, %v522
    %v703 = vpack.c.b16 %v529, %v523
    %v704 = vpack.c.b16 %v530, %v524
    %v705 = vpack.c.b16 %v531, %v525
    %v706 = vpack.c.b16 %v532, %v526
    %v707 = vpack.c.b16 %v539, %v533
    %v708 = vpack.c.b16 %v540, %v534
    %v709 = vpack.c.b16 %v541, %v535
    %v710 = vpack.c.b16 %v542, %v536
    %v711 = vpack.c.b16 %v543, %v537
    %v712 = vpack.c.b16 %v544, %v538
    %v713 = vpack.c.b16 %v551, %v545
    %v714 = vpack.c.b16 %v552, %v546
    %v715 = vpack.c.b16 %v553, %v547
    %v716 = vpack.c.b16 %v554, %v548
    %v717 = vpack.c.b16 %v555, %v549
    %v718 = vpack.c.b16 %v556, %v550
    %v719 = vpack.c.b16 %v563, %v557
    %v720 = vpack.c.b16 %v564, %v558
    %v721 = vpack.c.b16 %v565, %v559
    %v722 = vpack.c.b16 %v566, %v560
    %v723 = vpack.c.b16 %v567, %v561
    %v724 = vpack.c.b16 %v568, %v562
    %v725 = vpack.c.b16 %v575, %v569
    %v726 = vpack.c.b16 %v576, %v570
    %v727 = vpack.c.b16 %v577, %v571
    %v728 = vpack.c.b16 %v578, %v572
    %v729 = vpack.c.b16 %v579, %v573
    %v730 = vpack.c.b16 %v580, %v574
    %v731 = vpack.c.b16 %v587, %v581
    %v732 = vpack.c.b16 %v588, %v582
    %v733 = vpack.c.b16 %v589, %v583
    %v734 = vpack.c.b16 %v590, %v584
    %v735 = vpack.c.b16 %v591, %v585
    %v736 = vpack.c.b16 %v592, %v586
    %v737 = vpack.c.b16 %v599, %v593
    %v738 = vpack.c.b16 %v600, %v594
    %v739 = vpack.c.b16 %v601, %v595
    %v740 = vpack.c.b16 %v602, %v596
    %v741 = vpack.c.b16 %v603, %v597
    %v742 = vpack.c.b16 %v604, %v598
    %v743 = vpack.c.b16 %v611, %v605
    %v744 = vpack.c.b16 %v612, %v606
    %v745 = vpack.c.b16 %v613, %v607
    %v746 = vpack.c.b16 %v614, %v608
    %v747 = vpack.c.b16 %v615, %v609
    %v748 = vpack.c.b16 %v616, %v610
    %v749 = vpack.c.b16 %v623, %v617
    %v750 = vpack.c.b16 %v624, %v618
    %v751 = vpack.c.b16 %v625, %v619
    %v752 = vpack.c.b16 %v626, %v620
    %v753 = vpack.c.b16 %v627, %v621
    %v754 = vpack.c.b16 %v628, %v622
    %v755 = vpack.c.b16 %v635, %v629
    %v756 = vpack.c.b16 %v636, %v630
    %v757 = vpack.c.b16 %v637, %v631
    %v758 = vpack.c.b16 %v638, %v632
    %v759 = vpack.c.b16 %v639, %v633
    %v760 = vpack.c.b16 %v640, %v634
    %v761 = vpack.c.b16 %v647, %v641
    %v762 = vpack.c.b16 %v648, %v642
    %v763 = vpack.c.b16 %v649, %v643
    %v764 = vpack.c.b16 %v650, %v644
    %v765 = vpack.c.b16 %v651, %v645
    %v766 = vpack.c.b16 %v652, %v646
    %v767 = vpack.c.b16 %v659, %v653
    %v768 = vpack.c.b16 %v660, %v654
    %v769 = vpack.c.b16 %v661, %v655
    %v770 = vpack.c.b16 %v662, %v656
    %v771 = vpack.c.b16 %v663, %v657
    %v772 = vpack.c.b16 %v664, %v658
    %v773 = vpack.c.b16 %v671, %v665
    %v774 = vpack.c.b16 %v672, %v666
    %v775 = vpack.c.b16 %v673, %v667
    %v776 = vpack.c.b16 %v674, %v668
    %v777 = vpack.c.b16 %v675, %v669
    %v778 = vpack.c.b16 %v676, %v670
    %v779 = vpack.c.b16 %v683, %v677
    %v780 = vpack.c.b16 %v684, %v678
    %v781 = vpack.c.b16 %v685, %v679
    %v782 = vpack.c.b16 %v686, %v680
    %v783 = vpack.c.b16 %v687, %v681
    %v784 = vpack.c.b16 %v688, %v682
    %881 = vmatpush.bf16.msra.mxu0 %v731
    %882 = vmatpush.bf16.msra.mxu0 %v725
    %883 = vmatpush.bf16.msra.mxu0 %v719
    %884 = vmatpush.bf16.msra.mxu0 %v713
    %885 = vmatpush.bf16.msra.mxu0 %v707
    %886 = vmatpush.bf16.msra.mxu0 %v701
    %887 = vmatpush.bf16.msra.mxu0 %v695
    %888 = vmatpush.bf16.msra.mxu0 %v689
    %889 = vmatmul.bf16.gmra.mxu0 %v287
    %v890 = vpop.f32.mrf.mxu0
    %v891 = vadd.f32 %v389, %v890
    %v892 = vpop.f32.mrf.mxu0
    %v893 = vadd.f32 %v389, %v892
    %894 = vmatmul.bf16.gmra.mxu0 %v289
    %v895 = vpop.f32.mrf.mxu0
    %v896 = vadd.f32 %v389, %v895
    %v897 = vpop.f32.mrf.mxu0
    %v898 = vadd.f32 %v389, %v897
    %899 = vdwg.mxu0
    %900 = vmatpush.bf16.msra.mxu0 %v779
    %901 = vmatpush.bf16.msra.mxu0 %v773
    %902 = vmatpush.bf16.msra.mxu0 %v767
    %903 = vmatpush.bf16.msra.mxu0 %v761
    %904 = vmatpush.bf16.msra.mxu0 %v755
    %905 = vmatpush.bf16.msra.mxu0 %v749
    %906 = vmatpush.bf16.msra.mxu0 %v743
    %907 = vmatpush.bf16.msra.mxu0 %v737
    %908 = vmatmul.bf16.gmra.mxu0 %v288
    %v909 = vpop.f32.mrf.mxu0
    %v910 = vadd.f32 %v891, %v909
    %v911 = vpop.f32.mrf.mxu0
    %v912 = vadd.f32 %v893, %v911
    %913 = vmatmul.bf16.gmra.mxu0 %v290
    %v914 = vpop.f32.mrf.mxu0
    %v915 = vadd.f32 %v896, %v914
    %v916 = vpop.f32.mrf.mxu0
    %v917 = vadd.f32 %v898, %v916
    %918 = vdwg.mxu0
    %919 = vmatpush.bf16.msra.mxu0 %v732
    %920 = vmatpush.bf16.msra.mxu0 %v726
    %921 = vmatpush.bf16.msra.mxu0 %v720
    %922 = vmatpush.bf16.msra.mxu0 %v714
    %923 = vmatpush.bf16.msra.mxu0 %v708
    %924 = vmatpush.bf16.msra.mxu0 %v702
    %925 = vmatpush.bf16.msra.mxu0 %v696
    %926 = vmatpush.bf16.msra.mxu0 %v690
    %927 = vmatmul.bf16.gmra.mxu0 %v287
    %v928 = vpop.f32.mrf.mxu0
    %v929 = vadd.f32 %v390, %v928
    %v930 = vpop.f32.mrf.mxu0
    %v931 = vadd.f32 %v390, %v930
    %932 = vmatmul.bf16.gmra.mxu0 %v289
    %v933 = vpop.f32.mrf.mxu0
    %v934 = vadd.f32 %v390, %v933
    %v935 = vpop.f32.mrf.mxu0
    %v936 = vadd.f32 %v390, %v935
    %937 = vdwg.mxu0
    %938 = vmatpush.bf16.msra.mxu0 %v780
    %939 = vmatpush.bf16.msra.mxu0 %v774
    %940 = vmatpush.bf16.msra.mxu0 %v768
    %941 = vmatpush.bf16.msra.mxu0 %v762
    %942 = vmatpush.bf16.msra.mxu0 %v756
    %943 = vmatpush.bf16.msra.mxu0 %v750
    %944 = vmatpush.bf16.msra.mxu0 %v744
    %945 = vmatpush.bf16.msra.mxu0 %v738
    %946 = vmatmul.bf16.gmra.mxu0 %v288
    %v947 = vpop.f32.mrf.mxu0
    %v948 = vadd.f32 %v929, %v947
    %v949 = vpop.f32.mrf.mxu0
    %v950 = vadd.f32 %v931, %v949
    %951 = vmatmul.bf16.gmra.mxu0 %v290
    %v952 = vpop.f32.mrf.mxu0
    %v953 = vadd.f32 %v934, %v952
    %v954 = vpop.f32.mrf.mxu0
    %v955 = vadd.f32 %v936, %v954
    %956 = vdwg.mxu0
    %957 = vmatpush.bf16.msra.mxu0 %v733
    %958 = vmatpush.bf16.msra.mxu0 %v727
    %959 = vmatpush.bf16.msra.mxu0 %v721
    %960 = vmatpush.bf16.msra.mxu0 %v715
    %961 = vmatpush.bf16.msra.mxu0 %v709
    %962 = vmatpush.bf16.msra.mxu0 %v703
    %963 = vmatpush.bf16.msra.mxu0 %v697
    %964 = vmatpush.bf16.msra.mxu0 %v691
    %965 = vmatmul.bf16.gmra.mxu0 %v287
    %v966 = vpop.f32.mrf.mxu0
    %v967 = vadd.f32 %v391, %v966
    %v968 = vpop.f32.mrf.mxu0
    %v969 = vadd.f32 %v391, %v968
    %970 = vmatmul.bf16.gmra.mxu0 %v289
    %v971 = vpop.f32.mrf.mxu0
    %v972 = vadd.f32 %v391, %v971
    %v973 = vpop.f32.mrf.mxu0
    %v974 = vadd.f32 %v391, %v973
    %975 = vdwg.mxu0
    %976 = vmatpush.bf16.msra.mxu0 %v781
    %977 = vmatpush.bf16.msra.mxu0 %v775
    %978 = vmatpush.bf16.msra.mxu0 %v769
    %979 = vmatpush.bf16.msra.mxu0 %v763
    %980 = vmatpush.bf16.msra.mxu0 %v757
    %981 = vmatpush.bf16.msra.mxu0 %v751
    %982 = vmatpush.bf16.msra.mxu0 %v745
    %983 = vmatpush.bf16.msra.mxu0 %v739
    %984 = vmatmul.bf16.gmra.mxu0 %v288
    %v985 = vpop.f32.mrf.mxu0
    %v986 = vadd.f32 %v967, %v985
    %v987 = vpop.f32.mrf.mxu0
    %v988 = vadd.f32 %v969, %v987
    %989 = vmatmul.bf16.gmra.mxu0 %v290
    %v990 = vpop.f32.mrf.mxu0
    %v991 = vadd.f32 %v972, %v990
    %v992 = vpop.f32.mrf.mxu0
    %v993 = vadd.f32 %v974, %v992
    %994 = vdwg.mxu0
    %995 = vmatpush.bf16.msra.mxu0 %v734
    %996 = vmatpush.bf16.msra.mxu0 %v728
    %997 = vmatpush.bf16.msra.mxu0 %v722
    %998 = vmatpush.bf16.msra.mxu0 %v716
    %999 = vmatpush.bf16.msra.mxu0 %v710
    %1000 = vmatpush.bf16.msra.mxu0 %v704
    %1001 = vmatpush.bf16.msra.mxu0 %v698
    %1002 = vmatpush.bf16.msra.mxu0 %v692
    %1003 = vmatmul.bf16.gmra.mxu0 %v287
    %v1004 = vpop.f32.mrf.mxu0
    %v1005 = vadd.f32 %v392, %v1004
    %v1006 = vpop.f32.mrf.mxu0
    %v1007 = vadd.f32 %v392, %v1006
    %1008 = vmatmul.bf16.gmra.mxu0 %v289
    %v1009 = vpop.f32.mrf.mxu0
    %v1010 = vadd.f32 %v392, %v1009
    %v1011 = vpop.f32.mrf.mxu0
    %v1012 = vadd.f32 %v392, %v1011
    %1013 = vdwg.mxu0
    %1014 = vmatpush.bf16.msra.mxu0 %v782
    %1015 = vmatpush.bf16.msra.mxu0 %v776
    %1016 = vmatpush.bf16.msra.mxu0 %v770
    %1017 = vmatpush.bf16.msra.mxu0 %v764
    %1018 = vmatpush.bf16.msra.mxu0 %v758
    %1019 = vmatpush.bf16.msra.mxu0 %v752
    %1020 = vmatpush.bf16.msra.mxu0 %v746
    %1021 = vmatpush.bf16.msra.mxu0 %v740
    %1022 = vmatmul.bf16.gmra.mxu0 %v288
    %v1023 = vpop.f32.mrf.mxu0
    %v1024 = vadd.f32 %v1005, %v1023
    %v1025 = vpop.f32.mrf.mxu0
    %v1026 = vadd.f32 %v1007, %v1025
    %1027 = vmatmul.bf16.gmra.mxu0 %v290
    %v1028 = vpop.f32.mrf.mxu0
    %v1029 = vadd.f32 %v1010, %v1028
    %v1030 = vpop.f32.mrf.mxu0
    %v1031 = vadd.f32 %v1012, %v1030
    %1032 = vdwg.mxu0
    %1033 = vmatpush.bf16.msra.mxu0 %v735
    %1034 = vmatpush.bf16.msra.mxu0 %v729
    %1035 = vmatpush.bf16.msra.mxu0 %v723
    %1036 = vmatpush.bf16.msra.mxu0 %v717
    %1037 = vmatpush.bf16.msra.mxu0 %v711
    %1038 = vmatpush.bf16.msra.mxu0 %v705
    %1039 = vmatpush.bf16.msra.mxu0 %v699
    %1040 = vmatpush.bf16.msra.mxu0 %v693
    %1041 = vmatmul.bf16.gmra.mxu0 %v287
    %v1042 = vpop.f32.mrf.mxu0
    %v1043 = vadd.f32 %v393, %v1042
    %v1044 = vpop.f32.mrf.mxu0
    %v1045 = vadd.f32 %v393, %v1044
    %1046 = vmatmul.bf16.gmra.mxu0 %v289
    %v1047 = vpop.f32.mrf.mxu0
    %v1048 = vadd.f32 %v393, %v1047
    %v1049 = vpop.f32.mrf.mxu0
    %v1050 = vadd.f32 %v393, %v1049
    %1051 = vdwg.mxu0
    %1052 = vmatpush.bf16.msra.mxu0 %v783
    %1053 = vmatpush.bf16.msra.mxu0 %v777
    %1054 = vmatpush.bf16.msra.mxu0 %v771
    %1055 = vmatpush.bf16.msra.mxu0 %v765
    %1056 = vmatpush.bf16.msra.mxu0 %v759
    %1057 = vmatpush.bf16.msra.mxu0 %v753
    %1058 = vmatpush.bf16.msra.mxu0 %v747
    %1059 = vmatpush.bf16.msra.mxu0 %v741
    %1060 = vmatmul.bf16.gmra.mxu0 %v288
    %v1061 = vpop.f32.mrf.mxu0
    %v1062 = vadd.f32 %v1043, %v1061
    %v1063 = vpop.f32.mrf.mxu0
    %v1064 = vadd.f32 %v1045, %v1063
    %1065 = vmatmul.bf16.gmra.mxu0 %v290
    %v1066 = vpop.f32.mrf.mxu0
    %v1067 = vadd.f32 %v1048, %v1066
    %v1068 = vpop.f32.mrf.mxu0
    %v1069 = vadd.f32 %v1050, %v1068
    %1070 = vdwg.mxu0
    %1071 = vmatpush.bf16.msra.mxu0 %v736
    %1072 = vmatpush.bf16.msra.mxu0 %v730
    %1073 = vmatpush.bf16.msra.mxu0 %v724
    %1074 = vmatpush.bf16.msra.mxu0 %v718
    %1075 = vmatpush.bf16.msra.mxu0 %v712
    %1076 = vmatpush.bf16.msra.mxu0 %v706
    %1077 = vmatpush.bf16.msra.mxu0 %v700
    %1078 = vmatpush.bf16.msra.mxu0 %v694
    %1079 = vmatmul.bf16.gmra.mxu0 %v287
    %v1080 = vpop.f32.mrf.mxu0
    %v1081 = vadd.f32 %v394, %v1080
    %v1082 = vpop.f32.mrf.mxu0
    %v1083 = vadd.f32 %v394, %v1082
    %1084 = vmatmul.bf16.gmra.mxu0 %v289
    %v1085 = vpop.f32.mrf.mxu0
    %v1086 = vadd.f32 %v394, %v1085
    %v1087 = vpop.f32.mrf.mxu0
    %v1088 = vadd.f32 %v394, %v1087
    %1089 = vdwg.mxu0
    %1090 = vmatpush.bf16.msra.mxu0 %v784
    %1091 = vmatpush.bf16.msra.mxu0 %v778
    %1092 = vmatpush.bf16.msra.mxu0 %v772
    %1093 = vmatpush.bf16.msra.mxu0 %v766
    %1094 = vmatpush.bf16.msra.mxu0 %v760
    %1095 = vmatpush.bf16.msra.mxu0 %v754
    %1096 = vmatpush.bf16.msra.mxu0 %v748
    %1097 = vmatpush.bf16.msra.mxu0 %v742
    %1098 = vmatmul.bf16.gmra.mxu0 %v288
    %v1099 = vpop.f32.mrf.mxu0
    %v1100 = vadd.f32 %v1081, %v1099
    %v1101 = vpop.f32.mrf.mxu0
    %v1102 = vadd.f32 %v1083, %v1101
    %1103 = vmatmul.bf16.gmra.mxu0 %v290
    %v1104 = vpop.f32.mrf.mxu0
    %v1105 = vadd.f32 %v1086, %v1104
    %v1106 = vpop.f32.mrf.mxu0
    %v1107 = vadd.f32 %v1088, %v1106
    %1108 = vdwg.mxu0
    %1111 = vrot.lane.b32.xlu0 %v910, 64
    %v1112 = vpop.permute.xlu0 %1111
    %1113 = vrot.lane.b32.xlu0 %v912, 64
    %v1114 = vpop.permute.xlu0 %1113
    %1119 = vrot.lane.b32.xlu0 %v948, 64
    %v1120 = vpop.permute.xlu0 %1119
    %1121 = vrot.lane.b32.xlu0 %v950, 64
    %v1122 = vpop.permute.xlu0 %1121
    %1127 = vrot.lane.b32.xlu0 %v915, 64
    %v1128 = vpop.permute.xlu0 %1127
    %1129 = vrot.lane.b32.xlu0 %v917, 64
    %v1130 = vpop.permute.xlu0 %1129
    %1135 = vrot.lane.b32.xlu0 %v953, 64
    %v1136 = vpop.permute.xlu0 %1135
    %1137 = vrot.lane.b32.xlu0 %v955, 64
    %v1138 = vpop.permute.xlu0 %1137
    %1143 = vrot.lane.b32.xlu0 %v986, 64
    %v1144 = vpop.permute.xlu0 %1143
    %1145 = vrot.lane.b32.xlu0 %v988, 64
    %v1146 = vpop.permute.xlu0 %1145
    %1151 = vrot.lane.b32.xlu0 %v1024, 64
    %v1152 = vpop.permute.xlu0 %1151
    %1153 = vrot.lane.b32.xlu0 %v1026, 64
    %v1154 = vpop.permute.xlu0 %1153
    %1159 = vrot.lane.b32.xlu0 %v991, 64
    %v1160 = vpop.permute.xlu0 %1159
    %1161 = vrot.lane.b32.xlu0 %v993, 64
    %v1162 = vpop.permute.xlu0 %1161
    %1167 = vrot.lane.b32.xlu0 %v1029, 64
    %v1168 = vpop.permute.xlu0 %1167
    %1169 = vrot.lane.b32.xlu0 %v1031, 64
    %v1170 = vpop.permute.xlu0 %1169
    %1175 = vrot.lane.b32.xlu0 %v1062, 64
    %v1176 = vpop.permute.xlu0 %1175
    %1177 = vrot.lane.b32.xlu0 %v1064, 64
    %v1178 = vpop.permute.xlu0 %1177
    %1183 = vrot.lane.b32.xlu0 %v1100, 64
    %v1184 = vpop.permute.xlu0 %1183
    %1185 = vrot.lane.b32.xlu0 %v1102, 64
    %v1186 = vpop.permute.xlu0 %1185
    %1191 = vrot.lane.b32.xlu0 %v1067, 64
    %v1192 = vpop.permute.xlu0 %1191
    %1193 = vrot.lane.b32.xlu0 %v1069, 64
    %v1194 = vpop.permute.xlu0 %1193
    %1199 = vrot.lane.b32.xlu0 %v1105, 64
    %v1200 = vpop.permute.xlu0 %1199
    %1201 = vrot.lane.b32.xlu0 %v1107, 64
    %v1202 = vpop.permute.xlu0 %1201
    %v1205 = vpack.c.bf16 %v910, %v910
    %v1206 = vpack.c.bf16 %v912, %v912
    %v1207 = vpack.c.bf16 %v1112, %v1112
    %v1208 = vpack.c.bf16 %v1114, %v1114
    %v1209 = vpack.c.bf16 %v948, %v948
    %v1210 = vpack.c.bf16 %v950, %v950
    %v1211 = vpack.c.bf16 %v1120, %v1120
    %v1212 = vpack.c.bf16 %v1122, %v1122
    %v1213 = vpack.c.bf16 %v915, %v915
    %v1214 = vpack.c.bf16 %v917, %v917
    %v1215 = vpack.c.bf16 %v1128, %v1128
    %v1216 = vpack.c.bf16 %v1130, %v1130
    %v1217 = vpack.c.bf16 %v953, %v953
    %v1218 = vpack.c.bf16 %v955, %v955
    %v1219 = vpack.c.bf16 %v1136, %v1136
    %v1220 = vpack.c.bf16 %v1138, %v1138
    %v1221 = vpack.c.bf16 %v986, %v986
    %v1222 = vpack.c.bf16 %v988, %v988
    %v1223 = vpack.c.bf16 %v1144, %v1144
    %v1224 = vpack.c.bf16 %v1146, %v1146
    %v1225 = vpack.c.bf16 %v1024, %v1024
    %v1226 = vpack.c.bf16 %v1026, %v1026
    %v1227 = vpack.c.bf16 %v1152, %v1152
    %v1228 = vpack.c.bf16 %v1154, %v1154
    %v1229 = vpack.c.bf16 %v991, %v991
    %v1230 = vpack.c.bf16 %v993, %v993
    %v1231 = vpack.c.bf16 %v1160, %v1160
    %v1232 = vpack.c.bf16 %v1162, %v1162
    %v1233 = vpack.c.bf16 %v1029, %v1029
    %v1234 = vpack.c.bf16 %v1031, %v1031
    %v1235 = vpack.c.bf16 %v1168, %v1168
    %v1236 = vpack.c.bf16 %v1170, %v1170
    %v1239 = vunpack.c.l.b16 %v1205
    %v1240 = vunpack.c.l.b16 %v1206
    %v1241 = vpack.c.b16 %v1240, %v1239
    %v1244 = vunpack.c.l.b16 %v1221
    %v1245 = vunpack.c.l.b16 %v1222
    %v1246 = vpack.c.b16 %v1245, %v1244
    %vm1247 = vcmask 523264
    %v1249 = vsel %vm1247, %v1241, 0
    %v1252 = vsel %vm1247, %v1246, 0
    %1254 = vmatpush.bf16.xpose.msra.mxu0 0
    %1255 = vmatpush.bf16.xpose.msra.mxu0 0
    %1256 = vmatpush.bf16.xpose.msra.mxu0 0
    %1257 = vmatpush.bf16.xpose.msra.mxu0 0
    %1258 = vmatpush.bf16.xpose.msra.mxu0 0
    %1259 = vmatpush.bf16.xpose.msra.mxu0 0
    %1260 = vmatpush.bf16.xpose.msra.mxu0 0
    %1261 = vmatpush.bf16.xpose.msra.mxu0 %v1252
    %1262 = vmatmul.bf16.gmra.mxu0 %v1249
    %v1263 = vpop.f32.mrf.mxu0
    %v1264 = vadd.f32 0.0, %v1263
    %v1265 = vpop.f32.mrf.mxu0
    %v1266 = vadd.f32 0.0, %v1265
    %1267 = vdwg.mxu0
    %v1270 = vunpack.c.l.b16 %v1207
    %v1271 = vunpack.c.l.b16 %v1208
    %v1272 = vpack.c.b16 %v1271, %v1270
    %v1275 = vunpack.c.l.b16 %v1223
    %v1276 = vunpack.c.l.b16 %v1224
    %v1277 = vpack.c.b16 %v1276, %v1275
    %v1279 = vsel %vm1247, %v1272, 0
    %v1282 = vsel %vm1247, %v1277, 0
    %1284 = vmatpush.bf16.xpose.msra.mxu0 0
    %1285 = vmatpush.bf16.xpose.msra.mxu0 0
    %1286 = vmatpush.bf16.xpose.msra.mxu0 0
    %1287 = vmatpush.bf16.xpose.msra.mxu0 0
    %1288 = vmatpush.bf16.xpose.msra.mxu0 0
    %1289 = vmatpush.bf16.xpose.msra.mxu0 0
    %1290 = vmatpush.bf16.xpose.msra.mxu0 0
    %1291 = vmatpush.bf16.xpose.msra.mxu0 %v1282
    %1292 = vmatmul.bf16.gmra.mxu0 %v1279
    %v1293 = vpop.f32.mrf.mxu0
    %v1294 = vadd.f32 0.0, %v1293
    %v1295 = vpop.f32.mrf.mxu0
    %v1296 = vadd.f32 0.0, %v1295
    %1297 = vdwg.mxu0
    %v1300 = vunpack.c.l.b16 %v1209
    %v1301 = vunpack.c.l.b16 %v1210
    %v1302 = vpack.c.b16 %v1301, %v1300
    %v1305 = vunpack.c.l.b16 %v1225
    %v1306 = vunpack.c.l.b16 %v1226
    %v1307 = vpack.c.b16 %v1306, %v1305
    %v1309 = vsel %vm1247, %v1302, 0
    %v1312 = vsel %vm1247, %v1307, 0
    %1314 = vmatpush.bf16.xpose.msra.mxu0 0
    %1315 = vmatpush.bf16.xpose.msra.mxu0 0
    %1316 = vmatpush.bf16.xpose.msra.mxu0 0
    %1317 = vmatpush.bf16.xpose.msra.mxu0 0
    %1318 = vmatpush.bf16.xpose.msra.mxu0 0
    %1319 = vmatpush.bf16.xpose.msra.mxu0 0
    %1320 = vmatpush.bf16.xpose.msra.mxu0 0
    %1321 = vmatpush.bf16.xpose.msra.mxu0 %v1312
    %1322 = vmatmul.bf16.gmra.mxu0 %v1309
    %v1323 = vpop.f32.mrf.mxu0
    %v1324 = vadd.f32 0.0, %v1323
    %v1325 = vpop.f32.mrf.mxu0
    %v1326 = vadd.f32 0.0, %v1325
    %1327 = vdwg.mxu0
    %v1330 = vunpack.c.l.b16 %v1211
    %v1331 = vunpack.c.l.b16 %v1212
    %v1332 = vpack.c.b16 %v1331, %v1330
    %v1335 = vunpack.c.l.b16 %v1227
    %v1336 = vunpack.c.l.b16 %v1228
    %v1337 = vpack.c.b16 %v1336, %v1335
    %v1339 = vsel %vm1247, %v1332, 0
    %v1342 = vsel %vm1247, %v1337, 0
    %1344 = vmatpush.bf16.xpose.msra.mxu0 0
    %1345 = vmatpush.bf16.xpose.msra.mxu0 0
    %1346 = vmatpush.bf16.xpose.msra.mxu0 0
    %1347 = vmatpush.bf16.xpose.msra.mxu0 0
    %1348 = vmatpush.bf16.xpose.msra.mxu0 0
    %1349 = vmatpush.bf16.xpose.msra.mxu0 0
    %1350 = vmatpush.bf16.xpose.msra.mxu0 0
    %1351 = vmatpush.bf16.xpose.msra.mxu0 %v1342
    %1352 = vmatmul.bf16.gmra.mxu0 %v1339
    %v1353 = vpop.f32.mrf.mxu0
    %v1354 = vadd.f32 0.0, %v1353
    %v1355 = vpop.f32.mrf.mxu0
    %v1356 = vadd.f32 0.0, %v1355
    %1357 = vdwg.mxu0
    %v1360 = vunpack.c.l.b16 %v1213
    %v1361 = vunpack.c.l.b16 %v1214
    %v1362 = vpack.c.b16 %v1361, %v1360
    %v1365 = vunpack.c.l.b16 %v1229
    %v1366 = vunpack.c.l.b16 %v1230
    %v1367 = vpack.c.b16 %v1366, %v1365
    %v1369 = vsel %vm1247, %v1362, 0
    %v1372 = vsel %vm1247, %v1367, 0
    %1374 = vmatpush.bf16.xpose.msra.mxu0 0
    %1375 = vmatpush.bf16.xpose.msra.mxu0 0
    %1376 = vmatpush.bf16.xpose.msra.mxu0 0
    %1377 = vmatpush.bf16.xpose.msra.mxu0 0
    %1378 = vmatpush.bf16.xpose.msra.mxu0 0
    %1379 = vmatpush.bf16.xpose.msra.mxu0 0
    %1380 = vmatpush.bf16.xpose.msra.mxu0 0
    %1381 = vmatpush.bf16.xpose.msra.mxu0 %v1372
    %1382 = vmatmul.bf16.gmra.mxu0 %v1369
    %v1383 = vpop.f32.mrf.mxu0
    %v1384 = vadd.f32 0.0, %v1383
    %v1385 = vpop.f32.mrf.mxu0
    %v1386 = vadd.f32 0.0, %v1385
    %1387 = vdwg.mxu0
    %v1390 = vunpack.c.l.b16 %v1215
    %v1391 = vunpack.c.l.b16 %v1216
    %v1392 = vpack.c.b16 %v1391, %v1390
    %v1395 = vunpack.c.l.b16 %v1231
    %v1396 = vunpack.c.l.b16 %v1232
    %v1397 = vpack.c.b16 %v1396, %v1395
    %v1399 = vsel %vm1247, %v1392, 0
    %v1402 = vsel %vm1247, %v1397, 0
    %1404 = vmatpush.bf16.xpose.msra.mxu0 0
    %1405 = vmatpush.bf16.xpose.msra.mxu0 0
    %1406 = vmatpush.bf16.xpose.msra.mxu0 0
    %1407 = vmatpush.bf16.xpose.msra.mxu0 0
    %1408 = vmatpush.bf16.xpose.msra.mxu0 0
    %1409 = vmatpush.bf16.xpose.msra.mxu0 0
    %1410 = vmatpush.bf16.xpose.msra.mxu0 0
    %1411 = vmatpush.bf16.xpose.msra.mxu0 %v1402
    %1412 = vmatmul.bf16.gmra.mxu0 %v1399
    %v1413 = vpop.f32.mrf.mxu0
    %v1414 = vadd.f32 0.0, %v1413
    %v1415 = vpop.f32.mrf.mxu0
    %v1416 = vadd.f32 0.0, %v1415
    %1417 = vdwg.mxu0
    %v1420 = vunpack.c.l.b16 %v1217
    %v1421 = vunpack.c.l.b16 %v1218
    %v1422 = vpack.c.b16 %v1421, %v1420
    %v1425 = vunpack.c.l.b16 %v1233
    %v1426 = vunpack.c.l.b16 %v1234
    %v1427 = vpack.c.b16 %v1426, %v1425
    %v1429 = vsel %vm1247, %v1422, 0
    %v1432 = vsel %vm1247, %v1427, 0
    %1434 = vmatpush.bf16.xpose.msra.mxu0 0
    %1435 = vmatpush.bf16.xpose.msra.mxu0 0
    %1436 = vmatpush.bf16.xpose.msra.mxu0 0
    %1437 = vmatpush.bf16.xpose.msra.mxu0 0
    %1438 = vmatpush.bf16.xpose.msra.mxu0 0
    %1439 = vmatpush.bf16.xpose.msra.mxu0 0
    %1440 = vmatpush.bf16.xpose.msra.mxu0 0
    %1441 = vmatpush.bf16.xpose.msra.mxu0 %v1432
    %1442 = vmatmul.bf16.gmra.mxu0 %v1429
    %v1443 = vpop.f32.mrf.mxu0
    %v1444 = vadd.f32 0.0, %v1443
    %v1445 = vpop.f32.mrf.mxu0
    %v1446 = vadd.f32 0.0, %v1445
    %1447 = vdwg.mxu0
    %v1450 = vunpack.c.l.b16 %v1219
    %v1451 = vunpack.c.l.b16 %v1220
    %v1452 = vpack.c.b16 %v1451, %v1450
    %v1455 = vunpack.c.l.b16 %v1235
    %v1456 = vunpack.c.l.b16 %v1236
    %v1457 = vpack.c.b16 %v1456, %v1455
    %v1459 = vsel %vm1247, %v1452, 0
    %v1462 = vsel %vm1247, %v1457, 0
    %1464 = vmatpush.bf16.xpose.msra.mxu0 0
    %1465 = vmatpush.bf16.xpose.msra.mxu0 0
    %1466 = vmatpush.bf16.xpose.msra.mxu0 0
    %1467 = vmatpush.bf16.xpose.msra.mxu0 0
    %1468 = vmatpush.bf16.xpose.msra.mxu0 0
    %1469 = vmatpush.bf16.xpose.msra.mxu0 0
    %1470 = vmatpush.bf16.xpose.msra.mxu0 0
    %1471 = vmatpush.bf16.xpose.msra.mxu0 %v1462
    %1472 = vmatmul.bf16.gmra.mxu0 %v1459
    %v1473 = vpop.f32.mrf.mxu0
    %v1474 = vadd.f32 0.0, %v1473
    %v1475 = vpop.f32.mrf.mxu0
    %v1476 = vadd.f32 0.0, %v1475
    %1477 = vdwg.mxu0
    %vm1478 = vcmask 130048
    %v1479 = vsel %vm1478, %v1264, -inf
    %1480 = vmax.xlane.f32.xlu0 %v1479
    %v1481 = vpop.xlane.xlu0 %1480
    %v1482 = vsel %vm1478, %v1266, -inf
    %1483 = vmax.xlane.f32.xlu0 %v1482
    %v1484 = vpop.xlane.xlu0 %1483
    %v1485 = vsel %vm1478, %v1294, -inf
    %1486 = vmax.xlane.f32.xlu0 %v1485
    %v1487 = vpop.xlane.xlu0 %1486
    %v1488 = vsel %vm1478, %v1296, -inf
    %1489 = vmax.xlane.f32.xlu0 %v1488
    %v1490 = vpop.xlane.xlu0 %1489
    %v1491 = vsel %vm1478, %v1324, -inf
    %1492 = vmax.xlane.f32.xlu0 %v1491
    %v1493 = vpop.xlane.xlu0 %1492
    %v1494 = vsel %vm1478, %v1326, -inf
    %1495 = vmax.xlane.f32.xlu0 %v1494
    %v1496 = vpop.xlane.xlu0 %1495
    %v1497 = vsel %vm1478, %v1354, -inf
    %1498 = vmax.xlane.f32.xlu0 %v1497
    %v1499 = vpop.xlane.xlu0 %1498
    %v1500 = vsel %vm1478, %v1356, -inf
    %1501 = vmax.xlane.f32.xlu0 %v1500
    %v1502 = vpop.xlane.xlu0 %1501
    %v1503 = vsel %vm1478, %v1384, -inf
    %1504 = vmax.xlane.f32.xlu0 %v1503
    %v1505 = vpop.xlane.xlu0 %1504
    %v1506 = vsel %vm1478, %v1386, -inf
    %1507 = vmax.xlane.f32.xlu0 %v1506
    %v1508 = vpop.xlane.xlu0 %1507
    %v1509 = vsel %vm1478, %v1414, -inf
    %1510 = vmax.xlane.f32.xlu0 %v1509
    %v1511 = vpop.xlane.xlu0 %1510
    %v1512 = vsel %vm1478, %v1416, -inf
    %1513 = vmax.xlane.f32.xlu0 %v1512
    %v1514 = vpop.xlane.xlu0 %1513
    %v1515 = vsel %vm1478, %v1444, -inf
    %1516 = vmax.xlane.f32.xlu0 %v1515
    %v1517 = vpop.xlane.xlu0 %1516
    %v1518 = vsel %vm1478, %v1446, -inf
    %1519 = vmax.xlane.f32.xlu0 %v1518
    %v1520 = vpop.xlane.xlu0 %1519
    %v1521 = vsel %vm1478, %v1474, -inf
    %1522 = vmax.xlane.f32.xlu0 %v1521
    %v1523 = vpop.xlane.xlu0 %1522
    %v1524 = vsel %vm1478, %v1476, -inf
    %1525 = vmax.xlane.f32.xlu0 %v1524
    %v1526 = vpop.xlane.xlu0 %1525
    %v1527 = vsub.f32 %v1264, %v1481
    %v1528 = vsub.f32 %v1266, %v1484
    %v1529 = vsub.f32 %v1294, %v1487
    %v1530 = vsub.f32 %v1296, %v1490
    %v1531 = vsub.f32 %v1324, %v1493
    %v1532 = vsub.f32 %v1326, %v1496
    %v1533 = vsub.f32 %v1354, %v1499
    %v1534 = vsub.f32 %v1356, %v1502
    %v1535 = vsub.f32 %v1384, %v1505
    %v1536 = vsub.f32 %v1386, %v1508
    %v1537 = vsub.f32 %v1414, %v1511
    %v1538 = vsub.f32 %v1416, %v1514
    %v1539 = vsub.f32 %v1444, %v1517
    %v1540 = vsub.f32 %v1446, %v1520
    %v1541 = vsub.f32 %v1474, %v1523
    %v1542 = vsub.f32 %v1476, %v1526
    %v1543 = vmul.f32 %v1527, 1.442695
    %v1544 = vpow.pop %v1543
    %v1545 = vmul.f32 %v1528, 1.442695
    %v1546 = vpow.pop %v1545
    %v1547 = vmul.f32 %v1529, 1.442695
    %v1548 = vpow.pop %v1547
    %v1549 = vmul.f32 %v1530, 1.442695
    %v1550 = vpow.pop %v1549
    %v1551 = vmul.f32 %v1531, 1.442695
    %v1552 = vpow.pop %v1551
    %v1553 = vmul.f32 %v1532, 1.442695
    %v1554 = vpow.pop %v1553
    %v1555 = vmul.f32 %v1533, 1.442695
    %v1556 = vpow.pop %v1555
    %v1557 = vmul.f32 %v1534, 1.442695
    %v1558 = vpow.pop %v1557
    %v1559 = vmul.f32 %v1535, 1.442695
    %v1560 = vpow.pop %v1559
    %v1561 = vmul.f32 %v1536, 1.442695
    %v1562 = vpow.pop %v1561
    %v1563 = vmul.f32 %v1537, 1.442695
    %v1564 = vpow.pop %v1563
    %v1565 = vmul.f32 %v1538, 1.442695
    %v1566 = vpow.pop %v1565
    %v1567 = vmul.f32 %v1539, 1.442695
    %v1568 = vpow.pop %v1567
    %v1569 = vmul.f32 %v1540, 1.442695
    %v1570 = vpow.pop %v1569
    %v1571 = vmul.f32 %v1541, 1.442695
    %v1572 = vpow.pop %v1571
    %v1573 = vmul.f32 %v1542, 1.442695
    %v1574 = vpow.pop %v1573
    %v1575 = vsel %vm1478, %v1544, 0.0
    %1576 = vadd.xlane.f32.xlu0 %v1575
    %v1577 = vpop.xlane.xlu0 %1576
    %v1578 = vsel %vm1478, %v1546, 0.0
    %1579 = vadd.xlane.f32.xlu0 %v1578
    %v1580 = vpop.xlane.xlu0 %1579
    %v1581 = vsel %vm1478, %v1548, 0.0
    %1582 = vadd.xlane.f32.xlu0 %v1581
    %v1583 = vpop.xlane.xlu0 %1582
    %v1584 = vsel %vm1478, %v1550, 0.0
    %1585 = vadd.xlane.f32.xlu0 %v1584
    %v1586 = vpop.xlane.xlu0 %1585
    %v1587 = vsel %vm1478, %v1552, 0.0
    %1588 = vadd.xlane.f32.xlu0 %v1587
    %v1589 = vpop.xlane.xlu0 %1588
    %v1590 = vsel %vm1478, %v1554, 0.0
    %1591 = vadd.xlane.f32.xlu0 %v1590
    %v1592 = vpop.xlane.xlu0 %1591
    %v1593 = vsel %vm1478, %v1556, 0.0
    %1594 = vadd.xlane.f32.xlu0 %v1593
    %v1595 = vpop.xlane.xlu0 %1594
    %v1596 = vsel %vm1478, %v1558, 0.0
    %1597 = vadd.xlane.f32.xlu0 %v1596
    %v1598 = vpop.xlane.xlu0 %1597
    %v1599 = vsel %vm1478, %v1560, 0.0
    %1600 = vadd.xlane.f32.xlu0 %v1599
    %v1601 = vpop.xlane.xlu0 %1600
    %v1602 = vsel %vm1478, %v1562, 0.0
    %1603 = vadd.xlane.f32.xlu0 %v1602
    %v1604 = vpop.xlane.xlu0 %1603
    %v1605 = vsel %vm1478, %v1564, 0.0
    %1606 = vadd.xlane.f32.xlu0 %v1605
    %v1607 = vpop.xlane.xlu0 %1606
    %v1608 = vsel %vm1478, %v1566, 0.0
    %1609 = vadd.xlane.f32.xlu0 %v1608
    %v1610 = vpop.xlane.xlu0 %1609
    %v1611 = vsel %vm1478, %v1568, 0.0
    %1612 = vadd.xlane.f32.xlu0 %v1611
    %v1613 = vpop.xlane.xlu0 %1612
    %v1614 = vsel %vm1478, %v1570, 0.0
    %1615 = vadd.xlane.f32.xlu0 %v1614
    %v1616 = vpop.xlane.xlu0 %1615
    %v1617 = vsel %vm1478, %v1572, 0.0
    %1618 = vadd.xlane.f32.xlu0 %v1617
    %v1619 = vpop.xlane.xlu0 %1618
    %v1620 = vsel %vm1478, %v1574, 0.0
    %1621 = vadd.xlane.f32.xlu0 %v1620
    %v1622 = vpop.xlane.xlu0 %1621
    %v1623 = vrcp.pop %v1577
    %v1624 = vrcp.pop %v1580
    %v1625 = vrcp.pop %v1583
    %v1626 = vrcp.pop %v1586
    %v1627 = vrcp.pop %v1589
    %v1628 = vrcp.pop %v1592
    %v1629 = vrcp.pop %v1595
    %v1630 = vrcp.pop %v1598
    %v1631 = vrcp.pop %v1601
    %v1632 = vrcp.pop %v1604
    %v1633 = vrcp.pop %v1607
    %v1634 = vrcp.pop %v1610
    %v1635 = vrcp.pop %v1613
    %v1636 = vrcp.pop %v1616
    %v1637 = vrcp.pop %v1619
    %v1638 = vrcp.pop %v1622
    %v1639 = vmul.f32 %v1544, %v1623
    %v1640 = vmul.f32 %v1546, %v1624
    %v1641 = vmul.f32 %v1548, %v1625
    %v1642 = vmul.f32 %v1550, %v1626
    %v1643 = vmul.f32 %v1552, %v1627
    %v1644 = vmul.f32 %v1554, %v1628
    %v1645 = vmul.f32 %v1556, %v1629
    %v1646 = vmul.f32 %v1558, %v1630
    %v1647 = vmul.f32 %v1560, %v1631
    %v1648 = vmul.f32 %v1562, %v1632
    %v1649 = vmul.f32 %v1564, %v1633
    %v1650 = vmul.f32 %v1566, %v1634
    %v1651 = vmul.f32 %v1568, %v1635
    %v1652 = vmul.f32 %v1570, %v1636
    %v1653 = vmul.f32 %v1572, %v1637
    %v1654 = vmul.f32 %v1574, %v1638
    %v1655 = vpack.c.bf16 %v1639, %v1639
    %v1656 = vpack.c.bf16 %v1640, %v1640
    %v1657 = vpack.c.bf16 %v1641, %v1641
    %v1658 = vpack.c.bf16 %v1642, %v1642
    %v1659 = vpack.c.bf16 %v1643, %v1643
    %v1660 = vpack.c.bf16 %v1644, %v1644
    %v1661 = vpack.c.bf16 %v1645, %v1645
    %v1662 = vpack.c.bf16 %v1646, %v1646
    %v1663 = vpack.c.bf16 %v1647, %v1647
    %v1664 = vpack.c.bf16 %v1648, %v1648
    %v1665 = vpack.c.bf16 %v1649, %v1649
    %v1666 = vpack.c.bf16 %v1650, %v1650
    %v1667 = vpack.c.bf16 %v1651, %v1651
    %v1668 = vpack.c.bf16 %v1652, %v1652
    %v1669 = vpack.c.bf16 %v1653, %v1653
    %v1670 = vpack.c.bf16 %v1654, %v1654
    %v1671 = vpack.c.bf16 %v1062, %v1062
    %v1672 = vpack.c.bf16 %v1064, %v1064
    %v1673 = vpack.c.bf16 %v1176, %v1176
    %v1674 = vpack.c.bf16 %v1178, %v1178
    %v1675 = vpack.c.bf16 %v1100, %v1100
    %v1676 = vpack.c.bf16 %v1102, %v1102
    %v1677 = vpack.c.bf16 %v1184, %v1184
    %v1678 = vpack.c.bf16 %v1186, %v1186
    %v1679 = vpack.c.bf16 %v1067, %v1067
    %v1680 = vpack.c.bf16 %v1069, %v1069
    %v1681 = vpack.c.bf16 %v1192, %v1192
    %v1682 = vpack.c.bf16 %v1194, %v1194
    %v1683 = vpack.c.bf16 %v1105, %v1105
    %v1684 = vpack.c.bf16 %v1107, %v1107
    %v1685 = vpack.c.bf16 %v1200, %v1200
    %v1686 = vpack.c.bf16 %v1202, %v1202
    %v1689 = vunpack.c.l.b16 %v1655
    %v1690 = vunpack.c.l.b16 %v1656
    %v1691 = vpack.c.b16 %v1690, %v1689
    %v1694 = vunpack.c.l.b16 %v1671
    %v1695 = vunpack.c.l.b16 %v1672
    %v1696 = vpack.c.b16 %v1695, %v1694
    %v1699 = vsel %vm1478, %v1691, 0
    %1701 = vmatpush.bf16.msra.mxu0 0
    %1702 = vmatpush.bf16.msra.mxu0 0
    %1703 = vmatpush.bf16.msra.mxu0 0
    %1704 = vmatpush.bf16.msra.mxu0 0
    %1705 = vmatpush.bf16.msra.mxu0 0
    %1706 = vmatpush.bf16.msra.mxu0 0
    %1707 = vmatpush.bf16.msra.mxu0 0
    %1708 = vmatpush.bf16.msra.mxu0 %v1696
    %1709 = vmatmul.bf16.gmra.mxu0 %v1699
    %v1710 = vpop.f32.mrf.mxu0
    %v1711 = vadd.f32 0.0, %v1710
    %v1712 = vpop.f32.mrf.mxu0
    %v1713 = vadd.f32 0.0, %v1712
    %1714 = vdwg.mxu0
    %v1717 = vunpack.c.l.b16 %v1657
    %v1718 = vunpack.c.l.b16 %v1658
    %v1719 = vpack.c.b16 %v1718, %v1717
    %v1722 = vunpack.c.l.b16 %v1673
    %v1723 = vunpack.c.l.b16 %v1674
    %v1724 = vpack.c.b16 %v1723, %v1722
    %v1727 = vsel %vm1478, %v1719, 0
    %1729 = vmatpush.bf16.msra.mxu0 0
    %1730 = vmatpush.bf16.msra.mxu0 0
    %1731 = vmatpush.bf16.msra.mxu0 0
    %1732 = vmatpush.bf16.msra.mxu0 0
    %1733 = vmatpush.bf16.msra.mxu0 0
    %1734 = vmatpush.bf16.msra.mxu0 0
    %1735 = vmatpush.bf16.msra.mxu0 0
    %1736 = vmatpush.bf16.msra.mxu0 %v1724
    %1737 = vmatmul.bf16.gmra.mxu0 %v1727
    %v1738 = vpop.f32.mrf.mxu0
    %v1739 = vadd.f32 0.0, %v1738
    %v1740 = vpop.f32.mrf.mxu0
    %v1741 = vadd.f32 0.0, %v1740
    %1742 = vdwg.mxu0
    %v1745 = vunpack.c.l.b16 %v1659
    %v1746 = vunpack.c.l.b16 %v1660
    %v1747 = vpack.c.b16 %v1746, %v1745
    %v1750 = vunpack.c.l.b16 %v1675
    %v1751 = vunpack.c.l.b16 %v1676
    %v1752 = vpack.c.b16 %v1751, %v1750
    %v1755 = vsel %vm1478, %v1747, 0
    %1757 = vmatpush.bf16.msra.mxu0 0
    %1758 = vmatpush.bf16.msra.mxu0 0
    %1759 = vmatpush.bf16.msra.mxu0 0
    %1760 = vmatpush.bf16.msra.mxu0 0
    %1761 = vmatpush.bf16.msra.mxu0 0
    %1762 = vmatpush.bf16.msra.mxu0 0
    %1763 = vmatpush.bf16.msra.mxu0 0
    %1764 = vmatpush.bf16.msra.mxu0 %v1752
    %1765 = vmatmul.bf16.gmra.mxu0 %v1755
    %v1766 = vpop.f32.mrf.mxu0
    %v1767 = vadd.f32 0.0, %v1766
    %v1768 = vpop.f32.mrf.mxu0
    %v1769 = vadd.f32 0.0, %v1768
    %1770 = vdwg.mxu0
    %v1773 = vunpack.c.l.b16 %v1661
    %v1774 = vunpack.c.l.b16 %v1662
    %v1775 = vpack.c.b16 %v1774, %v1773
    %v1778 = vunpack.c.l.b16 %v1677
    %v1779 = vunpack.c.l.b16 %v1678
    %v1780 = vpack.c.b16 %v1779, %v1778
    %v1783 = vsel %vm1478, %v1775, 0
    %1785 = vmatpush.bf16.msra.mxu0 0
    %1786 = vmatpush.bf16.msra.mxu0 0
    %1787 = vmatpush.bf16.msra.mxu0 0
    %1788 = vmatpush.bf16.msra.mxu0 0
    %1789 = vmatpush.bf16.msra.mxu0 0
    %1790 = vmatpush.bf16.msra.mxu0 0
    %1791 = vmatpush.bf16.msra.mxu0 0
    %1792 = vmatpush.bf16.msra.mxu0 %v1780
    %1793 = vmatmul.bf16.gmra.mxu0 %v1783
    %v1794 = vpop.f32.mrf.mxu0
    %v1795 = vadd.f32 0.0, %v1794
    %v1796 = vpop.f32.mrf.mxu0
    %v1797 = vadd.f32 0.0, %v1796
    %1798 = vdwg.mxu0
    %v1801 = vunpack.c.l.b16 %v1663
    %v1802 = vunpack.c.l.b16 %v1664
    %v1803 = vpack.c.b16 %v1802, %v1801
    %v1806 = vunpack.c.l.b16 %v1679
    %v1807 = vunpack.c.l.b16 %v1680
    %v1808 = vpack.c.b16 %v1807, %v1806
    %v1811 = vsel %vm1478, %v1803, 0
    %1813 = vmatpush.bf16.msra.mxu0 0
    %1814 = vmatpush.bf16.msra.mxu0 0
    %1815 = vmatpush.bf16.msra.mxu0 0
    %1816 = vmatpush.bf16.msra.mxu0 0
    %1817 = vmatpush.bf16.msra.mxu0 0
    %1818 = vmatpush.bf16.msra.mxu0 0
    %1819 = vmatpush.bf16.msra.mxu0 0
    %1820 = vmatpush.bf16.msra.mxu0 %v1808
    %1821 = vmatmul.bf16.gmra.mxu0 %v1811
    %v1822 = vpop.f32.mrf.mxu0
    %v1823 = vadd.f32 0.0, %v1822
    %v1824 = vpop.f32.mrf.mxu0
    %v1825 = vadd.f32 0.0, %v1824
    %1826 = vdwg.mxu0
    %v1829 = vunpack.c.l.b16 %v1665
    %v1830 = vunpack.c.l.b16 %v1666
    %v1831 = vpack.c.b16 %v1830, %v1829
    %v1834 = vunpack.c.l.b16 %v1681
    %v1835 = vunpack.c.l.b16 %v1682
    %v1836 = vpack.c.b16 %v1835, %v1834
    %v1839 = vsel %vm1478, %v1831, 0
    %1841 = vmatpush.bf16.msra.mxu0 0
    %1842 = vmatpush.bf16.msra.mxu0 0
    %1843 = vmatpush.bf16.msra.mxu0 0
    %1844 = vmatpush.bf16.msra.mxu0 0
    %1845 = vmatpush.bf16.msra.mxu0 0
    %1846 = vmatpush.bf16.msra.mxu0 0
    %1847 = vmatpush.bf16.msra.mxu0 0
    %1848 = vmatpush.bf16.msra.mxu0 %v1836
    %1849 = vmatmul.bf16.gmra.mxu0 %v1839
    %v1850 = vpop.f32.mrf.mxu0
    %v1851 = vadd.f32 0.0, %v1850
    %v1852 = vpop.f32.mrf.mxu0
    %v1853 = vadd.f32 0.0, %v1852
    %1854 = vdwg.mxu0
    %v1857 = vunpack.c.l.b16 %v1667
    %v1858 = vunpack.c.l.b16 %v1668
    %v1859 = vpack.c.b16 %v1858, %v1857
    %v1862 = vunpack.c.l.b16 %v1683
    %v1863 = vunpack.c.l.b16 %v1684
    %v1864 = vpack.c.b16 %v1863, %v1862
    %v1867 = vsel %vm1478, %v1859, 0
    %1869 = vmatpush.bf16.msra.mxu0 0
    %1870 = vmatpush.bf16.msra.mxu0 0
    %1871 = vmatpush.bf16.msra.mxu0 0
    %1872 = vmatpush.bf16.msra.mxu0 0
    %1873 = vmatpush.bf16.msra.mxu0 0
    %1874 = vmatpush.bf16.msra.mxu0 0
    %1875 = vmatpush.bf16.msra.mxu0 0
    %1876 = vmatpush.bf16.msra.mxu0 %v1864
    %1877 = vmatmul.bf16.gmra.mxu0 %v1867
    %v1878 = vpop.f32.mrf.mxu0
    %v1879 = vadd.f32 0.0, %v1878
    %v1880 = vpop.f32.mrf.mxu0
    %v1881 = vadd.f32 0.0, %v1880
    %1882 = vdwg.mxu0
    %v1885 = vunpack.c.l.b16 %v1669
    %v1886 = vunpack.c.l.b16 %v1670
    %v1887 = vpack.c.b16 %v1886, %v1885
    %v1890 = vunpack.c.l.b16 %v1685
    %v1891 = vunpack.c.l.b16 %v1686
    %v1892 = vpack.c.b16 %v1891, %v1890
    %v1895 = vsel %vm1478, %v1887, 0
    %1897 = vmatpush.bf16.msra.mxu0 0
    %1898 = vmatpush.bf16.msra.mxu0 0
    %1899 = vmatpush.bf16.msra.mxu0 0
    %1900 = vmatpush.bf16.msra.mxu0 0
    %1901 = vmatpush.bf16.msra.mxu0 0
    %1902 = vmatpush.bf16.msra.mxu0 0
    %1903 = vmatpush.bf16.msra.mxu0 0
    %1904 = vmatpush.bf16.msra.mxu0 %v1892
    %1905 = vmatmul.bf16.gmra.mxu0 %v1895
    %v1906 = vpop.f32.mrf.mxu0
    %v1907 = vadd.f32 0.0, %v1906
    %v1908 = vpop.f32.mrf.mxu0
    %v1909 = vadd.f32 0.0, %v1908
    %1910 = vdwg.mxu0
    %1913 = vrot.lane.b32.xlu0 %v1739, 64
    %v1914 = vpop.permute.xlu0 %1913
    %1915 = vrot.lane.b32.xlu0 %v1741, 64
    %v1916 = vpop.permute.xlu0 %1915
    %1921 = vrot.lane.b32.xlu0 %v1795, 64
    %v1922 = vpop.permute.xlu0 %1921
    %1923 = vrot.lane.b32.xlu0 %v1797, 64
    %v1924 = vpop.permute.xlu0 %1923
    %v1927 = vsel %vm1247, %v1711, %v1914
    %v1928 = vsel %vm1247, %v1713, %v1916
    %v1929 = vsel %vm1247, %v1767, %v1922
    %v1930 = vsel %vm1247, %v1769, %v1924
    %1933 = vrot.lane.b32.xlu0 %v1851, 64
    %v1934 = vpop.permute.xlu0 %1933
    %1935 = vrot.lane.b32.xlu0 %v1853, 64
    %v1936 = vpop.permute.xlu0 %1935
    %1941 = vrot.lane.b32.xlu0 %v1907, 64
    %v1942 = vpop.permute.xlu0 %1941
    %1943 = vrot.lane.b32.xlu0 %v1909, 64
    %v1944 = vpop.permute.xlu0 %1943
    %v1947 = vsel %vm1247, %v1823, %v1934
    %v1948 = vsel %vm1247, %v1825, %v1936
    %v1949 = vsel %vm1247, %v1879, %v1942
    %v1950 = vsel %vm1247, %v1881, %v1944
    %v1951 = vpack.c.bf16 %v1928, %v1927
    %v1952 = vpack.c.bf16 %v1930, %v1929
    %v1953 = vpack.c.bf16 %v1948, %v1947
    %v1954 = vpack.c.bf16 %v1950, %v1949
    %v1955 = vld [vmem:[#allocation10] sm:$0xff]
    %v1956 = vld [vmem:[#allocation10 + $0x8] sm:$0xff]
    %v1957 = vld [vmem:[#allocation10 + $0x10] sm:$0xff]
    %v1958 = vld [vmem:[#allocation10 + $0x18] sm:$0xff]
    %v1959 = vld [vmem:[#allocation10 + $0x20] sm:$0xff]
    %v1960 = vld [vmem:[#allocation10 + $0x28] sm:$0xff]
    %v1961 = vld [vmem:[#allocation10 + $0x30] sm:$0xff]
    %v1962 = vld [vmem:[#allocation10 + $0x38] sm:$0xff]
    %v1963 = vld [vmem:[#allocation10 + $0x40] sm:$0xff]
    %v1964 = vld [vmem:[#allocation10 + $0x48] sm:$0xff]
    %v1965 = vld [vmem:[#allocation10 + $0x50] sm:$0xff]
    %v1966 = vld [vmem:[#allocation10 + $0x58] sm:$0xff]
    %v1967 = vld [vmem:[#allocation10 + $0x60] sm:$0xff]
    %v1968 = vld [vmem:[#allocation10 + $0x68] sm:$0xff]
    %v1969 = vld [vmem:[#allocation10 + $0x70] sm:$0xff]
    %v1970 = vld [vmem:[#allocation10 + $0x78] sm:$0xff]
    %v1971 = vld [vmem:[#allocation10 + $0x80] sm:$0xff]
    %v1972 = vld [vmem:[#allocation10 + $0x88] sm:$0xff]
    %v1973 = vld [vmem:[#allocation10 + $0x90] sm:$0xff]
    %v1974 = vld [vmem:[#allocation10 + $0x98] sm:$0xff]
    %v1975 = vld [vmem:[#allocation10 + $0xa0] sm:$0xff]
    %v1976 = vld [vmem:[#allocation10 + $0xa8] sm:$0xff]
    %v1977 = vld [vmem:[#allocation10 + $0xb0] sm:$0xff]
    %v1978 = vld [vmem:[#allocation10 + $0xb8] sm:$0xff]
    %v1979 = vld [vmem:[#allocation10 + $0xc0] sm:$0xff]
    %v1980 = vld [vmem:[#allocation10 + $0xc8] sm:$0xff]
    %v1981 = vld [vmem:[#allocation10 + $0xd0] sm:$0xff]
    %v1982 = vld [vmem:[#allocation10 + $0xd8] sm:$0xff]
    %v1983 = vld [vmem:[#allocation10 + $0xe0] sm:$0xff]
    %v1984 = vld [vmem:[#allocation10 + $0xe8] sm:$0xff]
    %v1985 = vld [vmem:[#allocation10 + $0xf0] sm:$0xff]
    %v1986 = vld [vmem:[#allocation10 + $0xf8] sm:$0xff]
    %v1987 = vld [vmem:[%s5] sm:$0x3]
    %v1989 = vperm.slane %v1987, 0
    %v1990 = vperm.slane %v1987, 1
    %v2025 = vunpack.c.l.b16 %v1955
    %v2026 = vunpack.c.h.b16 %v1955
    %v2027 = vunpack.c.l.b16 %v1956
    %v2028 = vunpack.c.h.b16 %v1956
    %v2029 = vunpack.c.l.b16 %v1957
    %v2030 = vunpack.c.h.b16 %v1957
    %v2031 = vunpack.c.l.b16 %v1958
    %v2032 = vunpack.c.h.b16 %v1958
    %v2033 = vunpack.c.l.b16 %v1959
    %v2034 = vunpack.c.h.b16 %v1959
    %v2035 = vunpack.c.l.b16 %v1960
    %v2036 = vunpack.c.h.b16 %v1960
    %v2037 = vunpack.c.l.b16 %v1961
    %v2038 = vunpack.c.h.b16 %v1961
    %v2039 = vunpack.c.l.b16 %v1962
    %v2040 = vunpack.c.h.b16 %v1962
    %v2041 = vunpack.c.l.b16 %v1963
    %v2042 = vunpack.c.h.b16 %v1963
    %v2043 = vunpack.c.l.b16 %v1964
    %v2044 = vunpack.c.h.b16 %v1964
    %v2045 = vunpack.c.l.b16 %v1965
    %v2046 = vunpack.c.h.b16 %v1965
    %v2047 = vunpack.c.l.b16 %v1966
    %v2048 = vunpack.c.h.b16 %v1966
    %v2049 = vunpack.c.l.b16 %v1967
    %v2050 = vunpack.c.h.b16 %v1967
    %v2051 = vunpack.c.l.b16 %v1968
    %v2052 = vunpack.c.h.b16 %v1968
    %v2053 = vunpack.c.l.b16 %v1969
    %v2054 = vunpack.c.h.b16 %v1969
    %v2055 = vunpack.c.l.b16 %v1970
    %v2056 = vunpack.c.h.b16 %v1970
    %v2057 = vunpack.c.l.b16 %v1971
    %v2058 = vunpack.c.h.b16 %v1971
    %v2059 = vunpack.c.l.b16 %v1972
    %v2060 = vunpack.c.h.b16 %v1972
    %v2061 = vunpack.c.l.b16 %v1973
    %v2062 = vunpack.c.h.b16 %v1973
    %v2063 = vunpack.c.l.b16 %v1974
    %v2064 = vunpack.c.h.b16 %v1974
    %v2065 = vunpack.c.l.b16 %v1975
    %v2066 = vunpack.c.h.b16 %v1975
    %v2067 = vunpack.c.l.b16 %v1976
    %v2068 = vunpack.c.h.b16 %v1976
    %v2069 = vunpack.c.l.b16 %v1977
    %v2070 = vunpack.c.h.b16 %v1977
    %v2071 = vunpack.c.l.b16 %v1978
    %v2072 = vunpack.c.h.b16 %v1978
    %v2073 = vunpack.c.l.b16 %v1979
    %v2074 = vunpack.c.h.b16 %v1979
    %v2075 = vunpack.c.l.b16 %v1980
    %v2076 = vunpack.c.h.b16 %v1980
    %v2077 = vunpack.c.l.b16 %v1981
    %v2078 = vunpack.c.h.b16 %v1981
    %v2079 = vunpack.c.l.b16 %v1982
    %v2080 = vunpack.c.h.b16 %v1982
    %v2081 = vunpack.c.l.b16 %v1983
    %v2082 = vunpack.c.h.b16 %v1983
    %v2083 = vunpack.c.l.b16 %v1984
    %v2084 = vunpack.c.h.b16 %v1984
    %v2085 = vunpack.c.l.b16 %v1985
    %v2086 = vunpack.c.h.b16 %v1985
    %v2087 = vunpack.c.l.b16 %v1986
    %v2088 = vunpack.c.h.b16 %v1986
    %v2089 = vpack.c.b16 %v2027, %v2025
    %v2090 = vpack.c.b16 %v2028, %v2026
    %v2091 = vpack.c.b16 %v2031, %v2029
    %v2092 = vpack.c.b16 %v2032, %v2030
    %v2093 = vpack.c.b16 %v2035, %v2033
    %v2094 = vpack.c.b16 %v2036, %v2034
    %v2095 = vpack.c.b16 %v2039, %v2037
    %v2096 = vpack.c.b16 %v2040, %v2038
    %v2097 = vpack.c.b16 %v2043, %v2041
    %v2098 = vpack.c.b16 %v2044, %v2042
    %v2099 = vpack.c.b16 %v2047, %v2045
    %v2100 = vpack.c.b16 %v2048, %v2046
    %v2101 = vpack.c.b16 %v2051, %v2049
    %v2102 = vpack.c.b16 %v2052, %v2050
    %v2103 = vpack.c.b16 %v2055, %v2053
    %v2104 = vpack.c.b16 %v2056, %v2054
    %v2105 = vpack.c.b16 %v2059, %v2057
    %v2106 = vpack.c.b16 %v2060, %v2058
    %v2107 = vpack.c.b16 %v2063, %v2061
    %v2108 = vpack.c.b16 %v2064, %v2062
    %v2109 = vpack.c.b16 %v2067, %v2065
    %v2110 = vpack.c.b16 %v2068, %v2066
    %v2111 = vpack.c.b16 %v2071, %v2069
    %v2112 = vpack.c.b16 %v2072, %v2070
    %v2113 = vpack.c.b16 %v2075, %v2073
    %v2114 = vpack.c.b16 %v2076, %v2074
    %v2115 = vpack.c.b16 %v2079, %v2077
    %v2116 = vpack.c.b16 %v2080, %v2078
    %v2117 = vpack.c.b16 %v2083, %v2081
    %v2118 = vpack.c.b16 %v2084, %v2082
    %v2119 = vpack.c.b16 %v2087, %v2085
    %v2120 = vpack.c.b16 %v2088, %v2086
    %2153 = vmatpush.bf16.msra.mxu0 %v2103
    %2154 = vmatpush.bf16.msra.mxu0 %v2101
    %2155 = vmatpush.bf16.msra.mxu0 %v2099
    %2156 = vmatpush.bf16.msra.mxu0 %v2097
    %2157 = vmatpush.bf16.msra.mxu0 %v2095
    %2158 = vmatpush.bf16.msra.mxu0 %v2093
    %2159 = vmatpush.bf16.msra.mxu0 %v2091
    %2160 = vmatpush.bf16.msra.mxu0 %v2089
    %2161 = vmatmul.bf16.gmra.mxu0 %v1951
    %v2162 = vpop.f32.mrf.mxu0
    %v2163 = vadd.f32 %v1989, %v2162
    %v2164 = vpop.f32.mrf.mxu0
    %v2165 = vadd.f32 %v1989, %v2164
    %2166 = vmatmul.bf16.gmra.mxu0 %v1953
    %v2167 = vpop.f32.mrf.mxu0
    %v2168 = vadd.f32 %v1989, %v2167
    %v2169 = vpop.f32.mrf.mxu0
    %v2170 = vadd.f32 %v1989, %v2169
    %2171 = vdwg.mxu0
    %2172 = vmatpush.bf16.msra.mxu0 %v2119
    %2173 = vmatpush.bf16.msra.mxu0 %v2117
    %2174 = vmatpush.bf16.msra.mxu0 %v2115
    %2175 = vmatpush.bf16.msra.mxu0 %v2113
    %2176 = vmatpush.bf16.msra.mxu0 %v2111
    %2177 = vmatpush.bf16.msra.mxu0 %v2109
    %2178 = vmatpush.bf16.msra.mxu0 %v2107
    %2179 = vmatpush.bf16.msra.mxu0 %v2105
    %2180 = vmatmul.bf16.gmra.mxu0 %v1952
    %v2181 = vpop.f32.mrf.mxu0
    %v2182 = vadd.f32 %v2163, %v2181
    %v2183 = vpop.f32.mrf.mxu0
    %v2184 = vadd.f32 %v2165, %v2183
    %2185 = vmatmul.bf16.gmra.mxu0 %v1954
    %v2186 = vpop.f32.mrf.mxu0
    %v2187 = vadd.f32 %v2168, %v2186
    %v2188 = vpop.f32.mrf.mxu0
    %v2189 = vadd.f32 %v2170, %v2188
    %2190 = vdwg.mxu0
    %2191 = vmatpush.bf16.msra.mxu0 %v2104
    %2192 = vmatpush.bf16.msra.mxu0 %v2102
    %2193 = vmatpush.bf16.msra.mxu0 %v2100
    %2194 = vmatpush.bf16.msra.mxu0 %v2098
    %2195 = vmatpush.bf16.msra.mxu0 %v2096
    %2196 = vmatpush.bf16.msra.mxu0 %v2094
    %2197 = vmatpush.bf16.msra.mxu0 %v2092
    %2198 = vmatpush.bf16.msra.mxu0 %v2090
    %2199 = vmatmul.bf16.gmra.mxu0 %v1951
    %v2200 = vpop.f32.mrf.mxu0
    %v2201 = vadd.f32 %v1990, %v2200
    %v2202 = vpop.f32.mrf.mxu0
    %v2203 = vadd.f32 %v1990, %v2202
    %2204 = vmatmul.bf16.gmra.mxu0 %v1953
    %v2205 = vpop.f32.mrf.mxu0
    %v2206 = vadd.f32 %v1990, %v2205
    %v2207 = vpop.f32.mrf.mxu0
    %v2208 = vadd.f32 %v1990, %v2207
    %2209 = vdwg.mxu0
    %2210 = vmatpush.bf16.msra.mxu0 %v2120
    %2211 = vmatpush.bf16.msra.mxu0 %v2118
    %2212 = vmatpush.bf16.msra.mxu0 %v2116
    %2213 = vmatpush.bf16.msra.mxu0 %v2114
    %2214 = vmatpush.bf16.msra.mxu0 %v2112
    %2215 = vmatpush.bf16.msra.mxu0 %v2110
    %2216 = vmatpush.bf16.msra.mxu0 %v2108
    %2217 = vmatpush.bf16.msra.mxu0 %v2106
    %2218 = vmatmul.bf16.gmra.mxu0 %v1952
    %v2219 = vpop.f32.mrf.mxu0
    %v2220 = vadd.f32 %v2201, %v2219
    %v2221 = vpop.f32.mrf.mxu0
    %v2222 = vadd.f32 %v2203, %v2221
    %2223 = vmatmul.bf16.gmra.mxu0 %v1954
    %v2224 = vpop.f32.mrf.mxu0
    %v2225 = vadd.f32 %v2206, %v2224
    %v2226 = vpop.f32.mrf.mxu0
    %v2227 = vadd.f32 %v2208, %v2226
    %2228 = vdwg.mxu0
    %v2229 = vadd.f32 %v142, %v2182
    %v2230 = vadd.f32 %v143, %v2220
    %v2231 = vadd.f32 %v144, %v2184
    %v2232 = vadd.f32 %v145, %v2222
    %v2233 = vadd.f32 %v146, %v2187
    %v2234 = vadd.f32 %v147, %v2225
    %v2235 = vadd.f32 %v148, %v2189
    %v2236 = vadd.f32 %v149, %v2227
    %v2237 = vadd.f32 %v2229, %v2230
    %2238 = vadd.xlane.f32.xlu0 %v2237
    %v2239 = vpop.xlane.xlu0 %2238
    %v2240 = vadd.f32 %v2231, %v2232
    %2241 = vadd.xlane.f32.xlu0 %v2240
    %v2242 = vpop.xlane.xlu0 %2241
    %v2243 = vadd.f32 %v2233, %v2234
    %2244 = vadd.xlane.f32.xlu0 %v2243
    %v2245 = vpop.xlane.xlu0 %2244
    %v2246 = vadd.f32 %v2235, %v2236
    %2247 = vadd.xlane.f32.xlu0 %v2246
    %v2248 = vpop.xlane.xlu0 %2247
    %v2249 = vmul.f32 %v2239, %v169
    %v2250 = vmul.f32 %v2242, %v169
    %v2251 = vmul.f32 %v2245, %v169
    %v2252 = vmul.f32 %v2248, %v169
    %v2253 = vsub.f32 %v2229, %v2249
    %v2254 = vsub.f32 %v2230, %v2249
    %v2255 = vsub.f32 %v2231, %v2250
    %v2256 = vsub.f32 %v2232, %v2250
    %v2257 = vsub.f32 %v2233, %v2251
    %v2258 = vsub.f32 %v2234, %v2251
    %v2259 = vsub.f32 %v2235, %v2252
    %v2260 = vsub.f32 %v2236, %v2252
    %v2261 = vmul.f32 %v2253, %v2253
    %v2262 = vmul.f32 %v2254, %v2254
    %v2263 = vmul.f32 %v2255, %v2255
    %v2264 = vmul.f32 %v2256, %v2256
    %v2265 = vmul.f32 %v2257, %v2257
    %v2266 = vmul.f32 %v2258, %v2258
    %v2267 = vmul.f32 %v2259, %v2259
    %v2268 = vmul.f32 %v2260, %v2260
    %v2269 = vadd.f32 %v2261, %v2262
    %2270 = vadd.xlane.f32.xlu0 %v2269
    %v2271 = vpop.xlane.xlu0 %2270
    %v2272 = vadd.f32 %v2263, %v2264
    %2273 = vadd.xlane.f32.xlu0 %v2272
    %v2274 = vpop.xlane.xlu0 %2273
    %v2275 = vadd.f32 %v2265, %v2266
    %2276 = vadd.xlane.f32.xlu0 %v2275
    %v2277 = vpop.xlane.xlu0 %2276
    %v2278 = vadd.f32 %v2267, %v2268
    %2279 = vadd.xlane.f32.xlu0 %v2278
    %v2280 = vpop.xlane.xlu0 %2279
    %v2281 = vmul.f32 %v2271, %v169
    %v2282 = vmul.f32 %v2274, %v169
    %v2283 = vmul.f32 %v2277, %v169
    %v2284 = vmul.f32 %v2280, %v169
    %v2285 = vadd.f32 %v2281, 1e-06
    %v2286 = vadd.f32 %v2282, 1e-06
    %v2287 = vadd.f32 %v2283, 1e-06
    %v2288 = vadd.f32 %v2284, 1e-06
    %v2289 = vrsqrt.pop %v2285
    %v2290 = vmul.f32 %v2289, %v2285
    %v2291 = vmul.f32 %v2290, %v2289
    %v2292 = vmul.f32 0.5, %v2291
    %v2293 = vsub.f32 1.5, %v2292
    %v2294 = vmul.f32 %v2289, %v2293
    %vm2295 = vweird.f32 %v2285
    %vm2296 = vweird.f32 %v2289
    %vm2297 = vmor %vm2295, %vm2296
    %v2298 = vsel %vm2297, %v2289, %v2294
    %v2299 = vrsqrt.pop %v2286
    %v2300 = vmul.f32 %v2299, %v2286
    %v2301 = vmul.f32 %v2300, %v2299
    %v2302 = vmul.f32 0.5, %v2301
    %v2303 = vsub.f32 1.5, %v2302
    %v2304 = vmul.f32 %v2299, %v2303
    %vm2305 = vweird.f32 %v2286
    %vm2306 = vweird.f32 %v2299
    %vm2307 = vmor %vm2305, %vm2306
    %v2308 = vsel %vm2307, %v2299, %v2304
    %v2309 = vrsqrt.pop %v2287
    %v2310 = vmul.f32 %v2309, %v2287
    %v2311 = vmul.f32 %v2310, %v2309
    %v2312 = vmul.f32 0.5, %v2311
    %v2313 = vsub.f32 1.5, %v2312
    %v2314 = vmul.f32 %v2309, %v2313
    %vm2315 = vweird.f32 %v2287
    %vm2316 = vweird.f32 %v2309
    %vm2317 = vmor %vm2315, %vm2316
    %v2318 = vsel %vm2317, %v2309, %v2314
    %v2319 = vrsqrt.pop %v2288
    %v2320 = vmul.f32 %v2319, %v2288
    %v2321 = vmul.f32 %v2320, %v2319
    %v2322 = vmul.f32 0.5, %v2321
    %v2323 = vsub.f32 1.5, %v2322
    %v2324 = vmul.f32 %v2319, %v2323
    %vm2325 = vweird.f32 %v2288
    %vm2326 = vweird.f32 %v2319
    %vm2327 = vmor %vm2325, %vm2326
    %v2328 = vsel %vm2327, %v2319, %v2324
    %v2329 = vmul.f32 %v2253, %v2298
    %v2330 = vmul.f32 %v2254, %v2298
    %v2331 = vmul.f32 %v2255, %v2308
    %v2332 = vmul.f32 %v2256, %v2308
    %v2333 = vmul.f32 %v2257, %v2318
    %v2334 = vmul.f32 %v2258, %v2318
    %v2335 = vmul.f32 %v2259, %v2328
    %v2336 = vmul.f32 %v2260, %v2328
    %v2337 = vperm.slane %v150, 2
    %v2338 = vperm.slane %v150, 6
    %v2341 = vperm.slane %v2337, 2
    %v2342 = vperm.slane %v2338, 2
    %v2343 = vmul.f32 %v2329, %v2341
    %v2344 = vmul.f32 %v2330, %v2342
    %v2345 = vmul.f32 %v2331, %v2341
    %v2346 = vmul.f32 %v2332, %v2342
    %v2347 = vmul.f32 %v2333, %v2341
    %v2348 = vmul.f32 %v2334, %v2342
    %v2349 = vmul.f32 %v2335, %v2341
    %v2350 = vmul.f32 %v2336, %v2342
    %v2351 = vperm.slane %v150, 3
    %v2352 = vperm.slane %v150, 7
    %v2355 = vperm.slane %v2351, 3
    %v2356 = vperm.slane %v2352, 3
    %v2357 = vadd.f32 %v2343, %v2355
    %v2358 = vadd.f32 %v2344, %v2356
    %v2359 = vadd.f32 %v2345, %v2355
    %v2360 = vadd.f32 %v2346, %v2356
    %v2361 = vadd.f32 %v2347, %v2355
    %v2362 = vadd.f32 %v2348, %v2356
    %v2363 = vadd.f32 %v2349, %v2355
    %v2364 = vadd.f32 %v2350, %v2356
    %v2365 = vpack.c.bf16 %v2359, %v2357
    %v2366 = vpack.c.bf16 %v2360, %v2358
    %v2367 = vpack.c.bf16 %v2363, %v2361
    %v2368 = vpack.c.bf16 %v2364, %v2362
    %v2369 = vld [vmem:[#allocation11] sm:$0xff]
    %v2370 = vld [vmem:[#allocation11 + $0x8] sm:$0xff]
    %v2371 = vld [vmem:[#allocation11 + $0x10] sm:$0xff]
    %v2372 = vld [vmem:[#allocation11 + $0x18] sm:$0xff]
    %v2373 = vld [vmem:[#allocation11 + $0x20] sm:$0xff]
    %v2374 = vld [vmem:[#allocation11 + $0x28] sm:$0xff]
    %v2375 = vld [vmem:[#allocation11 + $0x30] sm:$0xff]
    %v2376 = vld [vmem:[#allocation11 + $0x38] sm:$0xff]
    %v2377 = vld [vmem:[#allocation11 + $0x40] sm:$0xff]
    %v2378 = vld [vmem:[#allocation11 + $0x48] sm:$0xff]
    %v2379 = vld [vmem:[#allocation11 + $0x50] sm:$0xff]
    %v2380 = vld [vmem:[#allocation11 + $0x58] sm:$0xff]
    %v2381 = vld [vmem:[#allocation11 + $0x60] sm:$0xff]
    %v2382 = vld [vmem:[#allocation11 + $0x68] sm:$0xff]
    %v2383 = vld [vmem:[#allocation11 + $0x70] sm:$0xff]
    %v2384 = vld [vmem:[#allocation11 + $0x78] sm:$0xff]
    %v2385 = vld [vmem:[#allocation11 + $0x80] sm:$0xff]
    %v2386 = vld [vmem:[#allocation11 + $0x88] sm:$0xff]
    %v2387 = vld [vmem:[#allocation11 + $0x90] sm:$0xff]
    %v2388 = vld [vmem:[#allocation11 + $0x98] sm:$0xff]
    %v2389 = vld [vmem:[#allocation11 + $0xa0] sm:$0xff]
    %v2390 = vld [vmem:[#allocation11 + $0xa8] sm:$0xff]
    %v2391 = vld [vmem:[#allocation11 + $0xb0] sm:$0xff]
    %v2392 = vld [vmem:[#allocation11 + $0xb8] sm:$0xff]
    %v2393 = vld [vmem:[#allocation11 + $0xc0] sm:$0xff]
    %v2394 = vld [vmem:[#allocation11 + $0xc8] sm:$0xff]
    %v2395 = vld [vmem:[#allocation11 + $0xd0] sm:$0xff]
    %v2396 = vld [vmem:[#allocation11 + $0xd8] sm:$0xff]
    %v2397 = vld [vmem:[#allocation11 + $0xe0] sm:$0xff]
    %v2398 = vld [vmem:[#allocation11 + $0xe8] sm:$0xff]
    %v2399 = vld [vmem:[#allocation11 + $0xf0] sm:$0xff]
    %v2400 = vld [vmem:[#allocation11 + $0xf8] sm:$0xff]
    %v2401 = vld [vmem:[#allocation11 + $0x100] sm:$0xff]
    %v2402 = vld [vmem:[#allocation11 + $0x108] sm:$0xff]
    %v2403 = vld [vmem:[#allocation11 + $0x110] sm:$0xff]
    %v2404 = vld [vmem:[#allocation11 + $0x118] sm:$0xff]
    %v2405 = vld [vmem:[#allocation11 + $0x120] sm:$0xff]
    %v2406 = vld [vmem:[#allocation11 + $0x128] sm:$0xff]
    %v2407 = vld [vmem:[#allocation11 + $0x130] sm:$0xff]
    %v2408 = vld [vmem:[#allocation11 + $0x138] sm:$0xff]
    %v2409 = vld [vmem:[#allocation11 + $0x140] sm:$0xff]
    %v2410 = vld [vmem:[#allocation11 + $0x148] sm:$0xff]
    %v2411 = vld [vmem:[#allocation11 + $0x150] sm:$0xff]
    %v2412 = vld [vmem:[#allocation11 + $0x158] sm:$0xff]
    %v2413 = vld [vmem:[#allocation11 + $0x160] sm:$0xff]
    %v2414 = vld [vmem:[#allocation11 + $0x168] sm:$0xff]
    %v2415 = vld [vmem:[#allocation11 + $0x170] sm:$0xff]
    %v2416 = vld [vmem:[#allocation11 + $0x178] sm:$0xff]
    %v2417 = vld [vmem:[#allocation11 + $0x180] sm:$0xff]
    %v2418 = vld [vmem:[#allocation11 + $0x188] sm:$0xff]
    %v2419 = vld [vmem:[#allocation11 + $0x190] sm:$0xff]
    %v2420 = vld [vmem:[#allocation11 + $0x198] sm:$0xff]
    %v2421 = vld [vmem:[#allocation11 + $0x1a0] sm:$0xff]
    %v2422 = vld [vmem:[#allocation11 + $0x1a8] sm:$0xff]
    %v2423 = vld [vmem:[#allocation11 + $0x1b0] sm:$0xff]
    %v2424 = vld [vmem:[#allocation11 + $0x1b8] sm:$0xff]
    %v2425 = vld [vmem:[#allocation11 + $0x1c0] sm:$0xff]
    %v2426 = vld [vmem:[#allocation11 + $0x1c8] sm:$0xff]
    %v2427 = vld [vmem:[#allocation11 + $0x1d0] sm:$0xff]
    %v2428 = vld [vmem:[#allocation11 + $0x1d8] sm:$0xff]
    %v2429 = vld [vmem:[#allocation11 + $0x1e0] sm:$0xff]
    %v2430 = vld [vmem:[#allocation11 + $0x1e8] sm:$0xff]
    %v2431 = vld [vmem:[#allocation11 + $0x1f0] sm:$0xff]
    %v2432 = vld [vmem:[#allocation11 + $0x1f8] sm:$0xff]
    %v2433 = vld [vmem:[%s7] sm:$0xf]
    %v2435 = vperm.slane %v2433, 0
    %v2436 = vperm.slane %v2433, 1
    %v2437 = vperm.slane %v2433, 2
    %v2438 = vperm.slane %v2433, 3
    %v2507 = vunpack.c.l.b16 %v2369
    %v2508 = vunpack.c.h.b16 %v2369
    %v2509 = vunpack.c.l.b16 %v2370
    %v2510 = vunpack.c.h.b16 %v2370
    %v2511 = vunpack.c.l.b16 %v2371
    %v2512 = vunpack.c.h.b16 %v2371
    %v2513 = vunpack.c.l.b16 %v2372
    %v2514 = vunpack.c.h.b16 %v2372
    %v2515 = vunpack.c.l.b16 %v2373
    %v2516 = vunpack.c.h.b16 %v2373
    %v2517 = vunpack.c.l.b16 %v2374
    %v2518 = vunpack.c.h.b16 %v2374
    %v2519 = vunpack.c.l.b16 %v2375
    %v2520 = vunpack.c.h.b16 %v2375
    %v2521 = vunpack.c.l.b16 %v2376
    %v2522 = vunpack.c.h.b16 %v2376
    %v2523 = vunpack.c.l.b16 %v2377
    %v2524 = vunpack.c.h.b16 %v2377
    %v2525 = vunpack.c.l.b16 %v2378
    %v2526 = vunpack.c.h.b16 %v2378
    %v2527 = vunpack.c.l.b16 %v2379
    %v2528 = vunpack.c.h.b16 %v2379
    %v2529 = vunpack.c.l.b16 %v2380
    %v2530 = vunpack.c.h.b16 %v2380
    %v2531 = vunpack.c.l.b16 %v2381
    %v2532 = vunpack.c.h.b16 %v2381
    %v2533 = vunpack.c.l.b16 %v2382
    %v2534 = vunpack.c.h.b16 %v2382
    %v2535 = vunpack.c.l.b16 %v2383
    %v2536 = vunpack.c.h.b16 %v2383
    %v2537 = vunpack.c.l.b16 %v2384
    %v2538 = vunpack.c.h.b16 %v2384
    %v2539 = vunpack.c.l.b16 %v2385
    %v2540 = vunpack.c.h.b16 %v2385
    %v2541 = vunpack.c.l.b16 %v2386
    %v2542 = vunpack.c.h.b16 %v2386
    %v2543 = vunpack.c.l.b16 %v2387
    %v2544 = vunpack.c.h.b16 %v2387
    %v2545 = vunpack.c.l.b16 %v2388
    %v2546 = vunpack.c.h.b16 %v2388
    %v2547 = vunpack.c.l.b16 %v2389
    %v2548 = vunpack.c.h.b16 %v2389
    %v2549 = vunpack.c.l.b16 %v2390
    %v2550 = vunpack.c.h.b16 %v2390
    %v2551 = vunpack.c.l.b16 %v2391
    %v2552 = vunpack.c.h.b16 %v2391
    %v2553 = vunpack.c.l.b16 %v2392
    %v2554 = vunpack.c.h.b16 %v2392
    %v2555 = vunpack.c.l.b16 %v2393
    %v2556 = vunpack.c.h.b16 %v2393
    %v2557 = vunpack.c.l.b16 %v2394
    %v2558 = vunpack.c.h.b16 %v2394
    %v2559 = vunpack.c.l.b16 %v2395
    %v2560 = vunpack.c.h.b16 %v2395
    %v2561 = vunpack.c.l.b16 %v2396
    %v2562 = vunpack.c.h.b16 %v2396
    %v2563 = vunpack.c.l.b16 %v2397
    %v2564 = vunpack.c.h.b16 %v2397
    %v2565 = vunpack.c.l.b16 %v2398
    %v2566 = vunpack.c.h.b16 %v2398
    %v2567 = vunpack.c.l.b16 %v2399
    %v2568 = vunpack.c.h.b16 %v2399
    %v2569 = vunpack.c.l.b16 %v2400
    %v2570 = vunpack.c.h.b16 %v2400
    %v2571 = vunpack.c.l.b16 %v2401
    %v2572 = vunpack.c.h.b16 %v2401
    %v2573 = vunpack.c.l.b16 %v2402
    %v2574 = vunpack.c.h.b16 %v2402
    %v2575 = vunpack.c.l.b16 %v2403
    %v2576 = vunpack.c.h.b16 %v2403
    %v2577 = vunpack.c.l.b16 %v2404
    %v2578 = vunpack.c.h.b16 %v2404
    %v2579 = vunpack.c.l.b16 %v2405
    %v2580 = vunpack.c.h.b16 %v2405
    %v2581 = vunpack.c.l.b16 %v2406
    %v2582 = vunpack.c.h.b16 %v2406
    %v2583 = vunpack.c.l.b16 %v2407
    %v2584 = vunpack.c.h.b16 %v2407
    %v2585 = vunpack.c.l.b16 %v2408
    %v2586 = vunpack.c.h.b16 %v2408
    %v2587 = vunpack.c.l.b16 %v2409
    %v2588 = vunpack.c.h.b16 %v2409
    %v2589 = vunpack.c.l.b16 %v2410
    %v2590 = vunpack.c.h.b16 %v2410
    %v2591 = vunpack.c.l.b16 %v2411
    %v2592 = vunpack.c.h.b16 %v2411
    %v2593 = vunpack.c.l.b16 %v2412
    %v2594 = vunpack.c.h.b16 %v2412
    %v2595 = vunpack.c.l.b16 %v2413
    %v2596 = vunpack.c.h.b16 %v2413
    %v2597 = vunpack.c.l.b16 %v2414
    %v2598 = vunpack.c.h.b16 %v2414
    %v2599 = vunpack.c.l.b16 %v2415
    %v2600 = vunpack.c.h.b16 %v2415
    %v2601 = vunpack.c.l.b16 %v2416
    %v2602 = vunpack.c.h.b16 %v2416
    %v2603 = vunpack.c.l.b16 %v2417
    %v2604 = vunpack.c.h.b16 %v2417
    %v2605 = vunpack.c.l.b16 %v2418
    %v2606 = vunpack.c.h.b16 %v2418
    %v2607 = vunpack.c.l.b16 %v2419
    %v2608 = vunpack.c.h.b16 %v2419
    %v2609 = vunpack.c.l.b16 %v2420
    %v2610 = vunpack.c.h.b16 %v2420
    %v2611 = vunpack.c.l.b16 %v2421
    %v2612 = vunpack.c.h.b16 %v2421
    %v2613 = vunpack.c.l.b16 %v2422
    %v2614 = vunpack.c.h.b16 %v2422
    %v2615 = vunpack.c.l.b16 %v2423
    %v2616 = vunpack.c.h.b16 %v2423
    %v2617 = vunpack.c.l.b16 %v2424
    %v2618 = vunpack.c.h.b16 %v2424
    %v2619 = vunpack.c.l.b16 %v2425
    %v2620 = vunpack.c.h.b16 %v2425
    %v2621 = vunpack.c.l.b16 %v2426
    %v2622 = vunpack.c.h.b16 %v2426
    %v2623 = vunpack.c.l.b16 %v2427
    %v2624 = vunpack.c.h.b16 %v2427
    %v2625 = vunpack.c.l.b16 %v2428
    %v2626 = vunpack.c.h.b16 %v2428
    %v2627 = vunpack.c.l.b16 %v2429
    %v2628 = vunpack.c.h.b16 %v2429
    %v2629 = vunpack.c.l.b16 %v2430
    %v2630 = vunpack.c.h.b16 %v2430
    %v2631 = vunpack.c.l.b16 %v2431
    %v2632 = vunpack.c.h.b16 %v2431
    %v2633 = vunpack.c.l.b16 %v2432
    %v2634 = vunpack.c.h.b16 %v2432
    %v2635 = vpack.c.b16 %v2511, %v2507
    %v2636 = vpack.c.b16 %v2512, %v2508
    %v2637 = vpack.c.b16 %v2513, %v2509
    %v2638 = vpack.c.b16 %v2514, %v2510
    %v2639 = vpack.c.b16 %v2519, %v2515
    %v2640 = vpack.c.b16 %v2520, %v2516
    %v2641 = vpack.c.b16 %v2521, %v2517
    %v2642 = vpack.c.b16 %v2522, %v2518
    %v2643 = vpack.c.b16 %v2527, %v2523
    %v2644 = vpack.c.b16 %v2528, %v2524
    %v2645 = vpack.c.b16 %v2529, %v2525
    %v2646 = vpack.c.b16 %v2530, %v2526
    %v2647 = vpack.c.b16 %v2535, %v2531
    %v2648 = vpack.c.b16 %v2536, %v2532
    %v2649 = vpack.c.b16 %v2537, %v2533
    %v2650 = vpack.c.b16 %v2538, %v2534
    %v2651 = vpack.c.b16 %v2543, %v2539
    %v2652 = vpack.c.b16 %v2544, %v2540
    %v2653 = vpack.c.b16 %v2545, %v2541
    %v2654 = vpack.c.b16 %v2546, %v2542
    %v2655 = vpack.c.b16 %v2551, %v2547
    %v2656 = vpack.c.b16 %v2552, %v2548
    %v2657 = vpack.c.b16 %v2553, %v2549
    %v2658 = vpack.c.b16 %v2554, %v2550
    %v2659 = vpack.c.b16 %v2559, %v2555
    %v2660 = vpack.c.b16 %v2560, %v2556
    %v2661 = vpack.c.b16 %v2561, %v2557
    %v2662 = vpack.c.b16 %v2562, %v2558
    %v2663 = vpack.c.b16 %v2567, %v2563
    %v2664 = vpack.c.b16 %v2568, %v2564
    %v2665 = vpack.c.b16 %v2569, %v2565
    %v2666 = vpack.c.b16 %v2570, %v2566
    %v2667 = vpack.c.b16 %v2575, %v2571
    %v2668 = vpack.c.b16 %v2576, %v2572
    %v2669 = vpack.c.b16 %v2577, %v2573
    %v2670 = vpack.c.b16 %v2578, %v2574
    %v2671 = vpack.c.b16 %v2583, %v2579
    %v2672 = vpack.c.b16 %v2584, %v2580
    %v2673 = vpack.c.b16 %v2585, %v2581
    %v2674 = vpack.c.b16 %v2586, %v2582
    %v2675 = vpack.c.b16 %v2591, %v2587
    %v2676 = vpack.c.b16 %v2592, %v2588
    %v2677 = vpack.c.b16 %v2593, %v2589
    %v2678 = vpack.c.b16 %v2594, %v2590
    %v2679 = vpack.c.b16 %v2599, %v2595
    %v2680 = vpack.c.b16 %v2600, %v2596
    %v2681 = vpack.c.b16 %v2601, %v2597
    %v2682 = vpack.c.b16 %v2602, %v2598
    %v2683 = vpack.c.b16 %v2607, %v2603
    %v2684 = vpack.c.b16 %v2608, %v2604
    %v2685 = vpack.c.b16 %v2609, %v2605
    %v2686 = vpack.c.b16 %v2610, %v2606
    %v2687 = vpack.c.b16 %v2615, %v2611
    %v2688 = vpack.c.b16 %v2616, %v2612
    %v2689 = vpack.c.b16 %v2617, %v2613
    %v2690 = vpack.c.b16 %v2618, %v2614
    %v2691 = vpack.c.b16 %v2623, %v2619
    %v2692 = vpack.c.b16 %v2624, %v2620
    %v2693 = vpack.c.b16 %v2625, %v2621
    %v2694 = vpack.c.b16 %v2626, %v2622
    %v2695 = vpack.c.b16 %v2631, %v2627
    %v2696 = vpack.c.b16 %v2632, %v2628
    %v2697 = vpack.c.b16 %v2633, %v2629
    %v2698 = vpack.c.b16 %v2634, %v2630
    %2763 = vmatpush.bf16.msra.mxu0 %v2663
    %2764 = vmatpush.bf16.msra.mxu0 %v2659
    %2765 = vmatpush.bf16.msra.mxu0 %v2655
    %2766 = vmatpush.bf16.msra.mxu0 %v2651
    %2767 = vmatpush.bf16.msra.mxu0 %v2647
    %2768 = vmatpush.bf16.msra.mxu0 %v2643
    %2769 = vmatpush.bf16.msra.mxu0 %v2639
    %2770 = vmatpush.bf16.msra.mxu0 %v2635
    %2771 = vmatmul.bf16.gmra.mxu0 %v2365
    %v2772 = vpop.f32.mrf.mxu0
    %v2773 = vadd.f32 %v2435, %v2772
    %v2774 = vpop.f32.mrf.mxu0
    %v2775 = vadd.f32 %v2435, %v2774
    %2776 = vmatmul.bf16.gmra.mxu0 %v2367
    %v2777 = vpop.f32.mrf.mxu0
    %v2778 = vadd.f32 %v2435, %v2777
    %v2779 = vpop.f32.mrf.mxu0
    %v2780 = vadd.f32 %v2435, %v2779
    %2781 = vdwg.mxu0
    %2782 = vmatpush.bf16.msra.mxu0 %v2695
    %2783 = vmatpush.bf16.msra.mxu0 %v2691
    %2784 = vmatpush.bf16.msra.mxu0 %v2687
    %2785 = vmatpush.bf16.msra.mxu0 %v2683
    %2786 = vmatpush.bf16.msra.mxu0 %v2679
    %2787 = vmatpush.bf16.msra.mxu0 %v2675
    %2788 = vmatpush.bf16.msra.mxu0 %v2671
    %2789 = vmatpush.bf16.msra.mxu0 %v2667
    %2790 = vmatmul.bf16.gmra.mxu0 %v2366
    %v2791 = vpop.f32.mrf.mxu0
    %v2792 = vadd.f32 %v2773, %v2791
    %v2793 = vpop.f32.mrf.mxu0
    %v2794 = vadd.f32 %v2775, %v2793
    %2795 = vmatmul.bf16.gmra.mxu0 %v2368
    %v2796 = vpop.f32.mrf.mxu0
    %v2797 = vadd.f32 %v2778, %v2796
    %v2798 = vpop.f32.mrf.mxu0
    %v2799 = vadd.f32 %v2780, %v2798
    %2800 = vdwg.mxu0
    %2801 = vmatpush.bf16.msra.mxu0 %v2664
    %2802 = vmatpush.bf16.msra.mxu0 %v2660
    %2803 = vmatpush.bf16.msra.mxu0 %v2656
    %2804 = vmatpush.bf16.msra.mxu0 %v2652
    %2805 = vmatpush.bf16.msra.mxu0 %v2648
    %2806 = vmatpush.bf16.msra.mxu0 %v2644
    %2807 = vmatpush.bf16.msra.mxu0 %v2640
    %2808 = vmatpush.bf16.msra.mxu0 %v2636
    %2809 = vmatmul.bf16.gmra.mxu0 %v2365
    %v2810 = vpop.f32.mrf.mxu0
    %v2811 = vadd.f32 %v2436, %v2810
    %v2812 = vpop.f32.mrf.mxu0
    %v2813 = vadd.f32 %v2436, %v2812
    %2814 = vmatmul.bf16.gmra.mxu0 %v2367
    %v2815 = vpop.f32.mrf.mxu0
    %v2816 = vadd.f32 %v2436, %v2815
    %v2817 = vpop.f32.mrf.mxu0
    %v2818 = vadd.f32 %v2436, %v2817
    %2819 = vdwg.mxu0
    %2820 = vmatpush.bf16.msra.mxu0 %v2696
    %2821 = vmatpush.bf16.msra.mxu0 %v2692
    %2822 = vmatpush.bf16.msra.mxu0 %v2688
    %2823 = vmatpush.bf16.msra.mxu0 %v2684
    %2824 = vmatpush.bf16.msra.mxu0 %v2680
    %2825 = vmatpush.bf16.msra.mxu0 %v2676
    %2826 = vmatpush.bf16.msra.mxu0 %v2672
    %2827 = vmatpush.bf16.msra.mxu0 %v2668
    %2828 = vmatmul.bf16.gmra.mxu0 %v2366
    %v2829 = vpop.f32.mrf.mxu0
    %v2830 = vadd.f32 %v2811, %v2829
    %v2831 = vpop.f32.mrf.mxu0
    %v2832 = vadd.f32 %v2813, %v2831
    %2833 = vmatmul.bf16.gmra.mxu0 %v2368
    %v2834 = vpop.f32.mrf.mxu0
    %v2835 = vadd.f32 %v2816, %v2834
    %v2836 = vpop.f32.mrf.mxu0
    %v2837 = vadd.f32 %v2818, %v2836
    %2838 = vdwg.mxu0
    %2839 = vmatpush.bf16.msra.mxu0 %v2665
    %2840 = vmatpush.bf16.msra.mxu0 %v2661
    %2841 = vmatpush.bf16.msra.mxu0 %v2657
    %2842 = vmatpush.bf16.msra.mxu0 %v2653
    %2843 = vmatpush.bf16.msra.mxu0 %v2649
    %2844 = vmatpush.bf16.msra.mxu0 %v2645
    %2845 = vmatpush.bf16.msra.mxu0 %v2641
    %2846 = vmatpush.bf16.msra.mxu0 %v2637
    %2847 = vmatmul.bf16.gmra.mxu0 %v2365
    %v2848 = vpop.f32.mrf.mxu0
    %v2849 = vadd.f32 %v2437, %v2848
    %v2850 = vpop.f32.mrf.mxu0
    %v2851 = vadd.f32 %v2437, %v2850
    %2852 = vmatmul.bf16.gmra.mxu0 %v2367
    %v2853 = vpop.f32.mrf.mxu0
    %v2854 = vadd.f32 %v2437, %v2853
    %v2855 = vpop.f32.mrf.mxu0
    %v2856 = vadd.f32 %v2437, %v2855
    %2857 = vdwg.mxu0
    %2858 = vmatpush.bf16.msra.mxu0 %v2697
    %2859 = vmatpush.bf16.msra.mxu0 %v2693
    %2860 = vmatpush.bf16.msra.mxu0 %v2689
    %2861 = vmatpush.bf16.msra.mxu0 %v2685
    %2862 = vmatpush.bf16.msra.mxu0 %v2681
    %2863 = vmatpush.bf16.msra.mxu0 %v2677
    %2864 = vmatpush.bf16.msra.mxu0 %v2673
    %2865 = vmatpush.bf16.msra.mxu0 %v2669
    %2866 = vmatmul.bf16.gmra.mxu0 %v2366
    %v2867 = vpop.f32.mrf.mxu0
    %v2868 = vadd.f32 %v2849, %v2867
    %v2869 = vpop.f32.mrf.mxu0
    %v2870 = vadd.f32 %v2851, %v2869
    %2871 = vmatmul.bf16.gmra.mxu0 %v2368
    %v2872 = vpop.f32.mrf.mxu0
    %v2873 = vadd.f32 %v2854, %v2872
    %v2874 = vpop.f32.mrf.mxu0
    %v2875 = vadd.f32 %v2856, %v2874
    %2876 = vdwg.mxu0
    %2877 = vmatpush.bf16.msra.mxu0 %v2666
    %2878 = vmatpush.bf16.msra.mxu0 %v2662
    %2879 = vmatpush.bf16.msra.mxu0 %v2658
    %2880 = vmatpush.bf16.msra.mxu0 %v2654
    %2881 = vmatpush.bf16.msra.mxu0 %v2650
    %2882 = vmatpush.bf16.msra.mxu0 %v2646
    %2883 = vmatpush.bf16.msra.mxu0 %v2642
    %2884 = vmatpush.bf16.msra.mxu0 %v2638
    %2885 = vmatmul.bf16.gmra.mxu0 %v2365
    %v2886 = vpop.f32.mrf.mxu0
    %v2887 = vadd.f32 %v2438, %v2886
    %v2888 = vpop.f32.mrf.mxu0
    %v2889 = vadd.f32 %v2438, %v2888
    %2890 = vmatmul.bf16.gmra.mxu0 %v2367
    %v2891 = vpop.f32.mrf.mxu0
    %v2892 = vadd.f32 %v2438, %v2891
    %v2893 = vpop.f32.mrf.mxu0
    %v2894 = vadd.f32 %v2438, %v2893
    %2895 = vdwg.mxu0
    %2896 = vmatpush.bf16.msra.mxu0 %v2698
    %2897 = vmatpush.bf16.msra.mxu0 %v2694
    %2898 = vmatpush.bf16.msra.mxu0 %v2690
    %2899 = vmatpush.bf16.msra.mxu0 %v2686
    %2900 = vmatpush.bf16.msra.mxu0 %v2682
    %2901 = vmatpush.bf16.msra.mxu0 %v2678
    %2902 = vmatpush.bf16.msra.mxu0 %v2674
    %2903 = vmatpush.bf16.msra.mxu0 %v2670
    %2904 = vmatmul.bf16.gmra.mxu0 %v2366
    %v2905 = vpop.f32.mrf.mxu0
    %v2906 = vadd.f32 %v2887, %v2905
    %v2907 = vpop.f32.mrf.mxu0
    %v2908 = vadd.f32 %v2889, %v2907
    %2909 = vmatmul.bf16.gmra.mxu0 %v2368
    %v2910 = vpop.f32.mrf.mxu0
    %v2911 = vadd.f32 %v2892, %v2910
    %v2912 = vpop.f32.mrf.mxu0
    %v2913 = vadd.f32 %v2894, %v2912
    %2914 = vdwg.mxu0
    %v2915 = vmul.f32 %v2792, %v2792
    %v2916 = vmul.f32 %v2830, %v2830
    %v2917 = vmul.f32 %v2868, %v2868
    %v2918 = vmul.f32 %v2906, %v2906
    %v2919 = vmul.f32 %v2794, %v2794
    %v2920 = vmul.f32 %v2832, %v2832
    %v2921 = vmul.f32 %v2870, %v2870
    %v2922 = vmul.f32 %v2908, %v2908
    %v2923 = vmul.f32 %v2797, %v2797
    %v2924 = vmul.f32 %v2835, %v2835
    %v2925 = vmul.f32 %v2873, %v2873
    %v2926 = vmul.f32 %v2911, %v2911
    %v2927 = vmul.f32 %v2799, %v2799
    %v2928 = vmul.f32 %v2837, %v2837
    %v2929 = vmul.f32 %v2875, %v2875
    %v2930 = vmul.f32 %v2913, %v2913
    %v2931 = vmul.f32 %v2792, %v2915
    %v2932 = vmul.f32 %v2830, %v2916
    %v2933 = vmul.f32 %v2868, %v2917
    %v2934 = vmul.f32 %v2906, %v2918
    %v2935 = vmul.f32 %v2794, %v2919
    %v2936 = vmul.f32 %v2832, %v2920
    %v2937 = vmul.f32 %v2870, %v2921
    %v2938 = vmul.f32 %v2908, %v2922
    %v2939 = vmul.f32 %v2797, %v2923
    %v2940 = vmul.f32 %v2835, %v2924
    %v2941 = vmul.f32 %v2873, %v2925
    %v2942 = vmul.f32 %v2911, %v2926
    %v2943 = vmul.f32 %v2799, %v2927
    %v2944 = vmul.f32 %v2837, %v2928
    %v2945 = vmul.f32 %v2875, %v2929
    %v2946 = vmul.f32 %v2913, %v2930
    %v2947 = vmul.f32 %v2931, 0.044715
    %v2948 = vmul.f32 %v2932, 0.044715
    %v2949 = vmul.f32 %v2933, 0.044715
    %v2950 = vmul.f32 %v2934, 0.044715
    %v2951 = vmul.f32 %v2935, 0.044715
    %v2952 = vmul.f32 %v2936, 0.044715
    %v2953 = vmul.f32 %v2937, 0.044715
    %v2954 = vmul.f32 %v2938, 0.044715
    %v2955 = vmul.f32 %v2939, 0.044715
    %v2956 = vmul.f32 %v2940, 0.044715
    %v2957 = vmul.f32 %v2941, 0.044715
    %v2958 = vmul.f32 %v2942, 0.044715
    %v2959 = vmul.f32 %v2943, 0.044715
    %v2960 = vmul.f32 %v2944, 0.044715
    %v2961 = vmul.f32 %v2945, 0.044715
    %v2962 = vmul.f32 %v2946, 0.044715
    %v2963 = vadd.f32 %v2792, %v2947
    %v2964 = vadd.f32 %v2830, %v2948
    %v2965 = vadd.f32 %v2868, %v2949
    %v2966 = vadd.f32 %v2906, %v2950
    %v2967 = vadd.f32 %v2794, %v2951
    %v2968 = vadd.f32 %v2832, %v2952
    %v2969 = vadd.f32 %v2870, %v2953
    %v2970 = vadd.f32 %v2908, %v2954
    %v2971 = vadd.f32 %v2797, %v2955
    %v2972 = vadd.f32 %v2835, %v2956
    %v2973 = vadd.f32 %v2873, %v2957
    %v2974 = vadd.f32 %v2911, %v2958
    %v2975 = vadd.f32 %v2799, %v2959
    %v2976 = vadd.f32 %v2837, %v2960
    %v2977 = vadd.f32 %v2875, %v2961
    %v2978 = vadd.f32 %v2913, %v2962
    %v2979 = vmul.f32 %v2963, 0.7978846
    %v2980 = vmul.f32 %v2964, 0.7978846
    %v2981 = vmul.f32 %v2965, 0.7978846
    %v2982 = vmul.f32 %v2966, 0.7978846
    %v2983 = vmul.f32 %v2967, 0.7978846
    %v2984 = vmul.f32 %v2968, 0.7978846
    %v2985 = vmul.f32 %v2969, 0.7978846
    %v2986 = vmul.f32 %v2970, 0.7978846
    %v2987 = vmul.f32 %v2971, 0.7978846
    %v2988 = vmul.f32 %v2972, 0.7978846
    %v2989 = vmul.f32 %v2973, 0.7978846
    %v2990 = vmul.f32 %v2974, 0.7978846
    %v2991 = vmul.f32 %v2975, 0.7978846
    %v2992 = vmul.f32 %v2976, 0.7978846
    %v2993 = vmul.f32 %v2977, 0.7978846
    %v2994 = vmul.f32 %v2978, 0.7978846
    %v2995 = vtanh.pop %v2979
    %v2996 = vtanh.pop %v2980
    %v2997 = vtanh.pop %v2981
    %v2998 = vtanh.pop %v2982
    %v2999 = vtanh.pop %v2983
    %v3000 = vtanh.pop %v2984
    %v3001 = vtanh.pop %v2985
    %v3002 = vtanh.pop %v2986
    %v3003 = vtanh.pop %v2987
    %v3004 = vtanh.pop %v2988
    %v3005 = vtanh.pop %v2989
    %v3006 = vtanh.pop %v2990
    %v3007 = vtanh.pop %v2991
    %v3008 = vtanh.pop %v2992
    %v3009 = vtanh.pop %v2993
    %v3010 = vtanh.pop %v2994
    %v3011 = vadd.f32 %v2995, 1.0
    %v3012 = vadd.f32 %v2996, 1.0
    %v3013 = vadd.f32 %v2997, 1.0
    %v3014 = vadd.f32 %v2998, 1.0
    %v3015 = vadd.f32 %v2999, 1.0
    %v3016 = vadd.f32 %v3000, 1.0
    %v3017 = vadd.f32 %v3001, 1.0
    %v3018 = vadd.f32 %v3002, 1.0
    %v3019 = vadd.f32 %v3003, 1.0
    %v3020 = vadd.f32 %v3004, 1.0
    %v3021 = vadd.f32 %v3005, 1.0
    %v3022 = vadd.f32 %v3006, 1.0
    %v3023 = vadd.f32 %v3007, 1.0
    %v3024 = vadd.f32 %v3008, 1.0
    %v3025 = vadd.f32 %v3009, 1.0
    %v3026 = vadd.f32 %v3010, 1.0
    %v3027 = vmul.f32 %v3011, 0.5
    %v3028 = vmul.f32 %v3012, 0.5
    %v3029 = vmul.f32 %v3013, 0.5
    %v3030 = vmul.f32 %v3014, 0.5
    %v3031 = vmul.f32 %v3015, 0.5
    %v3032 = vmul.f32 %v3016, 0.5
    %v3033 = vmul.f32 %v3017, 0.5
    %v3034 = vmul.f32 %v3018, 0.5
    %v3035 = vmul.f32 %v3019, 0.5
    %v3036 = vmul.f32 %v3020, 0.5
    %v3037 = vmul.f32 %v3021, 0.5
    %v3038 = vmul.f32 %v3022, 0.5
    %v3039 = vmul.f32 %v3023, 0.5
    %v3040 = vmul.f32 %v3024, 0.5
    %v3041 = vmul.f32 %v3025, 0.5
    %v3042 = vmul.f32 %v3026, 0.5
    %v3043 = vmul.f32 %v2792, %v3027
    %v3044 = vmul.f32 %v2830, %v3028
    %v3045 = vmul.f32 %v2868, %v3029
    %v3046 = vmul.f32 %v2906, %v3030
    %v3047 = vmul.f32 %v2794, %v3031
    %v3048 = vmul.f32 %v2832, %v3032
    %v3049 = vmul.f32 %v2870, %v3033
    %v3050 = vmul.f32 %v2908, %v3034
    %v3051 = vmul.f32 %v2797, %v3035
    %v3052 = vmul.f32 %v2835, %v3036
    %v3053 = vmul.f32 %v2873, %v3037
    %v3054 = vmul.f32 %v2911, %v3038
    %v3055 = vmul.f32 %v2799, %v3039
    %v3056 = vmul.f32 %v2837, %v3040
    %v3057 = vmul.f32 %v2875, %v3041
    %v3058 = vmul.f32 %v2913, %v3042
    %v3059 = vpack.c.bf16 %v3047, %v3043
    %v3060 = vpack.c.bf16 %v3048, %v3044
    %v3061 = vpack.c.bf16 %v3049, %v3045
    %v3062 = vpack.c.bf16 %v3050, %v3046
    %v3063 = vpack.c.bf16 %v3055, %v3051
    %v3064 = vpack.c.bf16 %v3056, %v3052
    %v3065 = vpack.c.bf16 %v3057, %v3053
    %v3066 = vpack.c.bf16 %v3058, %v3054
    %v3067 = vld [vmem:[#allocation13] sm:$0xff]
    %v3068 = vld [vmem:[#allocation13 + $0x8] sm:$0xff]
    %v3069 = vld [vmem:[#allocation13 + $0x10] sm:$0xff]
    %v3070 = vld [vmem:[#allocation13 + $0x18] sm:$0xff]
    %v3071 = vld [vmem:[#allocation13 + $0x20] sm:$0xff]
    %v3072 = vld [vmem:[#allocation13 + $0x28] sm:$0xff]
    %v3073 = vld [vmem:[#allocation13 + $0x30] sm:$0xff]
    %v3074 = vld [vmem:[#allocation13 + $0x38] sm:$0xff]
    %v3075 = vld [vmem:[#allocation13 + $0x40] sm:$0xff]
    %v3076 = vld [vmem:[#allocation13 + $0x48] sm:$0xff]
    %v3077 = vld [vmem:[#allocation13 + $0x50] sm:$0xff]
    %v3078 = vld [vmem:[#allocation13 + $0x58] sm:$0xff]
    %v3079 = vld [vmem:[#allocation13 + $0x60] sm:$0xff]
    %v3080 = vld [vmem:[#allocation13 + $0x68] sm:$0xff]
    %v3081 = vld [vmem:[#allocation13 + $0x70] sm:$0xff]
    %v3082 = vld [vmem:[#allocation13 + $0x78] sm:$0xff]
    %v3083 = vld [vmem:[#allocation13 + $0x80] sm:$0xff]
    %v3084 = vld [vmem:[#allocation13 + $0x88] sm:$0xff]
    %v3085 = vld [vmem:[#allocation13 + $0x90] sm:$0xff]
    %v3086 = vld [vmem:[#allocation13 + $0x98] sm:$0xff]
    %v3087 = vld [vmem:[#allocation13 + $0xa0] sm:$0xff]
    %v3088 = vld [vmem:[#allocation13 + $0xa8] sm:$0xff]
    %v3089 = vld [vmem:[#allocation13 + $0xb0] sm:$0xff]
    %v3090 = vld [vmem:[#allocation13 + $0xb8] sm:$0xff]
    %v3091 = vld [vmem:[#allocation13 + $0xc0] sm:$0xff]
    %v3092 = vld [vmem:[#allocation13 + $0xc8] sm:$0xff]
    %v3093 = vld [vmem:[#allocation13 + $0xd0] sm:$0xff]
    %v3094 = vld [vmem:[#allocation13 + $0xd8] sm:$0xff]
    %v3095 = vld [vmem:[#allocation13 + $0xe0] sm:$0xff]
    %v3096 = vld [vmem:[#allocation13 + $0xe8] sm:$0xff]
    %v3097 = vld [vmem:[#allocation13 + $0xf0] sm:$0xff]
    %v3098 = vld [vmem:[#allocation13 + $0xf8] sm:$0xff]
    %v3099 = vld [vmem:[#allocation13 + $0x100] sm:$0xff]
    %v3100 = vld [vmem:[#allocation13 + $0x108] sm:$0xff]
    %v3101 = vld [vmem:[#allocation13 + $0x110] sm:$0xff]
    %v3102 = vld [vmem:[#allocation13 + $0x118] sm:$0xff]
    %v3103 = vld [vmem:[#allocation13 + $0x120] sm:$0xff]
    %v3104 = vld [vmem:[#allocation13 + $0x128] sm:$0xff]
    %v3105 = vld [vmem:[#allocation13 + $0x130] sm:$0xff]
    %v3106 = vld [vmem:[#allocation13 + $0x138] sm:$0xff]
    %v3107 = vld [vmem:[#allocation13 + $0x140] sm:$0xff]
    %v3108 = vld [vmem:[#allocation13 + $0x148] sm:$0xff]
    %v3109 = vld [vmem:[#allocation13 + $0x150] sm:$0xff]
    %v3110 = vld [vmem:[#allocation13 + $0x158] sm:$0xff]
    %v3111 = vld [vmem:[#allocation13 + $0x160] sm:$0xff]
    %v3112 = vld [vmem:[#allocation13 + $0x168] sm:$0xff]
    %v3113 = vld [vmem:[#allocation13 + $0x170] sm:$0xff]
    %v3114 = vld [vmem:[#allocation13 + $0x178] sm:$0xff]
    %v3115 = vld [vmem:[#allocation13 + $0x180] sm:$0xff]
    %v3116 = vld [vmem:[#allocation13 + $0x188] sm:$0xff]
    %v3117 = vld [vmem:[#allocation13 + $0x190] sm:$0xff]
    %v3118 = vld [vmem:[#allocation13 + $0x198] sm:$0xff]
    %v3119 = vld [vmem:[#allocation13 + $0x1a0] sm:$0xff]
    %v3120 = vld [vmem:[#allocation13 + $0x1a8] sm:$0xff]
    %v3121 = vld [vmem:[#allocation13 + $0x1b0] sm:$0xff]
    %v3122 = vld [vmem:[#allocation13 + $0x1b8] sm:$0xff]
    %v3123 = vld [vmem:[#allocation13 + $0x1c0] sm:$0xff]
    %v3124 = vld [vmem:[#allocation13 + $0x1c8] sm:$0xff]
    %v3125 = vld [vmem:[#allocation13 + $0x1d0] sm:$0xff]
    %v3126 = vld [vmem:[#allocation13 + $0x1d8] sm:$0xff]
    %v3127 = vld [vmem:[#allocation13 + $0x1e0] sm:$0xff]
    %v3128 = vld [vmem:[#allocation13 + $0x1e8] sm:$0xff]
    %v3129 = vld [vmem:[#allocation13 + $0x1f0] sm:$0xff]
    %v3130 = vld [vmem:[#allocation13 + $0x1f8] sm:$0xff]
    %v3131 = vld [vmem:[%s9] sm:$0x3]
    %v3133 = vperm.slane %v3131, 0
    %v3134 = vperm.slane %v3131, 1
    %v3201 = vunpack.c.l.b16 %v3067
    %v3202 = vunpack.c.h.b16 %v3067
    %v3203 = vunpack.c.l.b16 %v3068
    %v3204 = vunpack.c.h.b16 %v3068
    %v3205 = vunpack.c.l.b16 %v3069
    %v3206 = vunpack.c.h.b16 %v3069
    %v3207 = vunpack.c.l.b16 %v3070
    %v3208 = vunpack.c.h.b16 %v3070
    %v3209 = vunpack.c.l.b16 %v3071
    %v3210 = vunpack.c.h.b16 %v3071
    %v3211 = vunpack.c.l.b16 %v3072
    %v3212 = vunpack.c.h.b16 %v3072
    %v3213 = vunpack.c.l.b16 %v3073
    %v3214 = vunpack.c.h.b16 %v3073
    %v3215 = vunpack.c.l.b16 %v3074
    %v3216 = vunpack.c.h.b16 %v3074
    %v3217 = vunpack.c.l.b16 %v3075
    %v3218 = vunpack.c.h.b16 %v3075
    %v3219 = vunpack.c.l.b16 %v3076
    %v3220 = vunpack.c.h.b16 %v3076
    %v3221 = vunpack.c.l.b16 %v3077
    %v3222 = vunpack.c.h.b16 %v3077
    %v3223 = vunpack.c.l.b16 %v3078
    %v3224 = vunpack.c.h.b16 %v3078
    %v3225 = vunpack.c.l.b16 %v3079
    %v3226 = vunpack.c.h.b16 %v3079
    %v3227 = vunpack.c.l.b16 %v3080
    %v3228 = vunpack.c.h.b16 %v3080
    %v3229 = vunpack.c.l.b16 %v3081
    %v3230 = vunpack.c.h.b16 %v3081
    %v3231 = vunpack.c.l.b16 %v3082
    %v3232 = vunpack.c.h.b16 %v3082
    %v3233 = vunpack.c.l.b16 %v3083
    %v3234 = vunpack.c.h.b16 %v3083
    %v3235 = vunpack.c.l.b16 %v3084
    %v3236 = vunpack.c.h.b16 %v3084
    %v3237 = vunpack.c.l.b16 %v3085
    %v3238 = vunpack.c.h.b16 %v3085
    %v3239 = vunpack.c.l.b16 %v3086
    %v3240 = vunpack.c.h.b16 %v3086
    %v3241 = vunpack.c.l.b16 %v3087
    %v3242 = vunpack.c.h.b16 %v3087
    %v3243 = vunpack.c.l.b16 %v3088
    %v3244 = vunpack.c.h.b16 %v3088
    %v3245 = vunpack.c.l.b16 %v3089
    %v3246 = vunpack.c.h.b16 %v3089
    %v3247 = vunpack.c.l.b16 %v3090
    %v3248 = vunpack.c.h.b16 %v3090
    %v3249 = vunpack.c.l.b16 %v3091
    %v3250 = vunpack.c.h.b16 %v3091
    %v3251 = vunpack.c.l.b16 %v3092
    %v3252 = vunpack.c.h.b16 %v3092
    %v3253 = vunpack.c.l.b16 %v3093
    %v3254 = vunpack.c.h.b16 %v3093
    %v3255 = vunpack.c.l.b16 %v3094
    %v3256 = vunpack.c.h.b16 %v3094
    %v3257 = vunpack.c.l.b16 %v3095
    %v3258 = vunpack.c.h.b16 %v3095
    %v3259 = vunpack.c.l.b16 %v3096
    %v3260 = vunpack.c.h.b16 %v3096
    %v3261 = vunpack.c.l.b16 %v3097
    %v3262 = vunpack.c.h.b16 %v3097
    %v3263 = vunpack.c.l.b16 %v3098
    %v3264 = vunpack.c.h.b16 %v3098
    %v3265 = vunpack.c.l.b16 %v3099
    %v3266 = vunpack.c.h.b16 %v3099
    %v3267 = vunpack.c.l.b16 %v3100
    %v3268 = vunpack.c.h.b16 %v3100
    %v3269 = vunpack.c.l.b16 %v3101
    %v3270 = vunpack.c.h.b16 %v3101
    %v3271 = vunpack.c.l.b16 %v3102
    %v3272 = vunpack.c.h.b16 %v3102
    %v3273 = vunpack.c.l.b16 %v3103
    %v3274 = vunpack.c.h.b16 %v3103
    %v3275 = vunpack.c.l.b16 %v3104
    %v3276 = vunpack.c.h.b16 %v3104
    %v3277 = vunpack.c.l.b16 %v3105
    %v3278 = vunpack.c.h.b16 %v3105
    %v3279 = vunpack.c.l.b16 %v3106
    %v3280 = vunpack.c.h.b16 %v3106
    %v3281 = vunpack.c.l.b16 %v3107
    %v3282 = vunpack.c.h.b16 %v3107
    %v3283 = vunpack.c.l.b16 %v3108
    %v3284 = vunpack.c.h.b16 %v3108
    %v3285 = vunpack.c.l.b16 %v3109
    %v3286 = vunpack.c.h.b16 %v3109
    %v3287 = vunpack.c.l.b16 %v3110
    %v3288 = vunpack.c.h.b16 %v3110
    %v3289 = vunpack.c.l.b16 %v3111
    %v3290 = vunpack.c.h.b16 %v3111
    %v3291 = vunpack.c.l.b16 %v3112
    %v3292 = vunpack.c.h.b16 %v3112
    %v3293 = vunpack.c.l.b16 %v3113
    %v3294 = vunpack.c.h.b16 %v3113
    %v3295 = vunpack.c.l.b16 %v3114
    %v3296 = vunpack.c.h.b16 %v3114
    %v3297 = vunpack.c.l.b16 %v3115
    %v3298 = vunpack.c.h.b16 %v3115
    %v3299 = vunpack.c.l.b16 %v3116
    %v3300 = vunpack.c.h.b16 %v3116
    %v3301 = vunpack.c.l.b16 %v3117
    %v3302 = vunpack.c.h.b16 %v3117
    %v3303 = vunpack.c.l.b16 %v3118
    %v3304 = vunpack.c.h.b16 %v3118
    %v3305 = vunpack.c.l.b16 %v3119
    %v3306 = vunpack.c.h.b16 %v3119
    %v3307 = vunpack.c.l.b16 %v3120
    %v3308 = vunpack.c.h.b16 %v3120
    %v3309 = vunpack.c.l.b16 %v3121
    %v3310 = vunpack.c.h.b16 %v3121
    %v3311 = vunpack.c.l.b16 %v3122
    %v3312 = vunpack.c.h.b16 %v3122
    %v3313 = vunpack.c.l.b16 %v3123
    %v3314 = vunpack.c.h.b16 %v3123
    %v3315 = vunpack.c.l.b16 %v3124
    %v3316 = vunpack.c.h.b16 %v3124
    %v3317 = vunpack.c.l.b16 %v3125
    %v3318 = vunpack.c.h.b16 %v3125
    %v3319 = vunpack.c.l.b16 %v3126
    %v3320 = vunpack.c.h.b16 %v3126
    %v3321 = vunpack.c.l.b16 %v3127
    %v3322 = vunpack.c.h.b16 %v3127
    %v3323 = vunpack.c.l.b16 %v3128
    %v3324 = vunpack.c.h.b16 %v3128
    %v3325 = vunpack.c.l.b16 %v3129
    %v3326 = vunpack.c.h.b16 %v3129
    %v3327 = vunpack.c.l.b16 %v3130
    %v3328 = vunpack.c.h.b16 %v3130
    %v3329 = vpack.c.b16 %v3203, %v3201
    %v3330 = vpack.c.b16 %v3204, %v3202
    %v3331 = vpack.c.b16 %v3207, %v3205
    %v3332 = vpack.c.b16 %v3208, %v3206
    %v3333 = vpack.c.b16 %v3211, %v3209
    %v3334 = vpack.c.b16 %v3212, %v3210
    %v3335 = vpack.c.b16 %v3215, %v3213
    %v3336 = vpack.c.b16 %v3216, %v3214
    %v3337 = vpack.c.b16 %v3219, %v3217
    %v3338 = vpack.c.b16 %v3220, %v3218
    %v3339 = vpack.c.b16 %v3223, %v3221
    %v3340 = vpack.c.b16 %v3224, %v3222
    %v3341 = vpack.c.b16 %v3227, %v3225
    %v3342 = vpack.c.b16 %v3228, %v3226
    %v3343 = vpack.c.b16 %v3231, %v3229
    %v3344 = vpack.c.b16 %v3232, %v3230
    %v3345 = vpack.c.b16 %v3235, %v3233
    %v3346 = vpack.c.b16 %v3236, %v3234
    %v3347 = vpack.c.b16 %v3239, %v3237
    %v3348 = vpack.c.b16 %v3240, %v3238
    %v3349 = vpack.c.b16 %v3243, %v3241
    %v3350 = vpack.c.b16 %v3244, %v3242
    %v3351 = vpack.c.b16 %v3247, %v3245
    %v3352 = vpack.c.b16 %v3248, %v3246
    %v3353 = vpack.c.b16 %v3251, %v3249
    %v3354 = vpack.c.b16 %v3252, %v3250
    %v3355 = vpack.c.b16 %v3255, %v3253
    %v3356 = vpack.c.b16 %v3256, %v3254
    %v3357 = vpack.c.b16 %v3259, %v3257
    %v3358 = vpack.c.b16 %v3260, %v3258
    %v3359 = vpack.c.b16 %v3263, %v3261
    %v3360 = vpack.c.b16 %v3264, %v3262
    %v3361 = vpack.c.b16 %v3267, %v3265
    %v3362 = vpack.c.b16 %v3268, %v3266
    %v3363 = vpack.c.b16 %v3271, %v3269
    %v3364 = vpack.c.b16 %v3272, %v3270
    %v3365 = vpack.c.b16 %v3275, %v3273
    %v3366 = vpack.c.b16 %v3276, %v3274
    %v3367 = vpack.c.b16 %v3279, %v3277
    %v3368 = vpack.c.b16 %v3280, %v3278
    %v3369 = vpack.c.b16 %v3283, %v3281
    %v3370 = vpack.c.b16 %v3284, %v3282
    %v3371 = vpack.c.b16 %v3287, %v3285
    %v3372 = vpack.c.b16 %v3288, %v3286
    %v3373 = vpack.c.b16 %v3291, %v3289
    %v3374 = vpack.c.b16 %v3292, %v3290
    %v3375 = vpack.c.b16 %v3295, %v3293
    %v3376 = vpack.c.b16 %v3296, %v3294
    %v3377 = vpack.c.b16 %v3299, %v3297
    %v3378 = vpack.c.b16 %v3300, %v3298
    %v3379 = vpack.c.b16 %v3303, %v3301
    %v3380 = vpack.c.b16 %v3304, %v3302
    %v3381 = vpack.c.b16 %v3307, %v3305
    %v3382 = vpack.c.b16 %v3308, %v3306
    %v3383 = vpack.c.b16 %v3311, %v3309
    %v3384 = vpack.c.b16 %v3312, %v3310
    %v3385 = vpack.c.b16 %v3315, %v3313
    %v3386 = vpack.c.b16 %v3316, %v3314
    %v3387 = vpack.c.b16 %v3319, %v3317
    %v3388 = vpack.c.b16 %v3320, %v3318
    %v3389 = vpack.c.b16 %v3323, %v3321
    %v3390 = vpack.c.b16 %v3324, %v3322
    %v3391 = vpack.c.b16 %v3327, %v3325
    %v3392 = vpack.c.b16 %v3328, %v3326
    %3457 = vmatpush.bf16.msra.mxu0 %v3343
    %3458 = vmatpush.bf16.msra.mxu0 %v3341
    %3459 = vmatpush.bf16.msra.mxu0 %v3339
    %3460 = vmatpush.bf16.msra.mxu0 %v3337
    %3461 = vmatpush.bf16.msra.mxu0 %v3335
    %3462 = vmatpush.bf16.msra.mxu0 %v3333
    %3463 = vmatpush.bf16.msra.mxu0 %v3331
    %3464 = vmatpush.bf16.msra.mxu0 %v3329
    %3465 = vmatmul.bf16.gmra.mxu0 %v3059
    %v3466 = vpop.f32.mrf.mxu0
    %v3467 = vadd.f32 %v3133, %v3466
    %v3468 = vpop.f32.mrf.mxu0
    %v3469 = vadd.f32 %v3133, %v3468
    %3470 = vmatmul.bf16.gmra.mxu0 %v3063
    %v3471 = vpop.f32.mrf.mxu0
    %v3472 = vadd.f32 %v3133, %v3471
    %v3473 = vpop.f32.mrf.mxu0
    %v3474 = vadd.f32 %v3133, %v3473
    %3475 = vdwg.mxu0
    %3476 = vmatpush.bf16.msra.mxu0 %v3359
    %3477 = vmatpush.bf16.msra.mxu0 %v3357
    %3478 = vmatpush.bf16.msra.mxu0 %v3355
    %3479 = vmatpush.bf16.msra.mxu0 %v3353
    %3480 = vmatpush.bf16.msra.mxu0 %v3351
    %3481 = vmatpush.bf16.msra.mxu0 %v3349
    %3482 = vmatpush.bf16.msra.mxu0 %v3347
    %3483 = vmatpush.bf16.msra.mxu0 %v3345
    %3484 = vmatmul.bf16.gmra.mxu0 %v3060
    %v3485 = vpop.f32.mrf.mxu0
    %v3486 = vadd.f32 %v3467, %v3485
    %v3487 = vpop.f32.mrf.mxu0
    %v3488 = vadd.f32 %v3469, %v3487
    %3489 = vmatmul.bf16.gmra.mxu0 %v3064
    %v3490 = vpop.f32.mrf.mxu0
    %v3491 = vadd.f32 %v3472, %v3490
    %v3492 = vpop.f32.mrf.mxu0
    %v3493 = vadd.f32 %v3474, %v3492
    %3494 = vdwg.mxu0
    %3495 = vmatpush.bf16.msra.mxu0 %v3375
    %3496 = vmatpush.bf16.msra.mxu0 %v3373
    %3497 = vmatpush.bf16.msra.mxu0 %v3371
    %3498 = vmatpush.bf16.msra.mxu0 %v3369
    %3499 = vmatpush.bf16.msra.mxu0 %v3367
    %3500 = vmatpush.bf16.msra.mxu0 %v3365
    %3501 = vmatpush.bf16.msra.mxu0 %v3363
    %3502 = vmatpush.bf16.msra.mxu0 %v3361
    %3503 = vmatmul.bf16.gmra.mxu0 %v3061
    %v3504 = vpop.f32.mrf.mxu0
    %v3505 = vadd.f32 %v3486, %v3504
    %v3506 = vpop.f32.mrf.mxu0
    %v3507 = vadd.f32 %v3488, %v3506
    %3508 = vmatmul.bf16.gmra.mxu0 %v3065
    %v3509 = vpop.f32.mrf.mxu0
    %v3510 = vadd.f32 %v3491, %v3509
    %v3511 = vpop.f32.mrf.mxu0
    %v3512 = vadd.f32 %v3493, %v3511
    %3513 = vdwg.mxu0
    %3514 = vmatpush.bf16.msra.mxu0 %v3391
    %3515 = vmatpush.bf16.msra.mxu0 %v3389
    %3516 = vmatpush.bf16.msra.mxu0 %v3387
    %3517 = vmatpush.bf16.msra.mxu0 %v3385
    %3518 = vmatpush.bf16.msra.mxu0 %v3383
    %3519 = vmatpush.bf16.msra.mxu0 %v3381
    %3520 = vmatpush.bf16.msra.mxu0 %v3379
    %3521 = vmatpush.bf16.msra.mxu0 %v3377
    %3522 = vmatmul.bf16.gmra.mxu0 %v3062
    %v3523 = vpop.f32.mrf.mxu0
    %v3524 = vadd.f32 %v3505, %v3523
    %v3525 = vpop.f32.mrf.mxu0
    %v3526 = vadd.f32 %v3507, %v3525
    %3527 = vmatmul.bf16.gmra.mxu0 %v3066
    %v3528 = vpop.f32.mrf.mxu0
    %v3529 = vadd.f32 %v3510, %v3528
    %v3530 = vpop.f32.mrf.mxu0
    %v3531 = vadd.f32 %v3512, %v3530
    %3532 = vdwg.mxu0
    %3533 = vmatpush.bf16.msra.mxu0 %v3344
    %3534 = vmatpush.bf16.msra.mxu0 %v3342
    %3535 = vmatpush.bf16.msra.mxu0 %v3340
    %3536 = vmatpush.bf16.msra.mxu0 %v3338
    %3537 = vmatpush.bf16.msra.mxu0 %v3336
    %3538 = vmatpush.bf16.msra.mxu0 %v3334
    %3539 = vmatpush.bf16.msra.mxu0 %v3332
    %3540 = vmatpush.bf16.msra.mxu0 %v3330
    %3541 = vmatmul.bf16.gmra.mxu0 %v3059
    %v3542 = vpop.f32.mrf.mxu0
    %v3543 = vadd.f32 %v3134, %v3542
    %v3544 = vpop.f32.mrf.mxu0
    %v3545 = vadd.f32 %v3134, %v3544
    %3546 = vmatmul.bf16.gmra.mxu0 %v3063
    %v3547 = vpop.f32.mrf.mxu0
    %v3548 = vadd.f32 %v3134, %v3547
    %v3549 = vpop.f32.mrf.mxu0
    %v3550 = vadd.f32 %v3134, %v3549
    %3551 = vdwg.mxu0
    %3552 = vmatpush.bf16.msra.mxu0 %v3360
    %3553 = vmatpush.bf16.msra.mxu0 %v3358
    %3554 = vmatpush.bf16.msra.mxu0 %v3356
    %3555 = vmatpush.bf16.msra.mxu0 %v3354
    %3556 = vmatpush.bf16.msra.mxu0 %v3352
    %3557 = vmatpush.bf16.msra.mxu0 %v3350
    %3558 = vmatpush.bf16.msra.mxu0 %v3348
    %3559 = vmatpush.bf16.msra.mxu0 %v3346
    %3560 = vmatmul.bf16.gmra.mxu0 %v3060
    %v3561 = vpop.f32.mrf.mxu0
    %v3562 = vadd.f32 %v3543, %v3561
    %v3563 = vpop.f32.mrf.mxu0
    %v3564 = vadd.f32 %v3545, %v3563
    %3565 = vmatmul.bf16.gmra.mxu0 %v3064
    %v3566 = vpop.f32.mrf.mxu0
    %v3567 = vadd.f32 %v3548, %v3566
    %v3568 = vpop.f32.mrf.mxu0
    %v3569 = vadd.f32 %v3550, %v3568
    %3570 = vdwg.mxu0
    %3571 = vmatpush.bf16.msra.mxu0 %v3376
    %3572 = vmatpush.bf16.msra.mxu0 %v3374
    %3573 = vmatpush.bf16.msra.mxu0 %v3372
    %3574 = vmatpush.bf16.msra.mxu0 %v3370
    %3575 = vmatpush.bf16.msra.mxu0 %v3368
    %3576 = vmatpush.bf16.msra.mxu0 %v3366
    %3577 = vmatpush.bf16.msra.mxu0 %v3364
    %3578 = vmatpush.bf16.msra.mxu0 %v3362
    %3579 = vmatmul.bf16.gmra.mxu0 %v3061
    %v3580 = vpop.f32.mrf.mxu0
    %v3581 = vadd.f32 %v3562, %v3580
    %v3582 = vpop.f32.mrf.mxu0
    %v3583 = vadd.f32 %v3564, %v3582
    %3584 = vmatmul.bf16.gmra.mxu0 %v3065
    %v3585 = vpop.f32.mrf.mxu0
    %v3586 = vadd.f32 %v3567, %v3585
    %v3587 = vpop.f32.mrf.mxu0
    %v3588 = vadd.f32 %v3569, %v3587
    %3589 = vdwg.mxu0
    %3590 = vmatpush.bf16.msra.mxu0 %v3392
    %3591 = vmatpush.bf16.msra.mxu0 %v3390
    %3592 = vmatpush.bf16.msra.mxu0 %v3388
    %3593 = vmatpush.bf16.msra.mxu0 %v3386
    %3594 = vmatpush.bf16.msra.mxu0 %v3384
    %3595 = vmatpush.bf16.msra.mxu0 %v3382
    %3596 = vmatpush.bf16.msra.mxu0 %v3380
    %3597 = vmatpush.bf16.msra.mxu0 %v3378
    %3598 = vmatmul.bf16.gmra.mxu0 %v3062
    %v3599 = vpop.f32.mrf.mxu0
    %v3600 = vadd.f32 %v3581, %v3599
    %v3601 = vpop.f32.mrf.mxu0
    %v3602 = vadd.f32 %v3583, %v3601
    %3603 = vmatmul.bf16.gmra.mxu0 %v3066
    %v3604 = vpop.f32.mrf.mxu0
    %v3605 = vadd.f32 %v3586, %v3604
    %v3606 = vpop.f32.mrf.mxu0
    %v3607 = vadd.f32 %v3588, %v3606
    %3608 = vdwg.mxu0
    %v3609 = vadd.f32 %v3524, %v2229
    %v3610 = vadd.f32 %v3600, %v2230
    %v3611 = vadd.f32 %v3526, %v2231
    %v3612 = vadd.f32 %v3602, %v2232
    %v3613 = vadd.f32 %v3529, %v2233
    %v3614 = vadd.f32 %v3605, %v2234
    %v3615 = vadd.f32 %v3531, %v2235
    %v3616 = vadd.f32 %v3607, %v2236
    %3617 = vst [vmem:[#allocation14] sm:$0xff] %v3609
    %3618 = vst [vmem:[#allocation14 + $0x8] sm:$0xff] %v3610
    %3619 = vst [vmem:[#allocation14 + $0x10] sm:$0xff] %v3611
    %3620 = vst [vmem:[#allocation14 + $0x18] sm:$0xff] %v3612
    %3621 = vst [vmem:[#allocation14 + $0x20] sm:$0xff] %v3613
    %3622 = vst [vmem:[#allocation14 + $0x28] sm:$0xff] %v3614
    %3623 = vst [vmem:[#allocation14 + $0x30] sm:$0xff] %v3615
    %3624 = vst [vmem:[#allocation14 + $0x38] sm:$0xff] %v3616
    // Predicated region
    $region70: #{tpu_custom_call.1} parent=1 // pred_check
      _
    $region71: #{tpu_custom_call.1} parent=1 // pred_check_branch
      %3626 = sbr.rel (0) target = $region73
    $region72: #{tpu_custom_call.1} parent=1 // pred_region
      %3628 = vsyncadd [#allocation4], 0
      %s3629 = sshll.u32 [#allocation14], 4
      %s3630 = int_to_ptr.vmem [resolvable:$true] %s3629
      %s3631 = sshll.u32 %s10, 4
      %s3632 = int_to_ptr.hbm [resolvable:$true] %s3631
      %3637 = dma.vmem_to_hbm [thread:$0]  %s3630, 1024, %s3632, [#allocation4], 256, 256, 16
    $region73: #{tpu_custom_call.1} parent=1 // pred_fallthru
      _
    // Predicated region
    $region74: #{tpu_custom_call.1} parent=1 // pred_check
      _
    $region75: #{tpu_custom_call.1} parent=1 // pred_check_branch
      %3639 = sbr.rel (0) target = $region77
    $region76: #{tpu_custom_call.1} parent=1 // pred_region
      %3641 = dma.done [#allocation4], 1024
    $region77: #{tpu_custom_call.1} parent=1 // pred_fallthru
      _
    %3642 = vsyncpa [#allocation3], 1
    %3643 = vsyncpa [#allocation6], 1
    %3644 = vsyncpa [#allocation9], 1
    %3645 = vsyncpa [#allocation12], 1
    %3646 = vsyncpa [#allocation4], 1

</llo_original>
